<compile_context>
chip_gen: v7x
topology: tpu7x:2x2x1
jax: 0.10.0
libtpu: 0.0.40
codegen_flags: <defaults>
</compile_context>

<pallas_src>
import functools

import jax
import jax.numpy as jnp
from jax.experimental import pallas as pl
from jax.experimental.pallas import tpu as pltpu


# ----------------------------------------------------------------------------
# Pallas kernel: per-point min plane/ROI distance (points on the lane axis)
# ----------------------------------------------------------------------------
def _plane_roi_kernel(pts_ref, waug_ref, w2t_ref, b2t_ref, out_ref, *, ph):
    pts = pts_ref[...]                                   # (4, TM) f32, row 3 == 1

    # Single augmented layer-1 matmul on the MXU (K = 4): layer-1 bias and the
    # normalized plane-distance rows are folded into the contraction.
    o1 = jnp.dot(waug_ref[...], pts,
                 preferred_element_type=jnp.float32)     # (P*H + P, TM) f32

    # Split at row ph = P*H = 448 (sublane-tile aligned -> free views).
    h = jnp.maximum(o1[:ph, :], 0.0).astype(jnp.bfloat16)  # (P*H, TM) bf16
    d = o1[ph:, :]                                          # (P,   TM) f32

    # Fused block-diagonal layer-2 (K = P*H = 448), bf16 operands / f32 acc.
    ir = jnp.dot(w2t_ref[...], h,
                 preferred_element_type=jnp.float32) + b2t_ref[...]  # (P, TM)
    ir = jnp.maximum(ir, 0.0)

    # sqrt hoisted after the min (monotonic) -> one lane-dense sqrt pass.
    true_sq = d * d + ir * ir + 1e-16                    # (P, TM)
    out_ref[...] = jnp.sqrt(jnp.min(true_sq, axis=0, keepdims=True))  # (1, TM)


def plane_roi_distance(pts_aug, w_aug, w2t_blk, b2t, *, tile_m):
    """pts_aug: (4, BN_pad) f32, row 3 all-ones, BN_pad % tile_m == 0.
    Returns (1, BN_pad) min distance per point (lane-dense)."""
    four, bn_pad = pts_aug.shape
    assert four == 4 and tile_m % 128 == 0 and bn_pad % tile_m == 0
    p = w2t_blk.shape[0]
    ph_p = w_aug.shape[0]
    ph = ph_p - p
    grid = (bn_pad // tile_m,)

    kernel = functools.partial(_plane_roi_kernel, ph=ph)
    return pl.pallas_call(
        kernel,
        out_shape=jax.ShapeDtypeStruct((1, bn_pad), jnp.float32),
        grid=grid,
        in_specs=[
            pl.BlockSpec((4, tile_m), lambda i: (0, i)),   # augmented points tile
            pl.BlockSpec((ph_p, 4), lambda i: (0, 0)),     # fused layer-1 + dist rows
            pl.BlockSpec((p, ph), lambda i: (0, 0)),       # block-diag layer-2 W^T (bf16)
            pl.BlockSpec((p, 1), lambda i: (0, 0)),        # layer-2 bias
        ],
        out_specs=pl.BlockSpec((1, tile_m), lambda i: (0, i)),
        compiler_params=pltpu.CompilerParams(
            dimension_semantics=("parallel",),
            vmem_limit_bytes=32 * 1024 * 1024,
        ),
    )(pts_aug, w_aug, w2t_blk, b2t)


def _pick_tile_m(bn, requested=2048):
    """Largest lane-tile <= requested (multiple of 128) that keeps the grid
    length >= 2 when the cloud allows it (v7x has 2 TensorCores)."""
    tm = max(128, (requested // 128) * 128)
    while tm > 128 and pl.cdiv(bn, tm) < 2:
        tm = max(128, (tm // 2) // 128 * 128)
    return tm


# ----------------------------------------------------------------------------
# Parameter construction (deterministic, mirrors the torch module's __init__)
# ----------------------------------------------------------------------------
def _linear_init(key, fan_in, fan_out):
    """torch.nn.Linear default init: U(-1/sqrt(fan_in), 1/sqrt(fan_in))."""
    kw, kb = jax.random.split(key)
    bound = 1.0 / jnp.sqrt(float(fan_in))
    w = jax.random.uniform(kw, (fan_in, fan_out), jnp.float32, -bound, bound)
    b = jax.random.uniform(kb, (fan_out,), jnp.float32, -bound, bound)
    return w, b


def make_params(key, num_plane=7, hidden=64):
    keys = jax.random.split(key, 4 + 2 * num_plane)
    z_vector = jax.random.uniform(keys[0], (num_plane, 256), jnp.float32) * 2.0 - 1.0
    # to_parameters: Linear(256,256) ReLU Linear(256,32) ReLU Linear(32,3)
    wp1, bp1 = _linear_init(keys[1], 256, 256)
    wp2, bp2 = _linear_init(keys[2], 256, 32)
    wp3, bp3 = _linear_init(keys[3], 32, 3)
    # interest_region[i]: Linear(2,64) ReLU Linear(64,1) ReLU
    w1s, b1s, w2s, b2s = [], [], [], []
    for i in range(num_plane):
        w1, b1 = _linear_init(keys[4 + 2 * i], 2, hidden)
        w2, b2 = _linear_init(keys[5 + 2 * i], hidden, 1)
        w1s.append(w1); b1s.append(b1); w2s.append(w2); b2s.append(b2)
    return dict(z_vector=z_vector,
                wp1=wp1, bp1=bp1, wp2=wp2, bp2=bp2, wp3=wp3, bp3=bp3,
                w1s=w1s, b1s=b1s, w2s=w2s, b2s=b2s)


def to_parameters_mlp(params, z):
    # TODO(synk): tiny (7, 256) parameter-setup MLP kept as plain JAX glue.
    h = jnp.maximum(z @ params["wp1"] + params["bp1"], 0.0)
    h = jnp.maximum(h @ params["wp2"] + params["bp2"], 0.0)
    return h @ params["wp3"] + params["bp3"]            # (P, 3)


# ----------------------------------------------------------------------------
# Forward pass (glue + Pallas kernel)
# ----------------------------------------------------------------------------
def forward(params, points, *, tile_m=2048):
    """points: (B, N, 3) float32.
    Returns (single_distance (B, N), plane_parameters (1, P, 3))."""
    p = params["z_vector"].shape[0]
    hidden = params["w1s"][0].shape[1]
    ph = p * hidden
    b, n, _ = points.shape
    bn = b * n

    # plane parameters from z_vector (tiny MLP -> plain JAX glue)
    plane_p3 = to_parameters_mlp(params, params["z_vector"])            # (P, 3)
    norm = jnp.sqrt(plane_p3[:, 0] ** 2 + plane_p3[:, 1] ** 2 + 1e-16)  # (P,)
    pps = plane_p3 / norm[:, None]                                      # (P, 3)

    # Augmented fused layer-1 weight (P*H + P, 4):
    #   rows 0..P*H-1 : [w1x, w1y, 0, b1]  (all P first layers, bias folded)
    #   rows P*H..    : [a/n, b/n, c/n, 0] (normalized plane-distance rows)
    w1t = jnp.concatenate([w.T for w in params["w1s"]], axis=0)         # (P*H, 2)
    b1t = jnp.concatenate(params["b1s"], axis=0)[:, None]               # (P*H, 1)
    hid_rows = jnp.concatenate(
        [w1t, jnp.zeros((ph, 1), jnp.float32), b1t], axis=1)            # (P*H, 4)
    dist_rows = jnp.concatenate(
        [pps, jnp.zeros((p, 1), jnp.float32)], axis=1)                  # (P, 4)
    w_aug = jnp.concatenate([hid_rows, dist_rows], axis=0)              # (P*H+P, 4)

    # Block-diagonal layer-2 in bf16 (halves the binding VMEM traffic on h and
    # makes the K=448 contraction MXU-native; accumulate stays f32).
    w2t_blk = jnp.zeros((p, ph), jnp.float32)
    for i in range(p):
        w2t_blk = w2t_blk.at[i, i * hidden:(i + 1) * hidden].set(
            params["w2s"][i][:, 0])
    w2t_blk = w2t_blk.astype(jnp.bfloat16)
    b2t = jnp.stack([params["b2s"][i][0] for i in range(p)])[:, None]   # (P, 1)

    # Pad the flattened cloud, transpose so points land on the lane axis, and
    # append a ones row for the folded layer-1 bias / distance offset.
    # TODO(synk): this pad/transpose/concat is a separate XLA pass over the
    # whole point cloud; produce points in (3, N) layout upstream if it ever
    # becomes a measurable fraction of wall time.
    tm = _pick_tile_m(bn, tile_m)
    bn_pad = pl.cdiv(bn, tm) * tm
    pts_flat = points.reshape(bn, 3).astype(jnp.float32)
    if bn_pad != bn:
        pts_flat = jnp.pad(pts_flat, ((0, bn_pad - bn), (0, 0)))
    pts_aug = jnp.concatenate(
        [pts_flat.T, jnp.ones((1, bn_pad), jnp.float32)], axis=0)       # (4, BN_pad)

    dist = plane_roi_distance(pts_aug, w_aug, w2t_blk, b2t, tile_m=tm)  # (1, BN_pad)
    single_distance = dist[0, :bn].reshape(b, n)
    return single_distance, plane_p3[None, :, :]                        # (1, P, 3)


# ----------------------------------------------------------------------------
# Pure-JAX reference (mirrors the torch code op-by-op) for verification
# ----------------------------------------------------------------------------
def ref_forward(params, points):
    plane_p3 = to_parameters_mlp(params, params["z_vector"])    # (P, 3)
    pp = plane_p3.T                                             # (3, P)
    norm = jnp.sqrt(pp[0] ** 2 + pp[1] ** 2 + 1e-16)            # (P,)
    all_d = jnp.einsum("bnd,dp->bnp", points, pp) / norm        # (B, N, P)
    irs = []
    for i in range(params["z_vector"].shape[0]):
        h = jnp.maximum(points[..., :2] @ params["w1s"][i] + params["b1s"][i], 0.0)
        o = jnp.maximum(h @ params["w2s"][i] + params["b2s"][i], 0.0)
        irs.append(o[..., 0])
    ir = jnp.stack(irs, axis=-1)                                # (B, N, P)
    td = jnp.sqrt(all_d ** 2 + ir ** 2 + 1e-16)
    return td.min(axis=2), plane_p3[None, :, :]


# ----------------------------------------------------------------------------
if __name__ == "__main__":
    key = jax.random.PRNGKey(0)
    kparams, kpts, ksdf = jax.random.split(key, 3)

    NUM_PLANE = 7
    B, N = 2, 1000            # B*N = 2000 -> pad path + grid of length 2

    params = make_params(kparams, num_plane=NUM_PLANE)
    points = jax.random.uniform(kpts, (B, N, 3), jnp.float32, -1.0, 1.0)
    sdfs = jax.random.uniform(ksdf, (B, N), jnp.float32)        # unused by fwd

    single_distance, plane_parameters = forward(params, points)
    single_distance = jax.block_until_ready(single_distance)
    plane_parameters = jax.block_until_ready(plane_parameters)

    ref_dist, ref_pp = ref_forward(params, points)
    assert single_distance.shape == (B, N)
    assert plane_parameters.shape == (1, NUM_PLANE, 3)
    # plane parameters bypass the kernel -> tight tolerance
    assert jnp.allclose(plane_parameters, ref_pp, rtol=1e-5, atol=1e-5)
    # distances use a bf16 layer-2 on the MXU -> loosened tolerance (review)
    assert jnp.allclose(single_distance, ref_dist, rtol=5e-2, atol=5e-2)

    print("KERNEL_OK")
</pallas_src>

<mosaic_0001>
module attributes {stable_mosaic.version = 11 : i64} {
  func.func @_plane_roi_kernel(%arg0: i32, %arg1: memref<4x1024xf32, #tpu.memory_space<vmem>>, %arg2: memref<455x4xf32, #tpu.memory_space<vmem>>, %arg3: memref<7x448xbf16, #tpu.memory_space<vmem>>, %arg4: memref<7x1xf32, #tpu.memory_space<vmem>>, %arg5: memref<1x1024xf32, #tpu.memory_space<vmem>>) attributes {dimension_semantics = [#tpu.dimension_semantics<parallel>], iteration_bounds = array<i64: 2>, scalar_prefetch = 0 : i64, scratch_operands = 0 : i64, tpu.core_type = #tpu.core_type<tc>, window_params = [{transform_indices = @transform_0, window_bounds = array<i64: 4, 1024>}, {pipeline_mode = #tpu.pipeline_mode<synchronous>, transform_indices = @transform_1, window_bounds = array<i64: 455, 4>}, {pipeline_mode = #tpu.pipeline_mode<synchronous>, transform_indices = @transform_2, window_bounds = array<i64: 7, 448>}, {pipeline_mode = #tpu.pipeline_mode<synchronous>, transform_indices = @transform_3, window_bounds = array<i64: 7, 1>}, {transform_indices = @transform_4, window_bounds = array<i64: 1, 1024>}]} {
    %c0 = arith.constant 0 : index
    %c0_0 = arith.constant 0 : index
    %0 = vector.load %arg1[%c0, %c0_0] : memref<4x1024xf32, #tpu.memory_space<vmem>>, vector<4x1024xf32>
    %c0_1 = arith.constant 0 : index
    %c0_2 = arith.constant 0 : index
    %1 = vector.load %arg2[%c0_1, %c0_2] : memref<455x4xf32, #tpu.memory_space<vmem>>, vector<455x4xf32>
    %cst = arith.constant dense<0.000000e+00> : vector<455x1024xf32>
    %2 = tpu.matmul %1, %0, %cst {dimension_numbers = #tpu.dot_dimension_numbers<[1], [0], [0], [1], [0, 0, 1, 1], [], []>} : vector<455x4xf32>, vector<4x1024xf32>, vector<455x1024xf32> -> vector<455x1024xf32>
    %3 = vector.extract_strided_slice %2 {offsets = [0, 0], sizes = [448, 1024], strides = [1, 1]} : vector<455x1024xf32> to vector<448x1024xf32>
    %cst_3 = arith.constant 0.000000e+00 : f32
    %4 = vector.broadcast %cst_3 : f32 to vector<448x1024xf32>
    %5 = arith.maximumf %3, %4 : vector<448x1024xf32>
    %6 = arith.truncf %5 : vector<448x1024xf32> to vector<448x1024xbf16>
    %7 = vector.extract_strided_slice %2 {offsets = [448, 0], sizes = [7, 1024], strides = [1, 1]} : vector<455x1024xf32> to vector<7x1024xf32>
    %c0_4 = arith.constant 0 : index
    %c0_5 = arith.constant 0 : index
    %8 = vector.load %arg3[%c0_4, %c0_5] : memref<7x448xbf16, #tpu.memory_space<vmem>>, vector<7x448xbf16>
    %cst_6 = arith.constant dense<0.000000e+00> : vector<7x1024xf32>
    %9 = tpu.matmul %8, %6, %cst_6 {dimension_numbers = #tpu.dot_dimension_numbers<[1], [0], [0], [1], [0, 0, 1, 1], [], []>} : vector<7x448xbf16>, vector<448x1024xbf16>, vector<7x1024xf32> -> vector<7x1024xf32>
    %c0_7 = arith.constant 0 : index
    %c0_8 = arith.constant 0 : index
    %10 = vector.load %arg4[%c0_7, %c0_8] : memref<7x1xf32, #tpu.memory_space<vmem>>, vector<7x1xf32>
    %11 = vector.broadcast %10 : vector<7x1xf32> to vector<7x1024xf32>
    %12 = arith.addf %9, %11 : vector<7x1024xf32>
    %cst_9 = arith.constant 0.000000e+00 : f32
    %13 = vector.broadcast %cst_9 : f32 to vector<7x1024xf32>
    %14 = arith.maximumf %12, %13 : vector<7x1024xf32>
    %15 = arith.mulf %7, %7 : vector<7x1024xf32>
    %16 = arith.mulf %14, %14 : vector<7x1024xf32>
    %17 = arith.addf %15, %16 : vector<7x1024xf32>
    %cst_10 = arith.constant 1.000000e-16 : f32
    %18 = vector.broadcast %cst_10 : f32 to vector<7x1024xf32>
    %19 = arith.addf %17, %18 : vector<7x1024xf32>
    %cst_11 = arith.constant dense<0x7F800000> : vector<1024xf32>
    %20 = vector.multi_reduction <minimumf>, %19, %cst_11 [0] : vector<7x1024xf32> to vector<1024xf32>
    %21 = vector.shape_cast %20 : vector<1024xf32> to vector<1x1024xf32>
    %22 = math.sqrt %21 : vector<1x1024xf32>
    %c0_12 = arith.constant 0 : index
    %c0_13 = arith.constant 0 : index
    %23 = vector.load %arg5[%c0_12, %c0_13] : memref<1x1024xf32, #tpu.memory_space<vmem>>, vector<1x1024xf32>
    tpu.vector_store %arg5[%c0_12, %c0_13], %22 {strides = array<i32>} : memref<1x1024xf32, #tpu.memory_space<vmem>>, vector<1x1024xf32>,
    return
  }
  func.func @transform_0(%arg0: i32) -> (i32, i32) {
    %c0_i32 = arith.constant 0 : i32
    %c0_i32_0 = arith.constant 0 : i32
    return %c0_i32, %arg0 : i32, i32
  }
  func.func @transform_1(%arg0: i32) -> (i32, i32) {
    %c0_i32 = arith.constant 0 : i32
    %c0_i32_0 = arith.constant 0 : i32
    %c0_i32_1 = arith.constant 0 : i32
    return %c0_i32, %c0_i32_0 : i32, i32
  }
  func.func @transform_2(%arg0: i32) -> (i32, i32) {
    %c0_i32 = arith.constant 0 : i32
    %c0_i32_0 = arith.constant 0 : i32
    %c0_i32_1 = arith.constant 0 : i32
    return %c0_i32, %c0_i32_0 : i32, i32
  }
  func.func @transform_3(%arg0: i32) -> (i32, i32) {
    %c0_i32 = arith.constant 0 : i32
    %c0_i32_0 = arith.constant 0 : i32
    %c0_i32_1 = arith.constant 0 : i32
    return %c0_i32, %c0_i32_0 : i32, i32
  }
  func.func @transform_4(%arg0: i32) -> (i32, i32) {
    %c0_i32 = arith.constant 0 : i32
    %c0_i32_0 = arith.constant 0 : i32
    return %c0_i32, %arg0 : i32, i32
  }
}

</mosaic_0001>

<llo_original>
// kernel: tpu_custom_call.1
$region0: #{tpu_custom_call.1}
  #allocation0 [shape = 'u32[]', space=smem, size = 0x4, offset = 0x4, fixed_abs, tag = 'smem constant byte address 0x4 - core index']
  #allocation1 [shape = 'u32[144,128]{1,0:T(1,128)}', space=vmem, size = 0x12000, scoped, tag = 'internal scratch']
  %s0 = inlined_call_operand.vmem [shape: f32[4,2048], index: 0, kind: input, shape index: {}]
  %s1 = inlined_call_operand.vmem [shape: f32[455,4], index: 1, kind: input, shape index: {}]
  %s2 = inlined_call_operand.vmem [shape: bf16[7,448], index: 2, kind: input, shape index: {}]
  %s3 = inlined_call_operand.vmem [shape: f32[7,1], index: 3, kind: input, shape index: {}]
  %s4 = inlined_call_operand.hbm [shape: f32[1,2048], index: 4, kind: output, shape index: {}]
  %s5 = sld [smem:[#allocation0]]
  $region49: #{tpu_custom_call.1} parent=0
    _
  %s7 = ssub.s32 1, %s5
  %s8 = scalar_select 0, %s7, %s5
  $region1: #{tpu_custom_call.1} parent=0
    #allocation2 [shape = 'u8[8192]{0}', space=vmem, size = 0x2000, scoped, tag = 'output window, operand 0']
    #allocation3 [shape = 's32[2]{0}', space=sflag, size = 0x8, scoped, tag = 'scoped memory for tpu_custom_call.1']
    %9 = vsyncpa [#allocation3], 0
    %s10 = scalar_lea.sflag [#allocation3], 1
    %11 = vsyncpa %s10, 0
    loop: start=0, step=1, limit=4
    $region2: #{tpu_custom_call.1} parent=1 // loop_pre_header
      _
    $region3: #{tpu_custom_call.1} parent=1 // loop_header
      %s13 = sphi 0, %s17
      %p14 = scmp.ge.s32.totalorder %s13, 4
      %s23 = sphi 0, %s25
      %s26 = sphi 0, %s23
      %s27 = sphi 0, %s26
      %s43 = sphi 0, %s27
      %s47 = sphi 0, %s47
      %s49 = sphi 0, %s47
      %s50 = sphi 0, %s49
      %s64 = sphi 0, %s50
      %s68 = sphi 0, %s68
      %s70 = sphi 0, %s68
      %s71 = sphi 0, %s70
      %s85 = sphi 0, %s71
      %s89 = sphi 0, %s89
      %s91 = sphi 0, %s89
      %s92 = sphi 0, %s91
      %s106 = sphi 0, %s92
      %s112 = sphi 0, %s114
      %s115 = sphi 0, %s112
      %s116 = sphi 0, %s115
      %s132 = sphi 0, %s116
    $region4: #{tpu_custom_call.1} parent=1 // loop_header_branch
      %16 = sbr.rel (%p14) target = $region8
    $region5: #{tpu_custom_call.1} parent=1 // loop_body
      %s18 = ssub.s32 %s13, 1
      %s19 = ssub.s32 %s13, 2
      %s20 = sadd.s32 %s13, 1
      %s21 = ssub.s32 %s13, %s20
      %p22 = scmp.eq.s32.totalorder %s21, 0
      %s24 = sadd.s32 %s23, 1
      %s25 = scalar_select %p22, %s23, %s24
      %p28 = pneg %p22
      %p29 = scmp.eq.s32.totalorder %s13, 1
      %p30 = por %p28, %p29
      %p31 = scmp.ne.s32.totalorder %s23, %s26
      %p32 = scmp.eq.s32.totalorder %s13, 0
      %p33 = por %p31, %p32
      %p34 = scmp.ne.s32.totalorder %s23, %s26
      %p35 = scmp.eq.s32.totalorder %s18, 1
      %p36 = por %p34, %p35
      %p37 = scmp.ne.s32.totalorder %s26, %s27
      %p38 = scmp.eq.s32.totalorder %s18, 0
      %p39 = por %p37, %p38
      %p40 = scmp.ne.s32.totalorder %s26, %s27
      %p41 = scmp.eq.s32.totalorder %s19, 1
      %p42 = por %p40, %p41
      %p44 = scmp.ne.s32.totalorder %s27, %s43
      %p45 = scmp.eq.s32.totalorder %s19, 0
      %p46 = por %p44, %p45
      %s48 = sadd.s32 %s47, 1
      %p51 = scmp.eq.s32.totalorder %s13, 1
      %p52 = scmp.ne.s32.totalorder %s47, %s49
      %p53 = scmp.eq.s32.totalorder %s13, 0
      %p54 = por %p52, %p53
      %p55 = scmp.ne.s32.totalorder %s47, %s49
      %p56 = scmp.eq.s32.totalorder %s18, 1
      %p57 = por %p55, %p56
      %p58 = scmp.ne.s32.totalorder %s49, %s50
      %p59 = scmp.eq.s32.totalorder %s18, 0
      %p60 = por %p58, %p59
      %p61 = scmp.ne.s32.totalorder %s49, %s50
      %p62 = scmp.eq.s32.totalorder %s19, 1
      %p63 = por %p61, %p62
      %p65 = scmp.ne.s32.totalorder %s50, %s64
      %p66 = scmp.eq.s32.totalorder %s19, 0
      %p67 = por %p65, %p66
      %s69 = sadd.s32 %s68, 1
      %p72 = scmp.eq.s32.totalorder %s13, 1
      %p73 = scmp.ne.s32.totalorder %s68, %s70
      %p74 = scmp.eq.s32.totalorder %s13, 0
      %p75 = por %p73, %p74
      %p76 = scmp.ne.s32.totalorder %s68, %s70
      %p77 = scmp.eq.s32.totalorder %s18, 1
      %p78 = por %p76, %p77
      %p79 = scmp.ne.s32.totalorder %s70, %s71
      %p80 = scmp.eq.s32.totalorder %s18, 0
      %p81 = por %p79, %p80
      %p82 = scmp.ne.s32.totalorder %s70, %s71
      %p83 = scmp.eq.s32.totalorder %s19, 1
      %p84 = por %p82, %p83
      %p86 = scmp.ne.s32.totalorder %s71, %s85
      %p87 = scmp.eq.s32.totalorder %s19, 0
      %p88 = por %p86, %p87
      %s90 = sadd.s32 %s89, 1
      %p93 = scmp.eq.s32.totalorder %s13, 1
      %p94 = scmp.ne.s32.totalorder %s89, %s91
      %p95 = scmp.eq.s32.totalorder %s13, 0
      %p96 = por %p94, %p95
      %p97 = scmp.ne.s32.totalorder %s89, %s91
      %p98 = scmp.eq.s32.totalorder %s18, 1
      %p99 = por %p97, %p98
      %p100 = scmp.ne.s32.totalorder %s91, %s92
      %p101 = scmp.eq.s32.totalorder %s18, 0
      %p102 = por %p100, %p101
      %p103 = scmp.ne.s32.totalorder %s91, %s92
      %p104 = scmp.eq.s32.totalorder %s19, 1
      %p105 = por %p103, %p104
      %p107 = scmp.ne.s32.totalorder %s92, %s106
      %p108 = scmp.eq.s32.totalorder %s19, 0
      %p109 = por %p107, %p108
      %s110 = ssub.s32 %s13, %s20
      %p111 = scmp.eq.s32.totalorder %s110, 0
      %s113 = sadd.s32 %s112, 1
      %s114 = scalar_select %p111, %s112, %s113
      %p117 = pneg %p111
      %p118 = scmp.eq.s32.totalorder %s13, 1
      %p119 = por %p117, %p118
      %p120 = scmp.ne.s32.totalorder %s112, %s115
      %p121 = scmp.eq.s32.totalorder %s13, 0
      %p122 = por %p120, %p121
      %p123 = scmp.ne.s32.totalorder %s112, %s115
      %p124 = scmp.eq.s32.totalorder %s18, 1
      %p125 = por %p123, %p124
      %p126 = scmp.ne.s32.totalorder %s115, %s116
      %p127 = scmp.eq.s32.totalorder %s18, 0
      %p128 = por %p126, %p127
      %p129 = scmp.ne.s32.totalorder %s115, %s116
      %p130 = scmp.eq.s32.totalorder %s19, 1
      %p131 = por %p129, %p130
      %p133 = scmp.ne.s32.totalorder %s116, %s132
      %p134 = scmp.eq.s32.totalorder %s19, 0
      %p135 = por %p133, %p134
      %p136 = scmp.le.s32.totalorder 1, %s13
      %p137 = scmp.lt.s32.totalorder %s13, 3
      %p138 = pnand %p136, %p137
      %p139 = pneg %p138
      // Predicated region
      $region9: #{tpu_custom_call.1} parent=5 // pred_check
        _
      $region10: #{tpu_custom_call.1} parent=5 // pred_check_branch
        %141 = sbr.rel (%p138) target = $region12
      $region11: #{tpu_custom_call.1} parent=5 // pred_region
        %s142 = ssub.s32 %s13, 1
        // Predicated region
        $region13: #{tpu_custom_call.1} parent=11 // pred_check
          %p143 = pneg %p60
        $region14: #{tpu_custom_call.1} parent=11 // pred_check_branch
          %145 = sbr.rel (%p143) target = $region16
        $region15: #{tpu_custom_call.1} parent=11 // pred_region
          _
        $region16: #{tpu_custom_call.1} parent=11 // pred_fallthru
          _
        // Predicated region
        $region17: #{tpu_custom_call.1} parent=11 // pred_check
          %p146 = pneg %p81
        $region18: #{tpu_custom_call.1} parent=11 // pred_check_branch
          %148 = sbr.rel (%p146) target = $region20
        $region19: #{tpu_custom_call.1} parent=11 // pred_region
          _
        $region20: #{tpu_custom_call.1} parent=11 // pred_fallthru
          _
        // Predicated region
        $region21: #{tpu_custom_call.1} parent=11 // pred_check
          %p149 = pneg %p102
        $region22: #{tpu_custom_call.1} parent=11 // pred_check_branch
          %151 = sbr.rel (%p149) target = $region24
        $region23: #{tpu_custom_call.1} parent=11 // pred_region
          _
        $region24: #{tpu_custom_call.1} parent=11 // pred_fallthru
          _
      $region12: #{tpu_custom_call.1} parent=5 // pred_fallthru
        _
      %p152 = scmp.lt.s32.totalorder %s13, 2
      // Predicated region
      $region25: #{tpu_custom_call.1} parent=5 // pred_check
        %p153 = pneg %p152
      $region26: #{tpu_custom_call.1} parent=5 // pred_check_branch
        %155 = sbr.rel (%p153) target = $region28
      $region27: #{tpu_custom_call.1} parent=5 // pred_region
        // Predicated region
        $region29: #{tpu_custom_call.1} parent=27 // pred_check
          %p156 = pneg %p33
        $region30: #{tpu_custom_call.1} parent=27 // pred_check_branch
          %158 = sbr.rel (%p156) target = $region32
        $region31: #{tpu_custom_call.1} parent=27 // pred_region
          %s159 = smul.u32 8, %s13
          %p160 = scmp.lt.s32.totalorder %s159, 15
          %s161 = scalar_select %p160, %s159, 15
          %s162 = smul.addr %s161, 4
          %s163 = scalar_lea.vmem %s0, %s162
          %s164 = smul.u32 8, %s13
        $region32: #{tpu_custom_call.1} parent=27 // pred_fallthru
          _
      $region28: #{tpu_custom_call.1} parent=5 // pred_fallthru
        _
      %p165 = scmp.le.s32.totalorder 1, %s13
      %p166 = scmp.lt.s32.totalorder %s13, 3
      %p167 = pnand %p165, %p166
      %p168 = pneg %p167
      // Predicated region
      $region33: #{tpu_custom_call.1} parent=5 // pred_check
        _
      $region34: #{tpu_custom_call.1} parent=5 // pred_check_branch
        %170 = sbr.rel (%p167) target = $region36
      $region35: #{tpu_custom_call.1} parent=5 // pred_region
        %s171 = ssub.s32 %s13, 1
        %s172 = smul.u32 8, %s18
        %p173 = scmp.lt.s32.totalorder %s172, 15
        %s174 = scalar_select %p173, %s172, 15
        %s175 = smul.addr %s174, 4
        %s176 = scalar_lea.vmem %s0, %s175
        %p177 = pneg %p39
        %p178 = pneg %p36
        %p179 = pneg %p60
        %p180 = pneg %p57
        %p181 = pneg %p81
        %p182 = pneg %p78
        %p183 = pneg %p102
        %p184 = pneg %p99
        %p185 = pneg %p128
        %p186 = pneg %p125
        %s187 = sand.u32 %s115, 1
        %s188 = scalar_lea.sflag [#allocation3], %s187
        %s189 = sand.u32 %s115, 1
        %s190 = smul.addr %s189, 8
        %s191 = scalar_lea.vmem [#allocation2], %s190
        %s192 = smul.u32 8, %s18
        %p193 = scmp.lt.s32.totalorder %s192, 15
        %s194 = scalar_select %p193, %s192, 15
        %s195 = smul.addr %s194, 4
        %s196 = scalar_lea.vmem %s0, %s195
        %s197 = smul.u32 8, %s18
        %s198 = smul.u32 8, %s18
        %v200 = vld [vmem:[%s196] sm:$0xff]
        %v201 = vld [vmem:[%s196 + $0x8] sm:$0xff]
        %v202 = vld [vmem:[%s196 + $0x10] sm:$0xff]
        %v203 = vld [vmem:[%s196 + $0x18] sm:$0xff]
        %v204 = vld [vmem:[%s1] sm:$0xff]
        %v205 = vld [vmem:[%s1 + $0x8] sm:$0xff]
        %v206 = vld [vmem:[%s1 + $0x10] sm:$0xff]
        %v207 = vld [vmem:[%s1 + $0x18] sm:$0xff]
        %v208 = vld [vmem:[%s1 + $0x20] sm:$0xff]
        %v209 = vld [vmem:[%s1 + $0x28] sm:$0xff]
        %v210 = vld [vmem:[%s1 + $0x30] sm:$0xff]
        %v211 = vld [vmem:[%s1 + $0x38] sm:$0xff]
        %v212 = vld [vmem:[%s1 + $0x40] sm:$0xff]
        %v213 = vld [vmem:[%s1 + $0x48] sm:$0xff]
        %v214 = vld [vmem:[%s1 + $0x50] sm:$0xff]
        %v215 = vld [vmem:[%s1 + $0x58] sm:$0xff]
        %v216 = vld [vmem:[%s1 + $0x60] sm:$0xff]
        %v217 = vld [vmem:[%s1 + $0x68] sm:$0xff]
        %v218 = vld [vmem:[%s1 + $0x70] sm:$0xff]
        %v219 = vld [vmem:[%s1 + $0x78] sm:$0xff]
        %v220 = vld [vmem:[%s1 + $0x80] sm:$0xff]
        %v221 = vld [vmem:[%s1 + $0x88] sm:$0xff]
        %v222 = vld [vmem:[%s1 + $0x90] sm:$0xff]
        %v223 = vld [vmem:[%s1 + $0x98] sm:$0xff]
        %v224 = vld [vmem:[%s1 + $0xa0] sm:$0xff]
        %v225 = vld [vmem:[%s1 + $0xa8] sm:$0xff]
        %v226 = vld [vmem:[%s1 + $0xb0] sm:$0xff]
        %v227 = vld [vmem:[%s1 + $0xb8] sm:$0xff]
        %v228 = vld [vmem:[%s1 + $0xc0] sm:$0xff]
        %v229 = vld [vmem:[%s1 + $0xc8] sm:$0xff]
        %v230 = vld [vmem:[%s1 + $0xd0] sm:$0xff]
        %v231 = vld [vmem:[%s1 + $0xd8] sm:$0xff]
        %v232 = vld [vmem:[%s1 + $0xe0] sm:$0xff]
        %v233 = vld [vmem:[%s1 + $0xe8] sm:$0xff]
        %v234 = vld [vmem:[%s1 + $0xf0] sm:$0xff]
        %v235 = vld [vmem:[%s1 + $0xf8] sm:$0xff]
        %v236 = vld [vmem:[%s1 + $0x100] sm:$0xff]
        %v237 = vld [vmem:[%s1 + $0x108] sm:$0xff]
        %v238 = vld [vmem:[%s1 + $0x110] sm:$0xff]
        %v239 = vld [vmem:[%s1 + $0x118] sm:$0xff]
        %v240 = vld [vmem:[%s1 + $0x120] sm:$0xff]
        %v241 = vld [vmem:[%s1 + $0x128] sm:$0xff]
        %v242 = vld [vmem:[%s1 + $0x130] sm:$0xff]
        %v243 = vld [vmem:[%s1 + $0x138] sm:$0xff]
        %v244 = vld [vmem:[%s1 + $0x140] sm:$0xff]
        %v245 = vld [vmem:[%s1 + $0x148] sm:$0xff]
        %v246 = vld [vmem:[%s1 + $0x150] sm:$0xff]
        %v247 = vld [vmem:[%s1 + $0x158] sm:$0xff]
        %v248 = vld [vmem:[%s1 + $0x160] sm:$0xff]
        %v249 = vld [vmem:[%s1 + $0x168] sm:$0xff]
        %v250 = vld [vmem:[%s1 + $0x170] sm:$0xff]
        %v251 = vld [vmem:[%s1 + $0x178] sm:$0xff]
        %v252 = vld [vmem:[%s1 + $0x180] sm:$0xff]
        %v253 = vld [vmem:[%s1 + $0x188] sm:$0xff]
        %v254 = vld [vmem:[%s1 + $0x190] sm:$0xff]
        %v255 = vld [vmem:[%s1 + $0x198] sm:$0xff]
        %v256 = vld [vmem:[%s1 + $0x1a0] sm:$0xff]
        %v257 = vld [vmem:[%s1 + $0x1a8] sm:$0xff]
        %v258 = vld [vmem:[%s1 + $0x1b0] sm:$0xff]
        %v259 = vld [vmem:[%s1 + $0x1b8] sm:$0xff]
        %v260 = vld [vmem:[%s1 + $0x1c0] sm:$0x7f]
        %v265 = vcombine.high %v200, %v200
        %v266 = vcombine.high %v201, %v201
        %v267 = vcombine.high %v202, %v202
        %v268 = vcombine.high %v203, %v203
        %vm269 = vcmask 31744
        %v271 = vsel %vm269, %v204, 0
        %v274 = vsel %vm269, %v205, 0
        %v277 = vsel %vm269, %v206, 0
        %v280 = vsel %vm269, %v207, 0
        %v283 = vsel %vm269, %v208, 0
        %v286 = vsel %vm269, %v209, 0
        %v289 = vsel %vm269, %v210, 0
        %v292 = vsel %vm269, %v211, 0
        %v295 = vsel %vm269, %v212, 0
        %v298 = vsel %vm269, %v213, 0
        %v301 = vsel %vm269, %v214, 0
        %v304 = vsel %vm269, %v215, 0
        %v307 = vsel %vm269, %v216, 0
        %v310 = vsel %vm269, %v217, 0
        %v313 = vsel %vm269, %v218, 0
        %v316 = vsel %vm269, %v219, 0
        %v319 = vsel %vm269, %v220, 0
        %v322 = vsel %vm269, %v221, 0
        %v325 = vsel %vm269, %v222, 0
        %v328 = vsel %vm269, %v223, 0
        %v331 = vsel %vm269, %v224, 0
        %v334 = vsel %vm269, %v225, 0
        %v337 = vsel %vm269, %v226, 0
        %v340 = vsel %vm269, %v227, 0
        %v343 = vsel %vm269, %v228, 0
        %v346 = vsel %vm269, %v229, 0
        %v349 = vsel %vm269, %v230, 0
        %v352 = vsel %vm269, %v231, 0
        %v355 = vsel %vm269, %v232, 0
        %v358 = vsel %vm269, %v233, 0
        %v361 = vsel %vm269, %v234, 0
        %v364 = vsel %vm269, %v235, 0
        %v367 = vsel %vm269, %v236, 0
        %v370 = vsel %vm269, %v237, 0
        %v373 = vsel %vm269, %v238, 0
        %v376 = vsel %vm269, %v239, 0
        %v379 = vsel %vm269, %v240, 0
        %v382 = vsel %vm269, %v241, 0
        %v385 = vsel %vm269, %v242, 0
        %v388 = vsel %vm269, %v243, 0
        %v391 = vsel %vm269, %v244, 0
        %v394 = vsel %vm269, %v245, 0
        %v397 = vsel %vm269, %v246, 0
        %v400 = vsel %vm269, %v247, 0
        %v403 = vsel %vm269, %v248, 0
        %v406 = vsel %vm269, %v249, 0
        %v409 = vsel %vm269, %v250, 0
        %v412 = vsel %vm269, %v251, 0
        %v415 = vsel %vm269, %v252, 0
        %v418 = vsel %vm269, %v253, 0
        %v421 = vsel %vm269, %v254, 0
        %v424 = vsel %vm269, %v255, 0
        %v427 = vsel %vm269, %v256, 0
        %v430 = vsel %vm269, %v257, 0
        %v433 = vsel %vm269, %v258, 0
        %v436 = vsel %vm269, %v259, 0
        %v439 = vsel %vm269, %v260, 0
        %vm441 = vcmask 1043456
        %v442 = vsel %vm441, %v200, 0
        %v444 = vsel %vm441, %v265, 0
        %v446 = vsel %vm441, %v201, 0
        %v448 = vsel %vm441, %v266, 0
        %v450 = vsel %vm441, %v202, 0
        %v452 = vsel %vm441, %v267, 0
        %v454 = vsel %vm441, %v203, 0
        %v456 = vsel %vm441, %v268, 0
        %458 = vmatprep.subr.mxu0 %v444
        %459 = vmatpush1.msra.mxu0 %v442
        %460 = vmatprep.subr.mxu0 0.0
        %461 = vmatpush1.msra.mxu0 0.0
        %462 = vmatprep.subr.mxu0 0.0
        %463 = vmatpush1.msra.mxu0 0.0
        %464 = vmatprep.subr.mxu0 0.0
        %465 = vmatpush1.msra.mxu0 0.0
        %466 = vmatprep.subr.mxu0 0.0
        %467 = vmatpush1.msra.mxu0 0.0
        %468 = vmatprep.subr.mxu0 0.0
        %469 = vmatpush1.msra.mxu0 0.0
        %470 = vmatprep.subr.mxu0 0.0
        %471 = vmatpush1.msra.mxu0 0.0
        %472 = vmatprep.subr.mxu0 0.0
        %473 = vmatpush1.msra.mxu0 0.0
        %474 = vmatprep.subr.mxu0 0.0
        %475 = vmatpush1.msra.mxu0 0.0
        %476 = vmatprep.subr.mxu0 0.0
        %477 = vmatpush1.msra.mxu0 0.0
        %478 = vmatprep.subr.mxu0 0.0
        %479 = vmatpush1.msra.mxu0 0.0
        %480 = vmatprep.subr.mxu0 0.0
        %481 = vmatpush1.msra.mxu0 0.0
        %482 = vmatprep.subr.mxu0 0.0
        %483 = vmatpush1.msra.mxu0 0.0
        %484 = vmatprep.subr.mxu0 0.0
        %485 = vmatpush1.msra.mxu0 0.0
        %486 = vmatprep.subr.mxu0 0.0
        %487 = vmatpush1.msra.mxu0 0.0
        %488 = vmatprep.subr.mxu0 0.0
        %489 = vmatpush1.msra.mxu0 0.0
        %490 = vmatprep.subr.mxu0 0.0
        %491 = vmatpush1.msra.mxu0 0.0
        %492 = vmatprep.subr.mxu0 0.0
        %493 = vmatpush1.msra.mxu0 0.0
        %494 = vmatprep.subr.mxu0 0.0
        %495 = vmatpush1.msra.mxu0 0.0
        %496 = vmatprep.subr.mxu0 0.0
        %497 = vmatpush1.msra.mxu0 0.0
        %498 = vmatprep.subr.mxu0 0.0
        %499 = vmatpush1.msra.mxu0 0.0
        %500 = vmatprep.subr.mxu0 0.0
        %501 = vmatpush1.msra.mxu0 0.0
        %502 = vmatprep.subr.mxu0 0.0
        %503 = vmatpush1.msra.mxu0 0.0
        %504 = vmatprep.subr.mxu0 0.0
        %505 = vmatpush1.msra.mxu0 0.0
        %506 = vmatprep.subr.mxu0 0.0
        %507 = vmatpush1.msra.mxu0 0.0
        %508 = vmatprep.subr.mxu0 0.0
        %509 = vmatpush1.msra.mxu0 0.0
        %510 = vmatprep.subr.mxu0 0.0
        %511 = vmatpush1.msra.mxu0 0.0
        %512 = vmatprep.subr.mxu0 0.0
        %513 = vmatpush1.msra.mxu0 0.0
        %514 = vmatprep.subr.mxu0 0.0
        %515 = vmatpush1.msra.mxu0 0.0
        %516 = vmatprep.subr.mxu0 0.0
        %517 = vmatpush1.msra.mxu0 0.0
        %518 = vmatprep.subr.mxu0 0.0
        %519 = vmatpush1.msra.mxu0 0.0
        %520 = vmatprep.subr.mxu0 0.0
        %521 = vmatpush1.msra.mxu0 0.0
        %522 = vmatprep.mubr.f32.mxu0 0.0
        %523 = vmatmul.mubr.f32.gmra.mrb[0].mxu0 %v271
        %v524 = vpop.f32.mrb[0].mxu0
        %v525 = vadd.f32 0.0, %v524
        %v526 = vpop.f32.mrb[0].mxu0
        %v527 = vadd.f32 0.0, %v526
        %528 = vmatprep.mubr.f32.mxu0 0.0
        %529 = vmatmul.mubr.f32.gmra.mrb[0].mxu0 %v274
        %v530 = vpop.f32.mrb[0].mxu0
        %v531 = vadd.f32 0.0, %v530
        %v532 = vpop.f32.mrb[0].mxu0
        %v533 = vadd.f32 0.0, %v532
        %534 = vmatprep.mubr.f32.mxu0 0.0
        %535 = vmatmul.mubr.f32.gmra.mrb[0].mxu0 %v277
        %v536 = vpop.f32.mrb[0].mxu0
        %v537 = vadd.f32 0.0, %v536
        %v538 = vpop.f32.mrb[0].mxu0
        %v539 = vadd.f32 0.0, %v538
        %540 = vmatprep.mubr.f32.mxu0 0.0
        %541 = vmatmul.mubr.f32.gmra.mrb[0].mxu0 %v280
        %v542 = vpop.f32.mrb[0].mxu0
        %v543 = vadd.f32 0.0, %v542
        %v544 = vpop.f32.mrb[0].mxu0
        %v545 = vadd.f32 0.0, %v544
        %546 = vmatprep.mubr.f32.mxu0 0.0
        %547 = vmatmul.mubr.f32.gmra.mrb[0].mxu0 %v283
        %v548 = vpop.f32.mrb[0].mxu0
        %v549 = vadd.f32 0.0, %v548
        %v550 = vpop.f32.mrb[0].mxu0
        %v551 = vadd.f32 0.0, %v550
        %552 = vmatprep.mubr.f32.mxu0 0.0
        %553 = vmatmul.mubr.f32.gmra.mrb[0].mxu0 %v286
        %v554 = vpop.f32.mrb[0].mxu0
        %v555 = vadd.f32 0.0, %v554
        %v556 = vpop.f32.mrb[0].mxu0
        %v557 = vadd.f32 0.0, %v556
        %558 = vmatprep.mubr.f32.mxu0 0.0
        %559 = vmatmul.mubr.f32.gmra.mrb[0].mxu0 %v289
        %v560 = vpop.f32.mrb[0].mxu0
        %v561 = vadd.f32 0.0, %v560
        %v562 = vpop.f32.mrb[0].mxu0
        %v563 = vadd.f32 0.0, %v562
        %564 = vmatprep.mubr.f32.mxu0 0.0
        %565 = vmatmul.mubr.f32.gmra.mrb[0].mxu0 %v292
        %v566 = vpop.f32.mrb[0].mxu0
        %v567 = vadd.f32 0.0, %v566
        %v568 = vpop.f32.mrb[0].mxu0
        %v569 = vadd.f32 0.0, %v568
        %570 = vmatprep.mubr.f32.mxu0 0.0
        %571 = vmatmul.mubr.f32.gmra.mrb[0].mxu0 %v295
        %v572 = vpop.f32.mrb[0].mxu0
        %v573 = vadd.f32 0.0, %v572
        %v574 = vpop.f32.mrb[0].mxu0
        %v575 = vadd.f32 0.0, %v574
        %576 = vmatprep.mubr.f32.mxu0 0.0
        %577 = vmatmul.mubr.f32.gmra.mrb[0].mxu0 %v298
        %v578 = vpop.f32.mrb[0].mxu0
        %v579 = vadd.f32 0.0, %v578
        %v580 = vpop.f32.mrb[0].mxu0
        %v581 = vadd.f32 0.0, %v580
        %582 = vmatprep.mubr.f32.mxu0 0.0
        %583 = vmatmul.mubr.f32.gmra.mrb[0].mxu0 %v301
        %v584 = vpop.f32.mrb[0].mxu0
        %v585 = vadd.f32 0.0, %v584
        %v586 = vpop.f32.mrb[0].mxu0
        %v587 = vadd.f32 0.0, %v586
        %588 = vmatprep.mubr.f32.mxu0 0.0
        %589 = vmatmul.mubr.f32.gmra.mrb[0].mxu0 %v304
        %v590 = vpop.f32.mrb[0].mxu0
        %v591 = vadd.f32 0.0, %v590
        %v592 = vpop.f32.mrb[0].mxu0
        %v593 = vadd.f32 0.0, %v592
        %594 = vmatprep.mubr.f32.mxu0 0.0
        %595 = vmatmul.mubr.f32.gmra.mrb[0].mxu0 %v307
        %v596 = vpop.f32.mrb[0].mxu0
        %v597 = vadd.f32 0.0, %v596
        %v598 = vpop.f32.mrb[0].mxu0
        %v599 = vadd.f32 0.0, %v598
        %600 = vmatprep.mubr.f32.mxu0 0.0
        %601 = vmatmul.mubr.f32.gmra.mrb[0].mxu0 %v310
        %v602 = vpop.f32.mrb[0].mxu0
        %v603 = vadd.f32 0.0, %v602
        %v604 = vpop.f32.mrb[0].mxu0
        %v605 = vadd.f32 0.0, %v604
        %606 = vmatprep.mubr.f32.mxu0 0.0
        %607 = vmatmul.mubr.f32.gmra.mrb[0].mxu0 %v313
        %v608 = vpop.f32.mrb[0].mxu0
        %v609 = vadd.f32 0.0, %v608
        %v610 = vpop.f32.mrb[0].mxu0
        %v611 = vadd.f32 0.0, %v610
        %612 = vmatprep.mubr.f32.mxu0 0.0
        %613 = vmatmul.mubr.f32.gmra.mrb[0].mxu0 %v316
        %v614 = vpop.f32.mrb[0].mxu0
        %v615 = vadd.f32 0.0, %v614
        %v616 = vpop.f32.mrb[0].mxu0
        %v617 = vadd.f32 0.0, %v616
        %618 = vmatprep.mubr.f32.mxu0 0.0
        %619 = vmatmul.mubr.f32.gmra.mrb[0].mxu0 %v319
        %v620 = vpop.f32.mrb[0].mxu0
        %v621 = vadd.f32 0.0, %v620
        %v622 = vpop.f32.mrb[0].mxu0
        %v623 = vadd.f32 0.0, %v622
        %624 = vmatprep.mubr.f32.mxu0 0.0
        %625 = vmatmul.mubr.f32.gmra.mrb[0].mxu0 %v322
        %v626 = vpop.f32.mrb[0].mxu0
        %v627 = vadd.f32 0.0, %v626
        %v628 = vpop.f32.mrb[0].mxu0
        %v629 = vadd.f32 0.0, %v628
        %630 = vmatprep.mubr.f32.mxu0 0.0
        %631 = vmatmul.mubr.f32.gmra.mrb[0].mxu0 %v325
        %v632 = vpop.f32.mrb[0].mxu0
        %v633 = vadd.f32 0.0, %v632
        %v634 = vpop.f32.mrb[0].mxu0
        %v635 = vadd.f32 0.0, %v634
        %636 = vmatprep.mubr.f32.mxu0 0.0
        %637 = vmatmul.mubr.f32.gmra.mrb[0].mxu0 %v328
        %v638 = vpop.f32.mrb[0].mxu0
        %v639 = vadd.f32 0.0, %v638
        %v640 = vpop.f32.mrb[0].mxu0
        %v641 = vadd.f32 0.0, %v640
        %642 = vmatprep.mubr.f32.mxu0 0.0
        %643 = vmatmul.mubr.f32.gmra.mrb[0].mxu0 %v331
        %v644 = vpop.f32.mrb[0].mxu0
        %v645 = vadd.f32 0.0, %v644
        %v646 = vpop.f32.mrb[0].mxu0
        %v647 = vadd.f32 0.0, %v646
        %648 = vmatprep.mubr.f32.mxu0 0.0
        %649 = vmatmul.mubr.f32.gmra.mrb[0].mxu0 %v334
        %v650 = vpop.f32.mrb[0].mxu0
        %v651 = vadd.f32 0.0, %v650
        %v652 = vpop.f32.mrb[0].mxu0
        %v653 = vadd.f32 0.0, %v652
        %654 = vmatprep.mubr.f32.mxu0 0.0
        %655 = vmatmul.mubr.f32.gmra.mrb[0].mxu0 %v337
        %v656 = vpop.f32.mrb[0].mxu0
        %v657 = vadd.f32 0.0, %v656
        %v658 = vpop.f32.mrb[0].mxu0
        %v659 = vadd.f32 0.0, %v658
        %660 = vmatprep.mubr.f32.mxu0 0.0
        %661 = vmatmul.mubr.f32.gmra.mrb[0].mxu0 %v340
        %v662 = vpop.f32.mrb[0].mxu0
        %v663 = vadd.f32 0.0, %v662
        %v664 = vpop.f32.mrb[0].mxu0
        %v665 = vadd.f32 0.0, %v664
        %666 = vmatprep.mubr.f32.mxu0 0.0
        %667 = vmatmul.mubr.f32.gmra.mrb[0].mxu0 %v343
        %v668 = vpop.f32.mrb[0].mxu0
        %v669 = vadd.f32 0.0, %v668
        %v670 = vpop.f32.mrb[0].mxu0
        %v671 = vadd.f32 0.0, %v670
        %672 = vmatprep.mubr.f32.mxu0 0.0
        %673 = vmatmul.mubr.f32.gmra.mrb[0].mxu0 %v346
        %v674 = vpop.f32.mrb[0].mxu0
        %v675 = vadd.f32 0.0, %v674
        %v676 = vpop.f32.mrb[0].mxu0
        %v677 = vadd.f32 0.0, %v676
        %678 = vmatprep.mubr.f32.mxu0 0.0
        %679 = vmatmul.mubr.f32.gmra.mrb[0].mxu0 %v349
        %v680 = vpop.f32.mrb[0].mxu0
        %v681 = vadd.f32 0.0, %v680
        %v682 = vpop.f32.mrb[0].mxu0
        %v683 = vadd.f32 0.0, %v682
        %684 = vmatprep.mubr.f32.mxu0 0.0
        %685 = vmatmul.mubr.f32.gmra.mrb[0].mxu0 %v352
        %v686 = vpop.f32.mrb[0].mxu0
        %v687 = vadd.f32 0.0, %v686
        %v688 = vpop.f32.mrb[0].mxu0
        %v689 = vadd.f32 0.0, %v688
        %690 = vmatprep.mubr.f32.mxu0 0.0
        %691 = vmatmul.mubr.f32.gmra.mrb[0].mxu0 %v355
        %v692 = vpop.f32.mrb[0].mxu0
        %v693 = vadd.f32 0.0, %v692
        %v694 = vpop.f32.mrb[0].mxu0
        %v695 = vadd.f32 0.0, %v694
        %696 = vmatprep.mubr.f32.mxu0 0.0
        %697 = vmatmul.mubr.f32.gmra.mrb[0].mxu0 %v358
        %v698 = vpop.f32.mrb[0].mxu0
        %v699 = vadd.f32 0.0, %v698
        %v700 = vpop.f32.mrb[0].mxu0
        %v701 = vadd.f32 0.0, %v700
        %702 = vmatprep.mubr.f32.mxu0 0.0
        %703 = vmatmul.mubr.f32.gmra.mrb[0].mxu0 %v361
        %v704 = vpop.f32.mrb[0].mxu0
        %v705 = vadd.f32 0.0, %v704
        %v706 = vpop.f32.mrb[0].mxu0
        %v707 = vadd.f32 0.0, %v706
        %708 = vmatprep.mubr.f32.mxu0 0.0
        %709 = vmatmul.mubr.f32.gmra.mrb[0].mxu0 %v364
        %v710 = vpop.f32.mrb[0].mxu0
        %v711 = vadd.f32 0.0, %v710
        %v712 = vpop.f32.mrb[0].mxu0
        %v713 = vadd.f32 0.0, %v712
        %714 = vmatprep.mubr.f32.mxu0 0.0
        %715 = vmatmul.mubr.f32.gmra.mrb[0].mxu0 %v367
        %v716 = vpop.f32.mrb[0].mxu0
        %v717 = vadd.f32 0.0, %v716
        %v718 = vpop.f32.mrb[0].mxu0
        %v719 = vadd.f32 0.0, %v718
        %720 = vmatprep.mubr.f32.mxu0 0.0
        %721 = vmatmul.mubr.f32.gmra.mrb[0].mxu0 %v370
        %v722 = vpop.f32.mrb[0].mxu0
        %v723 = vadd.f32 0.0, %v722
        %v724 = vpop.f32.mrb[0].mxu0
        %v725 = vadd.f32 0.0, %v724
        %726 = vmatprep.mubr.f32.mxu0 0.0
        %727 = vmatmul.mubr.f32.gmra.mrb[0].mxu0 %v373
        %v728 = vpop.f32.mrb[0].mxu0
        %v729 = vadd.f32 0.0, %v728
        %v730 = vpop.f32.mrb[0].mxu0
        %v731 = vadd.f32 0.0, %v730
        %732 = vmatprep.mubr.f32.mxu0 0.0
        %733 = vmatmul.mubr.f32.gmra.mrb[0].mxu0 %v376
        %v734 = vpop.f32.mrb[0].mxu0
        %v735 = vadd.f32 0.0, %v734
        %v736 = vpop.f32.mrb[0].mxu0
        %v737 = vadd.f32 0.0, %v736
        %738 = vmatprep.mubr.f32.mxu0 0.0
        %739 = vmatmul.mubr.f32.gmra.mrb[0].mxu0 %v379
        %v740 = vpop.f32.mrb[0].mxu0
        %v741 = vadd.f32 0.0, %v740
        %v742 = vpop.f32.mrb[0].mxu0
        %v743 = vadd.f32 0.0, %v742
        %744 = vmatprep.mubr.f32.mxu0 0.0
        %745 = vmatmul.mubr.f32.gmra.mrb[0].mxu0 %v382
        %v746 = vpop.f32.mrb[0].mxu0
        %v747 = vadd.f32 0.0, %v746
        %v748 = vpop.f32.mrb[0].mxu0
        %v749 = vadd.f32 0.0, %v748
        %750 = vmatprep.mubr.f32.mxu0 0.0
        %751 = vmatmul.mubr.f32.gmra.mrb[0].mxu0 %v385
        %v752 = vpop.f32.mrb[0].mxu0
        %v753 = vadd.f32 0.0, %v752
        %v754 = vpop.f32.mrb[0].mxu0
        %v755 = vadd.f32 0.0, %v754
        %756 = vmatprep.mubr.f32.mxu0 0.0
        %757 = vmatmul.mubr.f32.gmra.mrb[0].mxu0 %v388
        %v758 = vpop.f32.mrb[0].mxu0
        %v759 = vadd.f32 0.0, %v758
        %v760 = vpop.f32.mrb[0].mxu0
        %v761 = vadd.f32 0.0, %v760
        %762 = vmatprep.mubr.f32.mxu0 0.0
        %763 = vmatmul.mubr.f32.gmra.mrb[0].mxu0 %v391
        %v764 = vpop.f32.mrb[0].mxu0
        %v765 = vadd.f32 0.0, %v764
        %v766 = vpop.f32.mrb[0].mxu0
        %v767 = vadd.f32 0.0, %v766
        %768 = vmatprep.mubr.f32.mxu0 0.0
        %769 = vmatmul.mubr.f32.gmra.mrb[0].mxu0 %v394
        %v770 = vpop.f32.mrb[0].mxu0
        %v771 = vadd.f32 0.0, %v770
        %v772 = vpop.f32.mrb[0].mxu0
        %v773 = vadd.f32 0.0, %v772
        %774 = vmatprep.mubr.f32.mxu0 0.0
        %775 = vmatmul.mubr.f32.gmra.mrb[0].mxu0 %v397
        %v776 = vpop.f32.mrb[0].mxu0
        %v777 = vadd.f32 0.0, %v776
        %v778 = vpop.f32.mrb[0].mxu0
        %v779 = vadd.f32 0.0, %v778
        %780 = vmatprep.mubr.f32.mxu0 0.0
        %781 = vmatmul.mubr.f32.gmra.mrb[0].mxu0 %v400
        %v782 = vpop.f32.mrb[0].mxu0
        %v783 = vadd.f32 0.0, %v782
        %v784 = vpop.f32.mrb[0].mxu0
        %v785 = vadd.f32 0.0, %v784
        %786 = vmatprep.mubr.f32.mxu0 0.0
        %787 = vmatmul.mubr.f32.gmra.mrb[0].mxu0 %v403
        %v788 = vpop.f32.mrb[0].mxu0
        %v789 = vadd.f32 0.0, %v788
        %v790 = vpop.f32.mrb[0].mxu0
        %v791 = vadd.f32 0.0, %v790
        %792 = vmatprep.mubr.f32.mxu0 0.0
        %793 = vmatmul.mubr.f32.gmra.mrb[0].mxu0 %v406
        %v794 = vpop.f32.mrb[0].mxu0
        %v795 = vadd.f32 0.0, %v794
        %v796 = vpop.f32.mrb[0].mxu0
        %v797 = vadd.f32 0.0, %v796
        %798 = vmatprep.mubr.f32.mxu0 0.0
        %799 = vmatmul.mubr.f32.gmra.mrb[0].mxu0 %v409
        %v800 = vpop.f32.mrb[0].mxu0
        %v801 = vadd.f32 0.0, %v800
        %v802 = vpop.f32.mrb[0].mxu0
        %v803 = vadd.f32 0.0, %v802
        %804 = vmatprep.mubr.f32.mxu0 0.0
        %805 = vmatmul.mubr.f32.gmra.mrb[0].mxu0 %v412
        %v806 = vpop.f32.mrb[0].mxu0
        %v807 = vadd.f32 0.0, %v806
        %v808 = vpop.f32.mrb[0].mxu0
        %v809 = vadd.f32 0.0, %v808
        %810 = vmatprep.mubr.f32.mxu0 0.0
        %811 = vmatmul.mubr.f32.gmra.mrb[0].mxu0 %v415
        %v812 = vpop.f32.mrb[0].mxu0
        %v813 = vadd.f32 0.0, %v812
        %v814 = vpop.f32.mrb[0].mxu0
        %v815 = vadd.f32 0.0, %v814
        %816 = vmatprep.mubr.f32.mxu0 0.0
        %817 = vmatmul.mubr.f32.gmra.mrb[0].mxu0 %v418
        %v818 = vpop.f32.mrb[0].mxu0
        %v819 = vadd.f32 0.0, %v818
        %v820 = vpop.f32.mrb[0].mxu0
        %v821 = vadd.f32 0.0, %v820
        %822 = vmatprep.mubr.f32.mxu0 0.0
        %823 = vmatmul.mubr.f32.gmra.mrb[0].mxu0 %v421
        %v824 = vpop.f32.mrb[0].mxu0
        %v825 = vadd.f32 0.0, %v824
        %v826 = vpop.f32.mrb[0].mxu0
        %v827 = vadd.f32 0.0, %v826
        %828 = vmatprep.mubr.f32.mxu0 0.0
        %829 = vmatmul.mubr.f32.gmra.mrb[0].mxu0 %v424
        %v830 = vpop.f32.mrb[0].mxu0
        %v831 = vadd.f32 0.0, %v830
        %v832 = vpop.f32.mrb[0].mxu0
        %v833 = vadd.f32 0.0, %v832
        %834 = vmatprep.mubr.f32.mxu0 0.0
        %835 = vmatmul.mubr.f32.gmra.mrb[0].mxu0 %v427
        %v836 = vpop.f32.mrb[0].mxu0
        %v837 = vadd.f32 0.0, %v836
        %v838 = vpop.f32.mrb[0].mxu0
        %v839 = vadd.f32 0.0, %v838
        %840 = vmatprep.mubr.f32.mxu0 0.0
        %841 = vmatmul.mubr.f32.gmra.mrb[0].mxu0 %v430
        %v842 = vpop.f32.mrb[0].mxu0
        %v843 = vadd.f32 0.0, %v842
        %v844 = vpop.f32.mrb[0].mxu0
        %v845 = vadd.f32 0.0, %v844
        %846 = vmatprep.mubr.f32.mxu0 0.0
        %847 = vmatmul.mubr.f32.gmra.mrb[0].mxu0 %v433
        %v848 = vpop.f32.mrb[0].mxu0
        %v849 = vadd.f32 0.0, %v848
        %v850 = vpop.f32.mrb[0].mxu0
        %v851 = vadd.f32 0.0, %v850
        %852 = vmatprep.mubr.f32.mxu0 0.0
        %853 = vmatmul.mubr.f32.gmra.mrb[0].mxu0 %v436
        %v854 = vpop.f32.mrb[0].mxu0
        %v855 = vadd.f32 0.0, %v854
        %v856 = vpop.f32.mrb[0].mxu0
        %v857 = vadd.f32 0.0, %v856
        %858 = vmatprep.mubr.f32.mxu0 0.0
        %859 = vmatmul.mubr.f32.gmra.mrb[0].mxu0 %v439
        %v860 = vpop.f32.mrb[0].mxu0
        %v861 = vadd.f32 0.0, %v860
        %v862 = vpop.f32.mrb[0].mxu0
        %v863 = vadd.f32 0.0, %v862
        %864 = vdwg.mxu0
        %865 = vmatprep.subr.mxu0 %v448
        %866 = vmatpush1.msra.mxu0 %v446
        %867 = vmatprep.subr.mxu0 0.0
        %868 = vmatpush1.msra.mxu0 0.0
        %869 = vmatprep.subr.mxu0 0.0
        %870 = vmatpush1.msra.mxu0 0.0
        %871 = vmatprep.subr.mxu0 0.0
        %872 = vmatpush1.msra.mxu0 0.0
        %873 = vmatprep.subr.mxu0 0.0
        %874 = vmatpush1.msra.mxu0 0.0
        %875 = vmatprep.subr.mxu0 0.0
        %876 = vmatpush1.msra.mxu0 0.0
        %877 = vmatprep.subr.mxu0 0.0
        %878 = vmatpush1.msra.mxu0 0.0
        %879 = vmatprep.subr.mxu0 0.0
        %880 = vmatpush1.msra.mxu0 0.0
        %881 = vmatprep.subr.mxu0 0.0
        %882 = vmatpush1.msra.mxu0 0.0
        %883 = vmatprep.subr.mxu0 0.0
        %884 = vmatpush1.msra.mxu0 0.0
        %885 = vmatprep.subr.mxu0 0.0
        %886 = vmatpush1.msra.mxu0 0.0
        %887 = vmatprep.subr.mxu0 0.0
        %888 = vmatpush1.msra.mxu0 0.0
        %889 = vmatprep.subr.mxu0 0.0
        %890 = vmatpush1.msra.mxu0 0.0
        %891 = vmatprep.subr.mxu0 0.0
        %892 = vmatpush1.msra.mxu0 0.0
        %893 = vmatprep.subr.mxu0 0.0
        %894 = vmatpush1.msra.mxu0 0.0
        %895 = vmatprep.subr.mxu0 0.0
        %896 = vmatpush1.msra.mxu0 0.0
        %897 = vmatprep.subr.mxu0 0.0
        %898 = vmatpush1.msra.mxu0 0.0
        %899 = vmatprep.subr.mxu0 0.0
        %900 = vmatpush1.msra.mxu0 0.0
        %901 = vmatprep.subr.mxu0 0.0
        %902 = vmatpush1.msra.mxu0 0.0
        %903 = vmatprep.subr.mxu0 0.0
        %904 = vmatpush1.msra.mxu0 0.0
        %905 = vmatprep.subr.mxu0 0.0
        %906 = vmatpush1.msra.mxu0 0.0
        %907 = vmatprep.subr.mxu0 0.0
        %908 = vmatpush1.msra.mxu0 0.0
        %909 = vmatprep.subr.mxu0 0.0
        %910 = vmatpush1.msra.mxu0 0.0
        %911 = vmatprep.subr.mxu0 0.0
        %912 = vmatpush1.msra.mxu0 0.0
        %913 = vmatprep.subr.mxu0 0.0
        %914 = vmatpush1.msra.mxu0 0.0
        %915 = vmatprep.subr.mxu0 0.0
        %916 = vmatpush1.msra.mxu0 0.0
        %917 = vmatprep.subr.mxu0 0.0
        %918 = vmatpush1.msra.mxu0 0.0
        %919 = vmatprep.subr.mxu0 0.0
        %920 = vmatpush1.msra.mxu0 0.0
        %921 = vmatprep.subr.mxu0 0.0
        %922 = vmatpush1.msra.mxu0 0.0
        %923 = vmatprep.subr.mxu0 0.0
        %924 = vmatpush1.msra.mxu0 0.0
        %925 = vmatprep.subr.mxu0 0.0
        %926 = vmatpush1.msra.mxu0 0.0
        %927 = vmatprep.subr.mxu0 0.0
        %928 = vmatpush1.msra.mxu0 0.0
        %929 = vmatprep.mubr.f32.mxu0 0.0
        %930 = vmatmul.mubr.f32.gmra.mrb[0].mxu0 %v271
        %v931 = vpop.f32.mrb[0].mxu0
        %v932 = vadd.f32 0.0, %v931
        %v933 = vpop.f32.mrb[0].mxu0
        %v934 = vadd.f32 0.0, %v933
        %935 = vmatprep.mubr.f32.mxu0 0.0
        %936 = vmatmul.mubr.f32.gmra.mrb[0].mxu0 %v274
        %v937 = vpop.f32.mrb[0].mxu0
        %v938 = vadd.f32 0.0, %v937
        %v939 = vpop.f32.mrb[0].mxu0
        %v940 = vadd.f32 0.0, %v939
        %941 = vmatprep.mubr.f32.mxu0 0.0
        %942 = vmatmul.mubr.f32.gmra.mrb[0].mxu0 %v277
        %v943 = vpop.f32.mrb[0].mxu0
        %v944 = vadd.f32 0.0, %v943
        %v945 = vpop.f32.mrb[0].mxu0
        %v946 = vadd.f32 0.0, %v945
        %947 = vmatprep.mubr.f32.mxu0 0.0
        %948 = vmatmul.mubr.f32.gmra.mrb[0].mxu0 %v280
        %v949 = vpop.f32.mrb[0].mxu0
        %v950 = vadd.f32 0.0, %v949
        %v951 = vpop.f32.mrb[0].mxu0
        %v952 = vadd.f32 0.0, %v951
        %953 = vmatprep.mubr.f32.mxu0 0.0
        %954 = vmatmul.mubr.f32.gmra.mrb[0].mxu0 %v283
        %v955 = vpop.f32.mrb[0].mxu0
        %v956 = vadd.f32 0.0, %v955
        %v957 = vpop.f32.mrb[0].mxu0
        %v958 = vadd.f32 0.0, %v957
        %959 = vmatprep.mubr.f32.mxu0 0.0
        %960 = vmatmul.mubr.f32.gmra.mrb[0].mxu0 %v286
        %v961 = vpop.f32.mrb[0].mxu0
        %v962 = vadd.f32 0.0, %v961
        %v963 = vpop.f32.mrb[0].mxu0
        %v964 = vadd.f32 0.0, %v963
        %965 = vmatprep.mubr.f32.mxu0 0.0
        %966 = vmatmul.mubr.f32.gmra.mrb[0].mxu0 %v289
        %v967 = vpop.f32.mrb[0].mxu0
        %v968 = vadd.f32 0.0, %v967
        %v969 = vpop.f32.mrb[0].mxu0
        %v970 = vadd.f32 0.0, %v969
        %971 = vmatprep.mubr.f32.mxu0 0.0
        %972 = vmatmul.mubr.f32.gmra.mrb[0].mxu0 %v292
        %v973 = vpop.f32.mrb[0].mxu0
        %v974 = vadd.f32 0.0, %v973
        %v975 = vpop.f32.mrb[0].mxu0
        %v976 = vadd.f32 0.0, %v975
        %977 = vmatprep.mubr.f32.mxu0 0.0
        %978 = vmatmul.mubr.f32.gmra.mrb[0].mxu0 %v295
        %v979 = vpop.f32.mrb[0].mxu0
        %v980 = vadd.f32 0.0, %v979
        %v981 = vpop.f32.mrb[0].mxu0
        %v982 = vadd.f32 0.0, %v981
        %983 = vmatprep.mubr.f32.mxu0 0.0
        %984 = vmatmul.mubr.f32.gmra.mrb[0].mxu0 %v298
        %v985 = vpop.f32.mrb[0].mxu0
        %v986 = vadd.f32 0.0, %v985
        %v987 = vpop.f32.mrb[0].mxu0
        %v988 = vadd.f32 0.0, %v987
        %989 = vmatprep.mubr.f32.mxu0 0.0
        %990 = vmatmul.mubr.f32.gmra.mrb[0].mxu0 %v301
        %v991 = vpop.f32.mrb[0].mxu0
        %v992 = vadd.f32 0.0, %v991
        %v993 = vpop.f32.mrb[0].mxu0
        %v994 = vadd.f32 0.0, %v993
        %995 = vmatprep.mubr.f32.mxu0 0.0
        %996 = vmatmul.mubr.f32.gmra.mrb[0].mxu0 %v304
        %v997 = vpop.f32.mrb[0].mxu0
        %v998 = vadd.f32 0.0, %v997
        %v999 = vpop.f32.mrb[0].mxu0
        %v1000 = vadd.f32 0.0, %v999
        %1001 = vmatprep.mubr.f32.mxu0 0.0
        %1002 = vmatmul.mubr.f32.gmra.mrb[0].mxu0 %v307
        %v1003 = vpop.f32.mrb[0].mxu0
        %v1004 = vadd.f32 0.0, %v1003
        %v1005 = vpop.f32.mrb[0].mxu0
        %v1006 = vadd.f32 0.0, %v1005
        %1007 = vmatprep.mubr.f32.mxu0 0.0
        %1008 = vmatmul.mubr.f32.gmra.mrb[0].mxu0 %v310
        %v1009 = vpop.f32.mrb[0].mxu0
        %v1010 = vadd.f32 0.0, %v1009
        %v1011 = vpop.f32.mrb[0].mxu0
        %v1012 = vadd.f32 0.0, %v1011
        %1013 = vmatprep.mubr.f32.mxu0 0.0
        %1014 = vmatmul.mubr.f32.gmra.mrb[0].mxu0 %v313
        %v1015 = vpop.f32.mrb[0].mxu0
        %v1016 = vadd.f32 0.0, %v1015
        %v1017 = vpop.f32.mrb[0].mxu0
        %v1018 = vadd.f32 0.0, %v1017
        %1019 = vmatprep.mubr.f32.mxu0 0.0
        %1020 = vmatmul.mubr.f32.gmra.mrb[0].mxu0 %v316
        %v1021 = vpop.f32.mrb[0].mxu0
        %v1022 = vadd.f32 0.0, %v1021
        %v1023 = vpop.f32.mrb[0].mxu0
        %v1024 = vadd.f32 0.0, %v1023
        %1025 = vmatprep.mubr.f32.mxu0 0.0
        %1026 = vmatmul.mubr.f32.gmra.mrb[0].mxu0 %v319
        %v1027 = vpop.f32.mrb[0].mxu0
        %v1028 = vadd.f32 0.0, %v1027
        %v1029 = vpop.f32.mrb[0].mxu0
        %v1030 = vadd.f32 0.0, %v1029
        %1031 = vmatprep.mubr.f32.mxu0 0.0
        %1032 = vmatmul.mubr.f32.gmra.mrb[0].mxu0 %v322
        %v1033 = vpop.f32.mrb[0].mxu0
        %v1034 = vadd.f32 0.0, %v1033
        %v1035 = vpop.f32.mrb[0].mxu0
        %v1036 = vadd.f32 0.0, %v1035
        %1037 = vmatprep.mubr.f32.mxu0 0.0
        %1038 = vmatmul.mubr.f32.gmra.mrb[0].mxu0 %v325
        %v1039 = vpop.f32.mrb[0].mxu0
        %v1040 = vadd.f32 0.0, %v1039
        %v1041 = vpop.f32.mrb[0].mxu0
        %v1042 = vadd.f32 0.0, %v1041
        %1043 = vmatprep.mubr.f32.mxu0 0.0
        %1044 = vmatmul.mubr.f32.gmra.mrb[0].mxu0 %v328
        %v1045 = vpop.f32.mrb[0].mxu0
        %v1046 = vadd.f32 0.0, %v1045
        %v1047 = vpop.f32.mrb[0].mxu0
        %v1048 = vadd.f32 0.0, %v1047
        %1049 = vmatprep.mubr.f32.mxu0 0.0
        %1050 = vmatmul.mubr.f32.gmra.mrb[0].mxu0 %v331
        %v1051 = vpop.f32.mrb[0].mxu0
        %v1052 = vadd.f32 0.0, %v1051
        %v1053 = vpop.f32.mrb[0].mxu0
        %v1054 = vadd.f32 0.0, %v1053
        %1055 = vmatprep.mubr.f32.mxu0 0.0
        %1056 = vmatmul.mubr.f32.gmra.mrb[0].mxu0 %v334
        %v1057 = vpop.f32.mrb[0].mxu0
        %v1058 = vadd.f32 0.0, %v1057
        %v1059 = vpop.f32.mrb[0].mxu0
        %v1060 = vadd.f32 0.0, %v1059
        %1061 = vmatprep.mubr.f32.mxu0 0.0
        %1062 = vmatmul.mubr.f32.gmra.mrb[0].mxu0 %v337
        %v1063 = vpop.f32.mrb[0].mxu0
        %v1064 = vadd.f32 0.0, %v1063
        %v1065 = vpop.f32.mrb[0].mxu0
        %v1066 = vadd.f32 0.0, %v1065
        %1067 = vmatprep.mubr.f32.mxu0 0.0
        %1068 = vmatmul.mubr.f32.gmra.mrb[0].mxu0 %v340
        %v1069 = vpop.f32.mrb[0].mxu0
        %v1070 = vadd.f32 0.0, %v1069
        %v1071 = vpop.f32.mrb[0].mxu0
        %v1072 = vadd.f32 0.0, %v1071
        %1073 = vmatprep.mubr.f32.mxu0 0.0
        %1074 = vmatmul.mubr.f32.gmra.mrb[0].mxu0 %v343
        %v1075 = vpop.f32.mrb[0].mxu0
        %v1076 = vadd.f32 0.0, %v1075
        %v1077 = vpop.f32.mrb[0].mxu0
        %v1078 = vadd.f32 0.0, %v1077
        %1079 = vmatprep.mubr.f32.mxu0 0.0
        %1080 = vmatmul.mubr.f32.gmra.mrb[0].mxu0 %v346
        %v1081 = vpop.f32.mrb[0].mxu0
        %v1082 = vadd.f32 0.0, %v1081
        %v1083 = vpop.f32.mrb[0].mxu0
        %v1084 = vadd.f32 0.0, %v1083
        %1085 = vmatprep.mubr.f32.mxu0 0.0
        %1086 = vmatmul.mubr.f32.gmra.mrb[0].mxu0 %v349
        %v1087 = vpop.f32.mrb[0].mxu0
        %v1088 = vadd.f32 0.0, %v1087
        %v1089 = vpop.f32.mrb[0].mxu0
        %v1090 = vadd.f32 0.0, %v1089
        %1091 = vmatprep.mubr.f32.mxu0 0.0
        %1092 = vmatmul.mubr.f32.gmra.mrb[0].mxu0 %v352
        %v1093 = vpop.f32.mrb[0].mxu0
        %v1094 = vadd.f32 0.0, %v1093
        %v1095 = vpop.f32.mrb[0].mxu0
        %v1096 = vadd.f32 0.0, %v1095
        %1097 = vmatprep.mubr.f32.mxu0 0.0
        %1098 = vmatmul.mubr.f32.gmra.mrb[0].mxu0 %v355
        %v1099 = vpop.f32.mrb[0].mxu0
        %v1100 = vadd.f32 0.0, %v1099
        %v1101 = vpop.f32.mrb[0].mxu0
        %v1102 = vadd.f32 0.0, %v1101
        %1103 = vmatprep.mubr.f32.mxu0 0.0
        %1104 = vmatmul.mubr.f32.gmra.mrb[0].mxu0 %v358
        %v1105 = vpop.f32.mrb[0].mxu0
        %v1106 = vadd.f32 0.0, %v1105
        %v1107 = vpop.f32.mrb[0].mxu0
        %v1108 = vadd.f32 0.0, %v1107
        %1109 = vmatprep.mubr.f32.mxu0 0.0
        %1110 = vmatmul.mubr.f32.gmra.mrb[0].mxu0 %v361
        %v1111 = vpop.f32.mrb[0].mxu0
        %v1112 = vadd.f32 0.0, %v1111
        %v1113 = vpop.f32.mrb[0].mxu0
        %v1114 = vadd.f32 0.0, %v1113
        %1115 = vmatprep.mubr.f32.mxu0 0.0
        %1116 = vmatmul.mubr.f32.gmra.mrb[0].mxu0 %v364
        %v1117 = vpop.f32.mrb[0].mxu0
        %v1118 = vadd.f32 0.0, %v1117
        %v1119 = vpop.f32.mrb[0].mxu0
        %v1120 = vadd.f32 0.0, %v1119
        %1121 = vmatprep.mubr.f32.mxu0 0.0
        %1122 = vmatmul.mubr.f32.gmra.mrb[0].mxu0 %v367
        %v1123 = vpop.f32.mrb[0].mxu0
        %v1124 = vadd.f32 0.0, %v1123
        %v1125 = vpop.f32.mrb[0].mxu0
        %v1126 = vadd.f32 0.0, %v1125
        %1127 = vmatprep.mubr.f32.mxu0 0.0
        %1128 = vmatmul.mubr.f32.gmra.mrb[0].mxu0 %v370
        %v1129 = vpop.f32.mrb[0].mxu0
        %v1130 = vadd.f32 0.0, %v1129
        %v1131 = vpop.f32.mrb[0].mxu0
        %v1132 = vadd.f32 0.0, %v1131
        %1133 = vmatprep.mubr.f32.mxu0 0.0
        %1134 = vmatmul.mubr.f32.gmra.mrb[0].mxu0 %v373
        %v1135 = vpop.f32.mrb[0].mxu0
        %v1136 = vadd.f32 0.0, %v1135
        %v1137 = vpop.f32.mrb[0].mxu0
        %v1138 = vadd.f32 0.0, %v1137
        %1139 = vmatprep.mubr.f32.mxu0 0.0
        %1140 = vmatmul.mubr.f32.gmra.mrb[0].mxu0 %v376
        %v1141 = vpop.f32.mrb[0].mxu0
        %v1142 = vadd.f32 0.0, %v1141
        %v1143 = vpop.f32.mrb[0].mxu0
        %v1144 = vadd.f32 0.0, %v1143
        %1145 = vmatprep.mubr.f32.mxu0 0.0
        %1146 = vmatmul.mubr.f32.gmra.mrb[0].mxu0 %v379
        %v1147 = vpop.f32.mrb[0].mxu0
        %v1148 = vadd.f32 0.0, %v1147
        %v1149 = vpop.f32.mrb[0].mxu0
        %v1150 = vadd.f32 0.0, %v1149
        %1151 = vmatprep.mubr.f32.mxu0 0.0
        %1152 = vmatmul.mubr.f32.gmra.mrb[0].mxu0 %v382
        %v1153 = vpop.f32.mrb[0].mxu0
        %v1154 = vadd.f32 0.0, %v1153
        %v1155 = vpop.f32.mrb[0].mxu0
        %v1156 = vadd.f32 0.0, %v1155
        %1157 = vmatprep.mubr.f32.mxu0 0.0
        %1158 = vmatmul.mubr.f32.gmra.mrb[0].mxu0 %v385
        %v1159 = vpop.f32.mrb[0].mxu0
        %v1160 = vadd.f32 0.0, %v1159
        %v1161 = vpop.f32.mrb[0].mxu0
        %v1162 = vadd.f32 0.0, %v1161
        %1163 = vmatprep.mubr.f32.mxu0 0.0
        %1164 = vmatmul.mubr.f32.gmra.mrb[0].mxu0 %v388
        %v1165 = vpop.f32.mrb[0].mxu0
        %v1166 = vadd.f32 0.0, %v1165
        %v1167 = vpop.f32.mrb[0].mxu0
        %v1168 = vadd.f32 0.0, %v1167
        %1169 = vmatprep.mubr.f32.mxu0 0.0
        %1170 = vmatmul.mubr.f32.gmra.mrb[0].mxu0 %v391
        %v1171 = vpop.f32.mrb[0].mxu0
        %v1172 = vadd.f32 0.0, %v1171
        %v1173 = vpop.f32.mrb[0].mxu0
        %v1174 = vadd.f32 0.0, %v1173
        %1175 = vmatprep.mubr.f32.mxu0 0.0
        %1176 = vmatmul.mubr.f32.gmra.mrb[0].mxu0 %v394
        %v1177 = vpop.f32.mrb[0].mxu0
        %v1178 = vadd.f32 0.0, %v1177
        %v1179 = vpop.f32.mrb[0].mxu0
        %v1180 = vadd.f32 0.0, %v1179
        %1181 = vmatprep.mubr.f32.mxu0 0.0
        %1182 = vmatmul.mubr.f32.gmra.mrb[0].mxu0 %v397
        %v1183 = vpop.f32.mrb[0].mxu0
        %v1184 = vadd.f32 0.0, %v1183
        %v1185 = vpop.f32.mrb[0].mxu0
        %v1186 = vadd.f32 0.0, %v1185
        %1187 = vmatprep.mubr.f32.mxu0 0.0
        %1188 = vmatmul.mubr.f32.gmra.mrb[0].mxu0 %v400
        %v1189 = vpop.f32.mrb[0].mxu0
        %v1190 = vadd.f32 0.0, %v1189
        %v1191 = vpop.f32.mrb[0].mxu0
        %v1192 = vadd.f32 0.0, %v1191
        %1193 = vmatprep.mubr.f32.mxu0 0.0
        %1194 = vmatmul.mubr.f32.gmra.mrb[0].mxu0 %v403
        %v1195 = vpop.f32.mrb[0].mxu0
        %v1196 = vadd.f32 0.0, %v1195
        %v1197 = vpop.f32.mrb[0].mxu0
        %v1198 = vadd.f32 0.0, %v1197
        %1199 = vmatprep.mubr.f32.mxu0 0.0
        %1200 = vmatmul.mubr.f32.gmra.mrb[0].mxu0 %v406
        %v1201 = vpop.f32.mrb[0].mxu0
        %v1202 = vadd.f32 0.0, %v1201
        %v1203 = vpop.f32.mrb[0].mxu0
        %v1204 = vadd.f32 0.0, %v1203
        %1205 = vmatprep.mubr.f32.mxu0 0.0
        %1206 = vmatmul.mubr.f32.gmra.mrb[0].mxu0 %v409
        %v1207 = vpop.f32.mrb[0].mxu0
        %v1208 = vadd.f32 0.0, %v1207
        %v1209 = vpop.f32.mrb[0].mxu0
        %v1210 = vadd.f32 0.0, %v1209
        %1211 = vmatprep.mubr.f32.mxu0 0.0
        %1212 = vmatmul.mubr.f32.gmra.mrb[0].mxu0 %v412
        %v1213 = vpop.f32.mrb[0].mxu0
        %v1214 = vadd.f32 0.0, %v1213
        %v1215 = vpop.f32.mrb[0].mxu0
        %v1216 = vadd.f32 0.0, %v1215
        %1217 = vmatprep.mubr.f32.mxu0 0.0
        %1218 = vmatmul.mubr.f32.gmra.mrb[0].mxu0 %v415
        %v1219 = vpop.f32.mrb[0].mxu0
        %v1220 = vadd.f32 0.0, %v1219
        %v1221 = vpop.f32.mrb[0].mxu0
        %v1222 = vadd.f32 0.0, %v1221
        %1223 = vmatprep.mubr.f32.mxu0 0.0
        %1224 = vmatmul.mubr.f32.gmra.mrb[0].mxu0 %v418
        %v1225 = vpop.f32.mrb[0].mxu0
        %v1226 = vadd.f32 0.0, %v1225
        %v1227 = vpop.f32.mrb[0].mxu0
        %v1228 = vadd.f32 0.0, %v1227
        %1229 = vmatprep.mubr.f32.mxu0 0.0
        %1230 = vmatmul.mubr.f32.gmra.mrb[0].mxu0 %v421
        %v1231 = vpop.f32.mrb[0].mxu0
        %v1232 = vadd.f32 0.0, %v1231
        %v1233 = vpop.f32.mrb[0].mxu0
        %v1234 = vadd.f32 0.0, %v1233
        %1235 = vmatprep.mubr.f32.mxu0 0.0
        %1236 = vmatmul.mubr.f32.gmra.mrb[0].mxu0 %v424
        %v1237 = vpop.f32.mrb[0].mxu0
        %v1238 = vadd.f32 0.0, %v1237
        %v1239 = vpop.f32.mrb[0].mxu0
        %v1240 = vadd.f32 0.0, %v1239
        %1241 = vmatprep.mubr.f32.mxu0 0.0
        %1242 = vmatmul.mubr.f32.gmra.mrb[0].mxu0 %v427
        %v1243 = vpop.f32.mrb[0].mxu0
        %v1244 = vadd.f32 0.0, %v1243
        %v1245 = vpop.f32.mrb[0].mxu0
        %v1246 = vadd.f32 0.0, %v1245
        %1247 = vmatprep.mubr.f32.mxu0 0.0
        %1248 = vmatmul.mubr.f32.gmra.mrb[0].mxu0 %v430
        %v1249 = vpop.f32.mrb[0].mxu0
        %v1250 = vadd.f32 0.0, %v1249
        %v1251 = vpop.f32.mrb[0].mxu0
        %v1252 = vadd.f32 0.0, %v1251
        %1253 = vmatprep.mubr.f32.mxu0 0.0
        %1254 = vmatmul.mubr.f32.gmra.mrb[0].mxu0 %v433
        %v1255 = vpop.f32.mrb[0].mxu0
        %v1256 = vadd.f32 0.0, %v1255
        %v1257 = vpop.f32.mrb[0].mxu0
        %v1258 = vadd.f32 0.0, %v1257
        %1259 = vmatprep.mubr.f32.mxu0 0.0
        %1260 = vmatmul.mubr.f32.gmra.mrb[0].mxu0 %v436
        %v1261 = vpop.f32.mrb[0].mxu0
        %v1262 = vadd.f32 0.0, %v1261
        %v1263 = vpop.f32.mrb[0].mxu0
        %v1264 = vadd.f32 0.0, %v1263
        %1265 = vmatprep.mubr.f32.mxu0 0.0
        %1266 = vmatmul.mubr.f32.gmra.mrb[0].mxu0 %v439
        %v1267 = vpop.f32.mrb[0].mxu0
        %v1268 = vadd.f32 0.0, %v1267
        %v1269 = vpop.f32.mrb[0].mxu0
        %v1270 = vadd.f32 0.0, %v1269
        %1271 = vdwg.mxu0
        %1272 = vmatprep.subr.mxu0 %v452
        %1273 = vmatpush1.msra.mxu0 %v450
        %1274 = vmatprep.subr.mxu0 0.0
        %1275 = vmatpush1.msra.mxu0 0.0
        %1276 = vmatprep.subr.mxu0 0.0
        %1277 = vmatpush1.msra.mxu0 0.0
        %1278 = vmatprep.subr.mxu0 0.0
        %1279 = vmatpush1.msra.mxu0 0.0
        %1280 = vmatprep.subr.mxu0 0.0
        %1281 = vmatpush1.msra.mxu0 0.0
        %1282 = vmatprep.subr.mxu0 0.0
        %1283 = vmatpush1.msra.mxu0 0.0
        %1284 = vmatprep.subr.mxu0 0.0
        %1285 = vmatpush1.msra.mxu0 0.0
        %1286 = vmatprep.subr.mxu0 0.0
        %1287 = vmatpush1.msra.mxu0 0.0
        %1288 = vmatprep.subr.mxu0 0.0
        %1289 = vmatpush1.msra.mxu0 0.0
        %1290 = vmatprep.subr.mxu0 0.0
        %1291 = vmatpush1.msra.mxu0 0.0
        %1292 = vmatprep.subr.mxu0 0.0
        %1293 = vmatpush1.msra.mxu0 0.0
        %1294 = vmatprep.subr.mxu0 0.0
        %1295 = vmatpush1.msra.mxu0 0.0
        %1296 = vmatprep.subr.mxu0 0.0
        %1297 = vmatpush1.msra.mxu0 0.0
        %1298 = vmatprep.subr.mxu0 0.0
        %1299 = vmatpush1.msra.mxu0 0.0
        %1300 = vmatprep.subr.mxu0 0.0
        %1301 = vmatpush1.msra.mxu0 0.0
        %1302 = vmatprep.subr.mxu0 0.0
        %1303 = vmatpush1.msra.mxu0 0.0
        %1304 = vmatprep.subr.mxu0 0.0
        %1305 = vmatpush1.msra.mxu0 0.0
        %1306 = vmatprep.subr.mxu0 0.0
        %1307 = vmatpush1.msra.mxu0 0.0
        %1308 = vmatprep.subr.mxu0 0.0
        %1309 = vmatpush1.msra.mxu0 0.0
        %1310 = vmatprep.subr.mxu0 0.0
        %1311 = vmatpush1.msra.mxu0 0.0
        %1312 = vmatprep.subr.mxu0 0.0
        %1313 = vmatpush1.msra.mxu0 0.0
        %1314 = vmatprep.subr.mxu0 0.0
        %1315 = vmatpush1.msra.mxu0 0.0
        %1316 = vmatprep.subr.mxu0 0.0
        %1317 = vmatpush1.msra.mxu0 0.0
        %1318 = vmatprep.subr.mxu0 0.0
        %1319 = vmatpush1.msra.mxu0 0.0
        %1320 = vmatprep.subr.mxu0 0.0
        %1321 = vmatpush1.msra.mxu0 0.0
        %1322 = vmatprep.subr.mxu0 0.0
        %1323 = vmatpush1.msra.mxu0 0.0
        %1324 = vmatprep.subr.mxu0 0.0
        %1325 = vmatpush1.msra.mxu0 0.0
        %1326 = vmatprep.subr.mxu0 0.0
        %1327 = vmatpush1.msra.mxu0 0.0
        %1328 = vmatprep.subr.mxu0 0.0
        %1329 = vmatpush1.msra.mxu0 0.0
        %1330 = vmatprep.subr.mxu0 0.0
        %1331 = vmatpush1.msra.mxu0 0.0
        %1332 = vmatprep.subr.mxu0 0.0
        %1333 = vmatpush1.msra.mxu0 0.0
        %1334 = vmatprep.subr.mxu0 0.0
        %1335 = vmatpush1.msra.mxu0 0.0
        %1336 = vmatprep.mubr.f32.mxu0 0.0
        %1337 = vmatmul.mubr.f32.gmra.mrb[0].mxu0 %v271
        %v1338 = vpop.f32.mrb[0].mxu0
        %v1339 = vadd.f32 0.0, %v1338
        %v1340 = vpop.f32.mrb[0].mxu0
        %v1341 = vadd.f32 0.0, %v1340
        %1342 = vmatprep.mubr.f32.mxu0 0.0
        %1343 = vmatmul.mubr.f32.gmra.mrb[0].mxu0 %v274
        %v1344 = vpop.f32.mrb[0].mxu0
        %v1345 = vadd.f32 0.0, %v1344
        %v1346 = vpop.f32.mrb[0].mxu0
        %v1347 = vadd.f32 0.0, %v1346
        %1348 = vmatprep.mubr.f32.mxu0 0.0
        %1349 = vmatmul.mubr.f32.gmra.mrb[0].mxu0 %v277
        %v1350 = vpop.f32.mrb[0].mxu0
        %v1351 = vadd.f32 0.0, %v1350
        %v1352 = vpop.f32.mrb[0].mxu0
        %v1353 = vadd.f32 0.0, %v1352
        %1354 = vmatprep.mubr.f32.mxu0 0.0
        %1355 = vmatmul.mubr.f32.gmra.mrb[0].mxu0 %v280
        %v1356 = vpop.f32.mrb[0].mxu0
        %v1357 = vadd.f32 0.0, %v1356
        %v1358 = vpop.f32.mrb[0].mxu0
        %v1359 = vadd.f32 0.0, %v1358
        %1360 = vmatprep.mubr.f32.mxu0 0.0
        %1361 = vmatmul.mubr.f32.gmra.mrb[0].mxu0 %v283
        %v1362 = vpop.f32.mrb[0].mxu0
        %v1363 = vadd.f32 0.0, %v1362
        %v1364 = vpop.f32.mrb[0].mxu0
        %v1365 = vadd.f32 0.0, %v1364
        %1366 = vmatprep.mubr.f32.mxu0 0.0
        %1367 = vmatmul.mubr.f32.gmra.mrb[0].mxu0 %v286
        %v1368 = vpop.f32.mrb[0].mxu0
        %v1369 = vadd.f32 0.0, %v1368
        %v1370 = vpop.f32.mrb[0].mxu0
        %v1371 = vadd.f32 0.0, %v1370
        %1372 = vmatprep.mubr.f32.mxu0 0.0
        %1373 = vmatmul.mubr.f32.gmra.mrb[0].mxu0 %v289
        %v1374 = vpop.f32.mrb[0].mxu0
        %v1375 = vadd.f32 0.0, %v1374
        %v1376 = vpop.f32.mrb[0].mxu0
        %v1377 = vadd.f32 0.0, %v1376
        %1378 = vmatprep.mubr.f32.mxu0 0.0
        %1379 = vmatmul.mubr.f32.gmra.mrb[0].mxu0 %v292
        %v1380 = vpop.f32.mrb[0].mxu0
        %v1381 = vadd.f32 0.0, %v1380
        %v1382 = vpop.f32.mrb[0].mxu0
        %v1383 = vadd.f32 0.0, %v1382
        %1384 = vmatprep.mubr.f32.mxu0 0.0
        %1385 = vmatmul.mubr.f32.gmra.mrb[0].mxu0 %v295
        %v1386 = vpop.f32.mrb[0].mxu0
        %v1387 = vadd.f32 0.0, %v1386
        %v1388 = vpop.f32.mrb[0].mxu0
        %v1389 = vadd.f32 0.0, %v1388
        %1390 = vmatprep.mubr.f32.mxu0 0.0
        %1391 = vmatmul.mubr.f32.gmra.mrb[0].mxu0 %v298
        %v1392 = vpop.f32.mrb[0].mxu0
        %v1393 = vadd.f32 0.0, %v1392
        %v1394 = vpop.f32.mrb[0].mxu0
        %v1395 = vadd.f32 0.0, %v1394
        %1396 = vmatprep.mubr.f32.mxu0 0.0
        %1397 = vmatmul.mubr.f32.gmra.mrb[0].mxu0 %v301
        %v1398 = vpop.f32.mrb[0].mxu0
        %v1399 = vadd.f32 0.0, %v1398
        %v1400 = vpop.f32.mrb[0].mxu0
        %v1401 = vadd.f32 0.0, %v1400
        %1402 = vmatprep.mubr.f32.mxu0 0.0
        %1403 = vmatmul.mubr.f32.gmra.mrb[0].mxu0 %v304
        %v1404 = vpop.f32.mrb[0].mxu0
        %v1405 = vadd.f32 0.0, %v1404
        %v1406 = vpop.f32.mrb[0].mxu0
        %v1407 = vadd.f32 0.0, %v1406
        %1408 = vmatprep.mubr.f32.mxu0 0.0
        %1409 = vmatmul.mubr.f32.gmra.mrb[0].mxu0 %v307
        %v1410 = vpop.f32.mrb[0].mxu0
        %v1411 = vadd.f32 0.0, %v1410
        %v1412 = vpop.f32.mrb[0].mxu0
        %v1413 = vadd.f32 0.0, %v1412
        %1414 = vmatprep.mubr.f32.mxu0 0.0
        %1415 = vmatmul.mubr.f32.gmra.mrb[0].mxu0 %v310
        %v1416 = vpop.f32.mrb[0].mxu0
        %v1417 = vadd.f32 0.0, %v1416
        %v1418 = vpop.f32.mrb[0].mxu0
        %v1419 = vadd.f32 0.0, %v1418
        %1420 = vmatprep.mubr.f32.mxu0 0.0
        %1421 = vmatmul.mubr.f32.gmra.mrb[0].mxu0 %v313
        %v1422 = vpop.f32.mrb[0].mxu0
        %v1423 = vadd.f32 0.0, %v1422
        %v1424 = vpop.f32.mrb[0].mxu0
        %v1425 = vadd.f32 0.0, %v1424
        %1426 = vmatprep.mubr.f32.mxu0 0.0
        %1427 = vmatmul.mubr.f32.gmra.mrb[0].mxu0 %v316
        %v1428 = vpop.f32.mrb[0].mxu0
        %v1429 = vadd.f32 0.0, %v1428
        %v1430 = vpop.f32.mrb[0].mxu0
        %v1431 = vadd.f32 0.0, %v1430
        %1432 = vmatprep.mubr.f32.mxu0 0.0
        %1433 = vmatmul.mubr.f32.gmra.mrb[0].mxu0 %v319
        %v1434 = vpop.f32.mrb[0].mxu0
        %v1435 = vadd.f32 0.0, %v1434
        %v1436 = vpop.f32.mrb[0].mxu0
        %v1437 = vadd.f32 0.0, %v1436
        %1438 = vmatprep.mubr.f32.mxu0 0.0
        %1439 = vmatmul.mubr.f32.gmra.mrb[0].mxu0 %v322
        %v1440 = vpop.f32.mrb[0].mxu0
        %v1441 = vadd.f32 0.0, %v1440
        %v1442 = vpop.f32.mrb[0].mxu0
        %v1443 = vadd.f32 0.0, %v1442
        %1444 = vmatprep.mubr.f32.mxu0 0.0
        %1445 = vmatmul.mubr.f32.gmra.mrb[0].mxu0 %v325
        %v1446 = vpop.f32.mrb[0].mxu0
        %v1447 = vadd.f32 0.0, %v1446
        %v1448 = vpop.f32.mrb[0].mxu0
        %v1449 = vadd.f32 0.0, %v1448
        %1450 = vmatprep.mubr.f32.mxu0 0.0
        %1451 = vmatmul.mubr.f32.gmra.mrb[0].mxu0 %v328
        %v1452 = vpop.f32.mrb[0].mxu0
        %v1453 = vadd.f32 0.0, %v1452
        %v1454 = vpop.f32.mrb[0].mxu0
        %v1455 = vadd.f32 0.0, %v1454
        %1456 = vmatprep.mubr.f32.mxu0 0.0
        %1457 = vmatmul.mubr.f32.gmra.mrb[0].mxu0 %v331
        %v1458 = vpop.f32.mrb[0].mxu0
        %v1459 = vadd.f32 0.0, %v1458
        %v1460 = vpop.f32.mrb[0].mxu0
        %v1461 = vadd.f32 0.0, %v1460
        %1462 = vmatprep.mubr.f32.mxu0 0.0
        %1463 = vmatmul.mubr.f32.gmra.mrb[0].mxu0 %v334
        %v1464 = vpop.f32.mrb[0].mxu0
        %v1465 = vadd.f32 0.0, %v1464
        %v1466 = vpop.f32.mrb[0].mxu0
        %v1467 = vadd.f32 0.0, %v1466
        %1468 = vmatprep.mubr.f32.mxu0 0.0
        %1469 = vmatmul.mubr.f32.gmra.mrb[0].mxu0 %v337
        %v1470 = vpop.f32.mrb[0].mxu0
        %v1471 = vadd.f32 0.0, %v1470
        %v1472 = vpop.f32.mrb[0].mxu0
        %v1473 = vadd.f32 0.0, %v1472
        %1474 = vmatprep.mubr.f32.mxu0 0.0
        %1475 = vmatmul.mubr.f32.gmra.mrb[0].mxu0 %v340
        %v1476 = vpop.f32.mrb[0].mxu0
        %v1477 = vadd.f32 0.0, %v1476
        %v1478 = vpop.f32.mrb[0].mxu0
        %v1479 = vadd.f32 0.0, %v1478
        %1480 = vmatprep.mubr.f32.mxu0 0.0
        %1481 = vmatmul.mubr.f32.gmra.mrb[0].mxu0 %v343
        %v1482 = vpop.f32.mrb[0].mxu0
        %v1483 = vadd.f32 0.0, %v1482
        %v1484 = vpop.f32.mrb[0].mxu0
        %v1485 = vadd.f32 0.0, %v1484
        %1486 = vmatprep.mubr.f32.mxu0 0.0
        %1487 = vmatmul.mubr.f32.gmra.mrb[0].mxu0 %v346
        %v1488 = vpop.f32.mrb[0].mxu0
        %v1489 = vadd.f32 0.0, %v1488
        %v1490 = vpop.f32.mrb[0].mxu0
        %v1491 = vadd.f32 0.0, %v1490
        %1492 = vmatprep.mubr.f32.mxu0 0.0
        %1493 = vmatmul.mubr.f32.gmra.mrb[0].mxu0 %v349
        %v1494 = vpop.f32.mrb[0].mxu0
        %v1495 = vadd.f32 0.0, %v1494
        %v1496 = vpop.f32.mrb[0].mxu0
        %v1497 = vadd.f32 0.0, %v1496
        %1498 = vmatprep.mubr.f32.mxu0 0.0
        %1499 = vmatmul.mubr.f32.gmra.mrb[0].mxu0 %v352
        %v1500 = vpop.f32.mrb[0].mxu0
        %v1501 = vadd.f32 0.0, %v1500
        %v1502 = vpop.f32.mrb[0].mxu0
        %v1503 = vadd.f32 0.0, %v1502
        %1504 = vmatprep.mubr.f32.mxu0 0.0
        %1505 = vmatmul.mubr.f32.gmra.mrb[0].mxu0 %v355
        %v1506 = vpop.f32.mrb[0].mxu0
        %v1507 = vadd.f32 0.0, %v1506
        %v1508 = vpop.f32.mrb[0].mxu0
        %v1509 = vadd.f32 0.0, %v1508
        %1510 = vmatprep.mubr.f32.mxu0 0.0
        %1511 = vmatmul.mubr.f32.gmra.mrb[0].mxu0 %v358
        %v1512 = vpop.f32.mrb[0].mxu0
        %v1513 = vadd.f32 0.0, %v1512
        %v1514 = vpop.f32.mrb[0].mxu0
        %v1515 = vadd.f32 0.0, %v1514
        %1516 = vmatprep.mubr.f32.mxu0 0.0
        %1517 = vmatmul.mubr.f32.gmra.mrb[0].mxu0 %v361
        %v1518 = vpop.f32.mrb[0].mxu0
        %v1519 = vadd.f32 0.0, %v1518
        %v1520 = vpop.f32.mrb[0].mxu0
        %v1521 = vadd.f32 0.0, %v1520
        %1522 = vmatprep.mubr.f32.mxu0 0.0
        %1523 = vmatmul.mubr.f32.gmra.mrb[0].mxu0 %v364
        %v1524 = vpop.f32.mrb[0].mxu0
        %v1525 = vadd.f32 0.0, %v1524
        %v1526 = vpop.f32.mrb[0].mxu0
        %v1527 = vadd.f32 0.0, %v1526
        %1528 = vmatprep.mubr.f32.mxu0 0.0
        %1529 = vmatmul.mubr.f32.gmra.mrb[0].mxu0 %v367
        %v1530 = vpop.f32.mrb[0].mxu0
        %v1531 = vadd.f32 0.0, %v1530
        %v1532 = vpop.f32.mrb[0].mxu0
        %v1533 = vadd.f32 0.0, %v1532
        %1534 = vmatprep.mubr.f32.mxu0 0.0
        %1535 = vmatmul.mubr.f32.gmra.mrb[0].mxu0 %v370
        %v1536 = vpop.f32.mrb[0].mxu0
        %v1537 = vadd.f32 0.0, %v1536
        %v1538 = vpop.f32.mrb[0].mxu0
        %v1539 = vadd.f32 0.0, %v1538
        %1540 = vmatprep.mubr.f32.mxu0 0.0
        %1541 = vmatmul.mubr.f32.gmra.mrb[0].mxu0 %v373
        %v1542 = vpop.f32.mrb[0].mxu0
        %v1543 = vadd.f32 0.0, %v1542
        %v1544 = vpop.f32.mrb[0].mxu0
        %v1545 = vadd.f32 0.0, %v1544
        %1546 = vmatprep.mubr.f32.mxu0 0.0
        %1547 = vmatmul.mubr.f32.gmra.mrb[0].mxu0 %v376
        %v1548 = vpop.f32.mrb[0].mxu0
        %v1549 = vadd.f32 0.0, %v1548
        %v1550 = vpop.f32.mrb[0].mxu0
        %v1551 = vadd.f32 0.0, %v1550
        %1552 = vmatprep.mubr.f32.mxu0 0.0
        %1553 = vmatmul.mubr.f32.gmra.mrb[0].mxu0 %v379
        %v1554 = vpop.f32.mrb[0].mxu0
        %v1555 = vadd.f32 0.0, %v1554
        %v1556 = vpop.f32.mrb[0].mxu0
        %v1557 = vadd.f32 0.0, %v1556
        %1558 = vmatprep.mubr.f32.mxu0 0.0
        %1559 = vmatmul.mubr.f32.gmra.mrb[0].mxu0 %v382
        %v1560 = vpop.f32.mrb[0].mxu0
        %v1561 = vadd.f32 0.0, %v1560
        %v1562 = vpop.f32.mrb[0].mxu0
        %v1563 = vadd.f32 0.0, %v1562
        %1564 = vmatprep.mubr.f32.mxu0 0.0
        %1565 = vmatmul.mubr.f32.gmra.mrb[0].mxu0 %v385
        %v1566 = vpop.f32.mrb[0].mxu0
        %v1567 = vadd.f32 0.0, %v1566
        %v1568 = vpop.f32.mrb[0].mxu0
        %v1569 = vadd.f32 0.0, %v1568
        %1570 = vmatprep.mubr.f32.mxu0 0.0
        %1571 = vmatmul.mubr.f32.gmra.mrb[0].mxu0 %v388
        %v1572 = vpop.f32.mrb[0].mxu0
        %v1573 = vadd.f32 0.0, %v1572
        %v1574 = vpop.f32.mrb[0].mxu0
        %v1575 = vadd.f32 0.0, %v1574
        %1576 = vmatprep.mubr.f32.mxu0 0.0
        %1577 = vmatmul.mubr.f32.gmra.mrb[0].mxu0 %v391
        %v1578 = vpop.f32.mrb[0].mxu0
        %v1579 = vadd.f32 0.0, %v1578
        %v1580 = vpop.f32.mrb[0].mxu0
        %v1581 = vadd.f32 0.0, %v1580
        %1582 = vmatprep.mubr.f32.mxu0 0.0
        %1583 = vmatmul.mubr.f32.gmra.mrb[0].mxu0 %v394
        %v1584 = vpop.f32.mrb[0].mxu0
        %v1585 = vadd.f32 0.0, %v1584
        %v1586 = vpop.f32.mrb[0].mxu0
        %v1587 = vadd.f32 0.0, %v1586
        %1588 = vmatprep.mubr.f32.mxu0 0.0
        %1589 = vmatmul.mubr.f32.gmra.mrb[0].mxu0 %v397
        %v1590 = vpop.f32.mrb[0].mxu0
        %v1591 = vadd.f32 0.0, %v1590
        %v1592 = vpop.f32.mrb[0].mxu0
        %v1593 = vadd.f32 0.0, %v1592
        %1594 = vmatprep.mubr.f32.mxu0 0.0
        %1595 = vmatmul.mubr.f32.gmra.mrb[0].mxu0 %v400
        %v1596 = vpop.f32.mrb[0].mxu0
        %v1597 = vadd.f32 0.0, %v1596
        %v1598 = vpop.f32.mrb[0].mxu0
        %v1599 = vadd.f32 0.0, %v1598
        %1600 = vmatprep.mubr.f32.mxu0 0.0
        %1601 = vmatmul.mubr.f32.gmra.mrb[0].mxu0 %v403
        %v1602 = vpop.f32.mrb[0].mxu0
        %v1603 = vadd.f32 0.0, %v1602
        %v1604 = vpop.f32.mrb[0].mxu0
        %v1605 = vadd.f32 0.0, %v1604
        %1606 = vmatprep.mubr.f32.mxu0 0.0
        %1607 = vmatmul.mubr.f32.gmra.mrb[0].mxu0 %v406
        %v1608 = vpop.f32.mrb[0].mxu0
        %v1609 = vadd.f32 0.0, %v1608
        %v1610 = vpop.f32.mrb[0].mxu0
        %v1611 = vadd.f32 0.0, %v1610
        %1612 = vmatprep.mubr.f32.mxu0 0.0
        %1613 = vmatmul.mubr.f32.gmra.mrb[0].mxu0 %v409
        %v1614 = vpop.f32.mrb[0].mxu0
        %v1615 = vadd.f32 0.0, %v1614
        %v1616 = vpop.f32.mrb[0].mxu0
        %v1617 = vadd.f32 0.0, %v1616
        %1618 = vmatprep.mubr.f32.mxu0 0.0
        %1619 = vmatmul.mubr.f32.gmra.mrb[0].mxu0 %v412
        %v1620 = vpop.f32.mrb[0].mxu0
        %v1621 = vadd.f32 0.0, %v1620
        %v1622 = vpop.f32.mrb[0].mxu0
        %v1623 = vadd.f32 0.0, %v1622
        %1624 = vmatprep.mubr.f32.mxu0 0.0
        %1625 = vmatmul.mubr.f32.gmra.mrb[0].mxu0 %v415
        %v1626 = vpop.f32.mrb[0].mxu0
        %v1627 = vadd.f32 0.0, %v1626
        %v1628 = vpop.f32.mrb[0].mxu0
        %v1629 = vadd.f32 0.0, %v1628
        %1630 = vmatprep.mubr.f32.mxu0 0.0
        %1631 = vmatmul.mubr.f32.gmra.mrb[0].mxu0 %v418
        %v1632 = vpop.f32.mrb[0].mxu0
        %v1633 = vadd.f32 0.0, %v1632
        %v1634 = vpop.f32.mrb[0].mxu0
        %v1635 = vadd.f32 0.0, %v1634
        %1636 = vmatprep.mubr.f32.mxu0 0.0
        %1637 = vmatmul.mubr.f32.gmra.mrb[0].mxu0 %v421
        %v1638 = vpop.f32.mrb[0].mxu0
        %v1639 = vadd.f32 0.0, %v1638
        %v1640 = vpop.f32.mrb[0].mxu0
        %v1641 = vadd.f32 0.0, %v1640
        %1642 = vmatprep.mubr.f32.mxu0 0.0
        %1643 = vmatmul.mubr.f32.gmra.mrb[0].mxu0 %v424
        %v1644 = vpop.f32.mrb[0].mxu0
        %v1645 = vadd.f32 0.0, %v1644
        %v1646 = vpop.f32.mrb[0].mxu0
        %v1647 = vadd.f32 0.0, %v1646
        %1648 = vmatprep.mubr.f32.mxu0 0.0
        %1649 = vmatmul.mubr.f32.gmra.mrb[0].mxu0 %v427
        %v1650 = vpop.f32.mrb[0].mxu0
        %v1651 = vadd.f32 0.0, %v1650
        %v1652 = vpop.f32.mrb[0].mxu0
        %v1653 = vadd.f32 0.0, %v1652
        %1654 = vmatprep.mubr.f32.mxu0 0.0
        %1655 = vmatmul.mubr.f32.gmra.mrb[0].mxu0 %v430
        %v1656 = vpop.f32.mrb[0].mxu0
        %v1657 = vadd.f32 0.0, %v1656
        %v1658 = vpop.f32.mrb[0].mxu0
        %v1659 = vadd.f32 0.0, %v1658
        %1660 = vmatprep.mubr.f32.mxu0 0.0
        %1661 = vmatmul.mubr.f32.gmra.mrb[0].mxu0 %v433
        %v1662 = vpop.f32.mrb[0].mxu0
        %v1663 = vadd.f32 0.0, %v1662
        %v1664 = vpop.f32.mrb[0].mxu0
        %v1665 = vadd.f32 0.0, %v1664
        %1666 = vmatprep.mubr.f32.mxu0 0.0
        %1667 = vmatmul.mubr.f32.gmra.mrb[0].mxu0 %v436
        %v1668 = vpop.f32.mrb[0].mxu0
        %v1669 = vadd.f32 0.0, %v1668
        %v1670 = vpop.f32.mrb[0].mxu0
        %v1671 = vadd.f32 0.0, %v1670
        %1672 = vmatprep.mubr.f32.mxu0 0.0
        %1673 = vmatmul.mubr.f32.gmra.mrb[0].mxu0 %v439
        %v1674 = vpop.f32.mrb[0].mxu0
        %v1675 = vadd.f32 0.0, %v1674
        %v1676 = vpop.f32.mrb[0].mxu0
        %v1677 = vadd.f32 0.0, %v1676
        %1678 = vdwg.mxu0
        %1679 = vmatprep.subr.mxu0 %v456
        %1680 = vmatpush1.msra.mxu0 %v454
        %1681 = vmatprep.subr.mxu0 0.0
        %1682 = vmatpush1.msra.mxu0 0.0
        %1683 = vmatprep.subr.mxu0 0.0
        %1684 = vmatpush1.msra.mxu0 0.0
        %1685 = vmatprep.subr.mxu0 0.0
        %1686 = vmatpush1.msra.mxu0 0.0
        %1687 = vmatprep.subr.mxu0 0.0
        %1688 = vmatpush1.msra.mxu0 0.0
        %1689 = vmatprep.subr.mxu0 0.0
        %1690 = vmatpush1.msra.mxu0 0.0
        %1691 = vmatprep.subr.mxu0 0.0
        %1692 = vmatpush1.msra.mxu0 0.0
        %1693 = vmatprep.subr.mxu0 0.0
        %1694 = vmatpush1.msra.mxu0 0.0
        %1695 = vmatprep.subr.mxu0 0.0
        %1696 = vmatpush1.msra.mxu0 0.0
        %1697 = vmatprep.subr.mxu0 0.0
        %1698 = vmatpush1.msra.mxu0 0.0
        %1699 = vmatprep.subr.mxu0 0.0
        %1700 = vmatpush1.msra.mxu0 0.0
        %1701 = vmatprep.subr.mxu0 0.0
        %1702 = vmatpush1.msra.mxu0 0.0
        %1703 = vmatprep.subr.mxu0 0.0
        %1704 = vmatpush1.msra.mxu0 0.0
        %1705 = vmatprep.subr.mxu0 0.0
        %1706 = vmatpush1.msra.mxu0 0.0
        %1707 = vmatprep.subr.mxu0 0.0
        %1708 = vmatpush1.msra.mxu0 0.0
        %1709 = vmatprep.subr.mxu0 0.0
        %1710 = vmatpush1.msra.mxu0 0.0
        %1711 = vmatprep.subr.mxu0 0.0
        %1712 = vmatpush1.msra.mxu0 0.0
        %1713 = vmatprep.subr.mxu0 0.0
        %1714 = vmatpush1.msra.mxu0 0.0
        %1715 = vmatprep.subr.mxu0 0.0
        %1716 = vmatpush1.msra.mxu0 0.0
        %1717 = vmatprep.subr.mxu0 0.0
        %1718 = vmatpush1.msra.mxu0 0.0
        %1719 = vmatprep.subr.mxu0 0.0
        %1720 = vmatpush1.msra.mxu0 0.0
        %1721 = vmatprep.subr.mxu0 0.0
        %1722 = vmatpush1.msra.mxu0 0.0
        %1723 = vmatprep.subr.mxu0 0.0
        %1724 = vmatpush1.msra.mxu0 0.0
        %1725 = vmatprep.subr.mxu0 0.0
        %1726 = vmatpush1.msra.mxu0 0.0
        %1727 = vmatprep.subr.mxu0 0.0
        %1728 = vmatpush1.msra.mxu0 0.0
        %1729 = vmatprep.subr.mxu0 0.0
        %1730 = vmatpush1.msra.mxu0 0.0
        %1731 = vmatprep.subr.mxu0 0.0
        %1732 = vmatpush1.msra.mxu0 0.0
        %1733 = vmatprep.subr.mxu0 0.0
        %1734 = vmatpush1.msra.mxu0 0.0
        %1735 = vmatprep.subr.mxu0 0.0
        %1736 = vmatpush1.msra.mxu0 0.0
        %1737 = vmatprep.subr.mxu0 0.0
        %1738 = vmatpush1.msra.mxu0 0.0
        %1739 = vmatprep.subr.mxu0 0.0
        %1740 = vmatpush1.msra.mxu0 0.0
        %1741 = vmatprep.subr.mxu0 0.0
        %1742 = vmatpush1.msra.mxu0 0.0
        %1743 = vmatprep.mubr.f32.mxu0 0.0
        %1744 = vmatmul.mubr.f32.gmra.mrb[0].mxu0 %v271
        %v1745 = vpop.f32.mrb[0].mxu0
        %v1746 = vadd.f32 0.0, %v1745
        %v1747 = vpop.f32.mrb[0].mxu0
        %v1748 = vadd.f32 0.0, %v1747
        %1749 = vmatprep.mubr.f32.mxu0 0.0
        %1750 = vmatmul.mubr.f32.gmra.mrb[0].mxu0 %v274
        %v1751 = vpop.f32.mrb[0].mxu0
        %v1752 = vadd.f32 0.0, %v1751
        %v1753 = vpop.f32.mrb[0].mxu0
        %v1754 = vadd.f32 0.0, %v1753
        %1755 = vmatprep.mubr.f32.mxu0 0.0
        %1756 = vmatmul.mubr.f32.gmra.mrb[0].mxu0 %v277
        %v1757 = vpop.f32.mrb[0].mxu0
        %v1758 = vadd.f32 0.0, %v1757
        %v1759 = vpop.f32.mrb[0].mxu0
        %v1760 = vadd.f32 0.0, %v1759
        %1761 = vmatprep.mubr.f32.mxu0 0.0
        %1762 = vmatmul.mubr.f32.gmra.mrb[0].mxu0 %v280
        %v1763 = vpop.f32.mrb[0].mxu0
        %v1764 = vadd.f32 0.0, %v1763
        %v1765 = vpop.f32.mrb[0].mxu0
        %v1766 = vadd.f32 0.0, %v1765
        %1767 = vmatprep.mubr.f32.mxu0 0.0
        %1768 = vmatmul.mubr.f32.gmra.mrb[0].mxu0 %v283
        %v1769 = vpop.f32.mrb[0].mxu0
        %v1770 = vadd.f32 0.0, %v1769
        %v1771 = vpop.f32.mrb[0].mxu0
        %v1772 = vadd.f32 0.0, %v1771
        %1773 = vmatprep.mubr.f32.mxu0 0.0
        %1774 = vmatmul.mubr.f32.gmra.mrb[0].mxu0 %v286
        %v1775 = vpop.f32.mrb[0].mxu0
        %v1776 = vadd.f32 0.0, %v1775
        %v1777 = vpop.f32.mrb[0].mxu0
        %v1778 = vadd.f32 0.0, %v1777
        %1779 = vmatprep.mubr.f32.mxu0 0.0
        %1780 = vmatmul.mubr.f32.gmra.mrb[0].mxu0 %v289
        %v1781 = vpop.f32.mrb[0].mxu0
        %v1782 = vadd.f32 0.0, %v1781
        %v1783 = vpop.f32.mrb[0].mxu0
        %v1784 = vadd.f32 0.0, %v1783
        %1785 = vmatprep.mubr.f32.mxu0 0.0
        %1786 = vmatmul.mubr.f32.gmra.mrb[0].mxu0 %v292
        %v1787 = vpop.f32.mrb[0].mxu0
        %v1788 = vadd.f32 0.0, %v1787
        %v1789 = vpop.f32.mrb[0].mxu0
        %v1790 = vadd.f32 0.0, %v1789
        %1791 = vmatprep.mubr.f32.mxu0 0.0
        %1792 = vmatmul.mubr.f32.gmra.mrb[0].mxu0 %v295
        %v1793 = vpop.f32.mrb[0].mxu0
        %v1794 = vadd.f32 0.0, %v1793
        %v1795 = vpop.f32.mrb[0].mxu0
        %v1796 = vadd.f32 0.0, %v1795
        %1797 = vmatprep.mubr.f32.mxu0 0.0
        %1798 = vmatmul.mubr.f32.gmra.mrb[0].mxu0 %v298
        %v1799 = vpop.f32.mrb[0].mxu0
        %v1800 = vadd.f32 0.0, %v1799
        %v1801 = vpop.f32.mrb[0].mxu0
        %v1802 = vadd.f32 0.0, %v1801
        %1803 = vmatprep.mubr.f32.mxu0 0.0
        %1804 = vmatmul.mubr.f32.gmra.mrb[0].mxu0 %v301
        %v1805 = vpop.f32.mrb[0].mxu0
        %v1806 = vadd.f32 0.0, %v1805
        %v1807 = vpop.f32.mrb[0].mxu0
        %v1808 = vadd.f32 0.0, %v1807
        %1809 = vmatprep.mubr.f32.mxu0 0.0
        %1810 = vmatmul.mubr.f32.gmra.mrb[0].mxu0 %v304
        %v1811 = vpop.f32.mrb[0].mxu0
        %v1812 = vadd.f32 0.0, %v1811
        %v1813 = vpop.f32.mrb[0].mxu0
        %v1814 = vadd.f32 0.0, %v1813
        %1815 = vmatprep.mubr.f32.mxu0 0.0
        %1816 = vmatmul.mubr.f32.gmra.mrb[0].mxu0 %v307
        %v1817 = vpop.f32.mrb[0].mxu0
        %v1818 = vadd.f32 0.0, %v1817
        %v1819 = vpop.f32.mrb[0].mxu0
        %v1820 = vadd.f32 0.0, %v1819
        %1821 = vmatprep.mubr.f32.mxu0 0.0
        %1822 = vmatmul.mubr.f32.gmra.mrb[0].mxu0 %v310
        %v1823 = vpop.f32.mrb[0].mxu0
        %v1824 = vadd.f32 0.0, %v1823
        %v1825 = vpop.f32.mrb[0].mxu0
        %v1826 = vadd.f32 0.0, %v1825
        %1827 = vmatprep.mubr.f32.mxu0 0.0
        %1828 = vmatmul.mubr.f32.gmra.mrb[0].mxu0 %v313
        %v1829 = vpop.f32.mrb[0].mxu0
        %v1830 = vadd.f32 0.0, %v1829
        %v1831 = vpop.f32.mrb[0].mxu0
        %v1832 = vadd.f32 0.0, %v1831
        %1833 = vmatprep.mubr.f32.mxu0 0.0
        %1834 = vmatmul.mubr.f32.gmra.mrb[0].mxu0 %v316
        %v1835 = vpop.f32.mrb[0].mxu0
        %v1836 = vadd.f32 0.0, %v1835
        %v1837 = vpop.f32.mrb[0].mxu0
        %v1838 = vadd.f32 0.0, %v1837
        %1839 = vmatprep.mubr.f32.mxu0 0.0
        %1840 = vmatmul.mubr.f32.gmra.mrb[0].mxu0 %v319
        %v1841 = vpop.f32.mrb[0].mxu0
        %v1842 = vadd.f32 0.0, %v1841
        %v1843 = vpop.f32.mrb[0].mxu0
        %v1844 = vadd.f32 0.0, %v1843
        %1845 = vmatprep.mubr.f32.mxu0 0.0
        %1846 = vmatmul.mubr.f32.gmra.mrb[0].mxu0 %v322
        %v1847 = vpop.f32.mrb[0].mxu0
        %v1848 = vadd.f32 0.0, %v1847
        %v1849 = vpop.f32.mrb[0].mxu0
        %v1850 = vadd.f32 0.0, %v1849
        %1851 = vmatprep.mubr.f32.mxu0 0.0
        %1852 = vmatmul.mubr.f32.gmra.mrb[0].mxu0 %v325
        %v1853 = vpop.f32.mrb[0].mxu0
        %v1854 = vadd.f32 0.0, %v1853
        %v1855 = vpop.f32.mrb[0].mxu0
        %v1856 = vadd.f32 0.0, %v1855
        %1857 = vmatprep.mubr.f32.mxu0 0.0
        %1858 = vmatmul.mubr.f32.gmra.mrb[0].mxu0 %v328
        %v1859 = vpop.f32.mrb[0].mxu0
        %v1860 = vadd.f32 0.0, %v1859
        %v1861 = vpop.f32.mrb[0].mxu0
        %v1862 = vadd.f32 0.0, %v1861
        %1863 = vmatprep.mubr.f32.mxu0 0.0
        %1864 = vmatmul.mubr.f32.gmra.mrb[0].mxu0 %v331
        %v1865 = vpop.f32.mrb[0].mxu0
        %v1866 = vadd.f32 0.0, %v1865
        %v1867 = vpop.f32.mrb[0].mxu0
        %v1868 = vadd.f32 0.0, %v1867
        %1869 = vmatprep.mubr.f32.mxu0 0.0
        %1870 = vmatmul.mubr.f32.gmra.mrb[0].mxu0 %v334
        %v1871 = vpop.f32.mrb[0].mxu0
        %v1872 = vadd.f32 0.0, %v1871
        %v1873 = vpop.f32.mrb[0].mxu0
        %v1874 = vadd.f32 0.0, %v1873
        %1875 = vmatprep.mubr.f32.mxu0 0.0
        %1876 = vmatmul.mubr.f32.gmra.mrb[0].mxu0 %v337
        %v1877 = vpop.f32.mrb[0].mxu0
        %v1878 = vadd.f32 0.0, %v1877
        %v1879 = vpop.f32.mrb[0].mxu0
        %v1880 = vadd.f32 0.0, %v1879
        %1881 = vmatprep.mubr.f32.mxu0 0.0
        %1882 = vmatmul.mubr.f32.gmra.mrb[0].mxu0 %v340
        %v1883 = vpop.f32.mrb[0].mxu0
        %v1884 = vadd.f32 0.0, %v1883
        %v1885 = vpop.f32.mrb[0].mxu0
        %v1886 = vadd.f32 0.0, %v1885
        %1887 = vmatprep.mubr.f32.mxu0 0.0
        %1888 = vmatmul.mubr.f32.gmra.mrb[0].mxu0 %v343
        %v1889 = vpop.f32.mrb[0].mxu0
        %v1890 = vadd.f32 0.0, %v1889
        %v1891 = vpop.f32.mrb[0].mxu0
        %v1892 = vadd.f32 0.0, %v1891
        %1893 = vmatprep.mubr.f32.mxu0 0.0
        %1894 = vmatmul.mubr.f32.gmra.mrb[0].mxu0 %v346
        %v1895 = vpop.f32.mrb[0].mxu0
        %v1896 = vadd.f32 0.0, %v1895
        %v1897 = vpop.f32.mrb[0].mxu0
        %v1898 = vadd.f32 0.0, %v1897
        %1899 = vmatprep.mubr.f32.mxu0 0.0
        %1900 = vmatmul.mubr.f32.gmra.mrb[0].mxu0 %v349
        %v1901 = vpop.f32.mrb[0].mxu0
        %v1902 = vadd.f32 0.0, %v1901
        %v1903 = vpop.f32.mrb[0].mxu0
        %v1904 = vadd.f32 0.0, %v1903
        %1905 = vmatprep.mubr.f32.mxu0 0.0
        %1906 = vmatmul.mubr.f32.gmra.mrb[0].mxu0 %v352
        %v1907 = vpop.f32.mrb[0].mxu0
        %v1908 = vadd.f32 0.0, %v1907
        %v1909 = vpop.f32.mrb[0].mxu0
        %v1910 = vadd.f32 0.0, %v1909
        %1911 = vmatprep.mubr.f32.mxu0 0.0
        %1912 = vmatmul.mubr.f32.gmra.mrb[0].mxu0 %v355
        %v1913 = vpop.f32.mrb[0].mxu0
        %v1914 = vadd.f32 0.0, %v1913
        %v1915 = vpop.f32.mrb[0].mxu0
        %v1916 = vadd.f32 0.0, %v1915
        %1917 = vmatprep.mubr.f32.mxu0 0.0
        %1918 = vmatmul.mubr.f32.gmra.mrb[0].mxu0 %v358
        %v1919 = vpop.f32.mrb[0].mxu0
        %v1920 = vadd.f32 0.0, %v1919
        %v1921 = vpop.f32.mrb[0].mxu0
        %v1922 = vadd.f32 0.0, %v1921
        %1923 = vmatprep.mubr.f32.mxu0 0.0
        %1924 = vmatmul.mubr.f32.gmra.mrb[0].mxu0 %v361
        %v1925 = vpop.f32.mrb[0].mxu0
        %v1926 = vadd.f32 0.0, %v1925
        %v1927 = vpop.f32.mrb[0].mxu0
        %v1928 = vadd.f32 0.0, %v1927
        %1929 = vmatprep.mubr.f32.mxu0 0.0
        %1930 = vmatmul.mubr.f32.gmra.mrb[0].mxu0 %v364
        %v1931 = vpop.f32.mrb[0].mxu0
        %v1932 = vadd.f32 0.0, %v1931
        %v1933 = vpop.f32.mrb[0].mxu0
        %v1934 = vadd.f32 0.0, %v1933
        %1935 = vmatprep.mubr.f32.mxu0 0.0
        %1936 = vmatmul.mubr.f32.gmra.mrb[0].mxu0 %v367
        %v1937 = vpop.f32.mrb[0].mxu0
        %v1938 = vadd.f32 0.0, %v1937
        %v1939 = vpop.f32.mrb[0].mxu0
        %v1940 = vadd.f32 0.0, %v1939
        %1941 = vmatprep.mubr.f32.mxu0 0.0
        %1942 = vmatmul.mubr.f32.gmra.mrb[0].mxu0 %v370
        %v1943 = vpop.f32.mrb[0].mxu0
        %v1944 = vadd.f32 0.0, %v1943
        %v1945 = vpop.f32.mrb[0].mxu0
        %v1946 = vadd.f32 0.0, %v1945
        %1947 = vmatprep.mubr.f32.mxu0 0.0
        %1948 = vmatmul.mubr.f32.gmra.mrb[0].mxu0 %v373
        %v1949 = vpop.f32.mrb[0].mxu0
        %v1950 = vadd.f32 0.0, %v1949
        %v1951 = vpop.f32.mrb[0].mxu0
        %v1952 = vadd.f32 0.0, %v1951
        %1953 = vmatprep.mubr.f32.mxu0 0.0
        %1954 = vmatmul.mubr.f32.gmra.mrb[0].mxu0 %v376
        %v1955 = vpop.f32.mrb[0].mxu0
        %v1956 = vadd.f32 0.0, %v1955
        %v1957 = vpop.f32.mrb[0].mxu0
        %v1958 = vadd.f32 0.0, %v1957
        %1959 = vmatprep.mubr.f32.mxu0 0.0
        %1960 = vmatmul.mubr.f32.gmra.mrb[0].mxu0 %v379
        %v1961 = vpop.f32.mrb[0].mxu0
        %v1962 = vadd.f32 0.0, %v1961
        %v1963 = vpop.f32.mrb[0].mxu0
        %v1964 = vadd.f32 0.0, %v1963
        %1965 = vmatprep.mubr.f32.mxu0 0.0
        %1966 = vmatmul.mubr.f32.gmra.mrb[0].mxu0 %v382
        %v1967 = vpop.f32.mrb[0].mxu0
        %v1968 = vadd.f32 0.0, %v1967
        %v1969 = vpop.f32.mrb[0].mxu0
        %v1970 = vadd.f32 0.0, %v1969
        %1971 = vmatprep.mubr.f32.mxu0 0.0
        %1972 = vmatmul.mubr.f32.gmra.mrb[0].mxu0 %v385
        %v1973 = vpop.f32.mrb[0].mxu0
        %v1974 = vadd.f32 0.0, %v1973
        %v1975 = vpop.f32.mrb[0].mxu0
        %v1976 = vadd.f32 0.0, %v1975
        %1977 = vmatprep.mubr.f32.mxu0 0.0
        %1978 = vmatmul.mubr.f32.gmra.mrb[0].mxu0 %v388
        %v1979 = vpop.f32.mrb[0].mxu0
        %v1980 = vadd.f32 0.0, %v1979
        %v1981 = vpop.f32.mrb[0].mxu0
        %v1982 = vadd.f32 0.0, %v1981
        %1983 = vmatprep.mubr.f32.mxu0 0.0
        %1984 = vmatmul.mubr.f32.gmra.mrb[0].mxu0 %v391
        %v1985 = vpop.f32.mrb[0].mxu0
        %v1986 = vadd.f32 0.0, %v1985
        %v1987 = vpop.f32.mrb[0].mxu0
        %v1988 = vadd.f32 0.0, %v1987
        %1989 = vmatprep.mubr.f32.mxu0 0.0
        %1990 = vmatmul.mubr.f32.gmra.mrb[0].mxu0 %v394
        %v1991 = vpop.f32.mrb[0].mxu0
        %v1992 = vadd.f32 0.0, %v1991
        %v1993 = vpop.f32.mrb[0].mxu0
        %v1994 = vadd.f32 0.0, %v1993
        %1995 = vmatprep.mubr.f32.mxu0 0.0
        %1996 = vmatmul.mubr.f32.gmra.mrb[0].mxu0 %v397
        %v1997 = vpop.f32.mrb[0].mxu0
        %v1998 = vadd.f32 0.0, %v1997
        %v1999 = vpop.f32.mrb[0].mxu0
        %v2000 = vadd.f32 0.0, %v1999
        %2001 = vmatprep.mubr.f32.mxu0 0.0
        %2002 = vmatmul.mubr.f32.gmra.mrb[0].mxu0 %v400
        %v2003 = vpop.f32.mrb[0].mxu0
        %v2004 = vadd.f32 0.0, %v2003
        %v2005 = vpop.f32.mrb[0].mxu0
        %v2006 = vadd.f32 0.0, %v2005
        %2007 = vmatprep.mubr.f32.mxu0 0.0
        %2008 = vmatmul.mubr.f32.gmra.mrb[0].mxu0 %v403
        %v2009 = vpop.f32.mrb[0].mxu0
        %v2010 = vadd.f32 0.0, %v2009
        %v2011 = vpop.f32.mrb[0].mxu0
        %v2012 = vadd.f32 0.0, %v2011
        %2013 = vmatprep.mubr.f32.mxu0 0.0
        %2014 = vmatmul.mubr.f32.gmra.mrb[0].mxu0 %v406
        %v2015 = vpop.f32.mrb[0].mxu0
        %v2016 = vadd.f32 0.0, %v2015
        %v2017 = vpop.f32.mrb[0].mxu0
        %v2018 = vadd.f32 0.0, %v2017
        %2019 = vmatprep.mubr.f32.mxu0 0.0
        %2020 = vmatmul.mubr.f32.gmra.mrb[0].mxu0 %v409
        %v2021 = vpop.f32.mrb[0].mxu0
        %v2022 = vadd.f32 0.0, %v2021
        %v2023 = vpop.f32.mrb[0].mxu0
        %v2024 = vadd.f32 0.0, %v2023
        %2025 = vmatprep.mubr.f32.mxu0 0.0
        %2026 = vmatmul.mubr.f32.gmra.mrb[0].mxu0 %v412
        %v2027 = vpop.f32.mrb[0].mxu0
        %v2028 = vadd.f32 0.0, %v2027
        %v2029 = vpop.f32.mrb[0].mxu0
        %v2030 = vadd.f32 0.0, %v2029
        %2031 = vmatprep.mubr.f32.mxu0 0.0
        %2032 = vmatmul.mubr.f32.gmra.mrb[0].mxu0 %v415
        %v2033 = vpop.f32.mrb[0].mxu0
        %v2034 = vadd.f32 0.0, %v2033
        %v2035 = vpop.f32.mrb[0].mxu0
        %v2036 = vadd.f32 0.0, %v2035
        %2037 = vmatprep.mubr.f32.mxu0 0.0
        %2038 = vmatmul.mubr.f32.gmra.mrb[0].mxu0 %v418
        %v2039 = vpop.f32.mrb[0].mxu0
        %v2040 = vadd.f32 0.0, %v2039
        %v2041 = vpop.f32.mrb[0].mxu0
        %v2042 = vadd.f32 0.0, %v2041
        %2043 = vmatprep.mubr.f32.mxu0 0.0
        %2044 = vmatmul.mubr.f32.gmra.mrb[0].mxu0 %v421
        %v2045 = vpop.f32.mrb[0].mxu0
        %v2046 = vadd.f32 0.0, %v2045
        %v2047 = vpop.f32.mrb[0].mxu0
        %v2048 = vadd.f32 0.0, %v2047
        %2049 = vmatprep.mubr.f32.mxu0 0.0
        %2050 = vmatmul.mubr.f32.gmra.mrb[0].mxu0 %v424
        %v2051 = vpop.f32.mrb[0].mxu0
        %v2052 = vadd.f32 0.0, %v2051
        %v2053 = vpop.f32.mrb[0].mxu0
        %v2054 = vadd.f32 0.0, %v2053
        %2055 = vmatprep.mubr.f32.mxu0 0.0
        %2056 = vmatmul.mubr.f32.gmra.mrb[0].mxu0 %v427
        %v2057 = vpop.f32.mrb[0].mxu0
        %v2058 = vadd.f32 0.0, %v2057
        %v2059 = vpop.f32.mrb[0].mxu0
        %v2060 = vadd.f32 0.0, %v2059
        %2061 = vmatprep.mubr.f32.mxu0 0.0
        %2062 = vmatmul.mubr.f32.gmra.mrb[0].mxu0 %v430
        %v2063 = vpop.f32.mrb[0].mxu0
        %v2064 = vadd.f32 0.0, %v2063
        %v2065 = vpop.f32.mrb[0].mxu0
        %v2066 = vadd.f32 0.0, %v2065
        %2067 = vmatprep.mubr.f32.mxu0 0.0
        %2068 = vmatmul.mubr.f32.gmra.mrb[0].mxu0 %v433
        %v2069 = vpop.f32.mrb[0].mxu0
        %v2070 = vadd.f32 0.0, %v2069
        %v2071 = vpop.f32.mrb[0].mxu0
        %v2072 = vadd.f32 0.0, %v2071
        %2073 = vmatprep.mubr.f32.mxu0 0.0
        %2074 = vmatmul.mubr.f32.gmra.mrb[0].mxu0 %v436
        %v2075 = vpop.f32.mrb[0].mxu0
        %v2076 = vadd.f32 0.0, %v2075
        %v2077 = vpop.f32.mrb[0].mxu0
        %v2078 = vadd.f32 0.0, %v2077
        %2079 = vmatprep.mubr.f32.mxu0 0.0
        %2080 = vmatmul.mubr.f32.gmra.mrb[0].mxu0 %v439
        %v2081 = vpop.f32.mrb[0].mxu0
        %v2082 = vadd.f32 0.0, %v2081
        %v2083 = vpop.f32.mrb[0].mxu0
        %v2084 = vadd.f32 0.0, %v2083
        %2085 = vdwg.mxu0
        %v2086 = vmax.f32 %v525, 0.0
        %v2087 = vmax.f32 %v527, 0.0
        %v2088 = vmax.f32 %v932, 0.0
        %v2089 = vmax.f32 %v934, 0.0
        %v2090 = vmax.f32 %v1339, 0.0
        %v2091 = vmax.f32 %v1341, 0.0
        %v2092 = vmax.f32 %v1746, 0.0
        %v2093 = vmax.f32 %v1748, 0.0
        %v2094 = vmax.f32 %v531, 0.0
        %v2095 = vmax.f32 %v533, 0.0
        %v2096 = vmax.f32 %v938, 0.0
        %v2097 = vmax.f32 %v940, 0.0
        %v2098 = vmax.f32 %v1345, 0.0
        %v2099 = vmax.f32 %v1347, 0.0
        %v2100 = vmax.f32 %v1752, 0.0
        %v2101 = vmax.f32 %v1754, 0.0
        %v2102 = vmax.f32 %v537, 0.0
        %v2103 = vmax.f32 %v539, 0.0
        %v2104 = vmax.f32 %v944, 0.0
        %v2105 = vmax.f32 %v946, 0.0
        %v2106 = vmax.f32 %v1351, 0.0
        %v2107 = vmax.f32 %v1353, 0.0
        %v2108 = vmax.f32 %v1758, 0.0
        %v2109 = vmax.f32 %v1760, 0.0
        %v2110 = vmax.f32 %v543, 0.0
        %v2111 = vmax.f32 %v545, 0.0
        %v2112 = vmax.f32 %v950, 0.0
        %v2113 = vmax.f32 %v952, 0.0
        %v2114 = vmax.f32 %v1357, 0.0
        %v2115 = vmax.f32 %v1359, 0.0
        %v2116 = vmax.f32 %v1764, 0.0
        %v2117 = vmax.f32 %v1766, 0.0
        %v2118 = vmax.f32 %v549, 0.0
        %v2119 = vmax.f32 %v551, 0.0
        %v2120 = vmax.f32 %v956, 0.0
        %v2121 = vmax.f32 %v958, 0.0
        %v2122 = vmax.f32 %v1363, 0.0
        %v2123 = vmax.f32 %v1365, 0.0
        %v2124 = vmax.f32 %v1770, 0.0
        %v2125 = vmax.f32 %v1772, 0.0
        %v2126 = vmax.f32 %v555, 0.0
        %v2127 = vmax.f32 %v557, 0.0
        %v2128 = vmax.f32 %v962, 0.0
        %v2129 = vmax.f32 %v964, 0.0
        %v2130 = vmax.f32 %v1369, 0.0
        %v2131 = vmax.f32 %v1371, 0.0
        %v2132 = vmax.f32 %v1776, 0.0
        %v2133 = vmax.f32 %v1778, 0.0
        %v2134 = vmax.f32 %v561, 0.0
        %v2135 = vmax.f32 %v563, 0.0
        %v2136 = vmax.f32 %v968, 0.0
        %v2137 = vmax.f32 %v970, 0.0
        %v2138 = vmax.f32 %v1375, 0.0
        %v2139 = vmax.f32 %v1377, 0.0
        %v2140 = vmax.f32 %v1782, 0.0
        %v2141 = vmax.f32 %v1784, 0.0
        %v2142 = vmax.f32 %v567, 0.0
        %v2143 = vmax.f32 %v569, 0.0
        %v2144 = vmax.f32 %v974, 0.0
        %v2145 = vmax.f32 %v976, 0.0
        %v2146 = vmax.f32 %v1381, 0.0
        %v2147 = vmax.f32 %v1383, 0.0
        %v2148 = vmax.f32 %v1788, 0.0
        %v2149 = vmax.f32 %v1790, 0.0
        %v2150 = vmax.f32 %v573, 0.0
        %v2151 = vmax.f32 %v575, 0.0
        %v2152 = vmax.f32 %v980, 0.0
        %v2153 = vmax.f32 %v982, 0.0
        %v2154 = vmax.f32 %v1387, 0.0
        %v2155 = vmax.f32 %v1389, 0.0
        %v2156 = vmax.f32 %v1794, 0.0
        %v2157 = vmax.f32 %v1796, 0.0
        %v2158 = vmax.f32 %v579, 0.0
        %v2159 = vmax.f32 %v581, 0.0
        %v2160 = vmax.f32 %v986, 0.0
        %v2161 = vmax.f32 %v988, 0.0
        %v2162 = vmax.f32 %v1393, 0.0
        %v2163 = vmax.f32 %v1395, 0.0
        %v2164 = vmax.f32 %v1800, 0.0
        %v2165 = vmax.f32 %v1802, 0.0
        %v2166 = vmax.f32 %v585, 0.0
        %v2167 = vmax.f32 %v587, 0.0
        %v2168 = vmax.f32 %v992, 0.0
        %v2169 = vmax.f32 %v994, 0.0
        %v2170 = vmax.f32 %v1399, 0.0
        %v2171 = vmax.f32 %v1401, 0.0
        %v2172 = vmax.f32 %v1806, 0.0
        %v2173 = vmax.f32 %v1808, 0.0
        %v2174 = vmax.f32 %v591, 0.0
        %v2175 = vmax.f32 %v593, 0.0
        %v2176 = vmax.f32 %v998, 0.0
        %v2177 = vmax.f32 %v1000, 0.0
        %v2178 = vmax.f32 %v1405, 0.0
        %v2179 = vmax.f32 %v1407, 0.0
        %v2180 = vmax.f32 %v1812, 0.0
        %v2181 = vmax.f32 %v1814, 0.0
        %v2182 = vmax.f32 %v597, 0.0
        %v2183 = vmax.f32 %v599, 0.0
        %v2184 = vmax.f32 %v1004, 0.0
        %v2185 = vmax.f32 %v1006, 0.0
        %v2186 = vmax.f32 %v1411, 0.0
        %v2187 = vmax.f32 %v1413, 0.0
        %v2188 = vmax.f32 %v1818, 0.0
        %v2189 = vmax.f32 %v1820, 0.0
        %v2190 = vmax.f32 %v603, 0.0
        %v2191 = vmax.f32 %v605, 0.0
        %v2192 = vmax.f32 %v1010, 0.0
        %v2193 = vmax.f32 %v1012, 0.0
        %v2194 = vmax.f32 %v1417, 0.0
        %v2195 = vmax.f32 %v1419, 0.0
        %v2196 = vmax.f32 %v1824, 0.0
        %v2197 = vmax.f32 %v1826, 0.0
        %v2198 = vmax.f32 %v609, 0.0
        %v2199 = vmax.f32 %v611, 0.0
        %v2200 = vmax.f32 %v1016, 0.0
        %v2201 = vmax.f32 %v1018, 0.0
        %v2202 = vmax.f32 %v1423, 0.0
        %v2203 = vmax.f32 %v1425, 0.0
        %v2204 = vmax.f32 %v1830, 0.0
        %v2205 = vmax.f32 %v1832, 0.0
        %v2206 = vmax.f32 %v615, 0.0
        %v2207 = vmax.f32 %v617, 0.0
        %v2208 = vmax.f32 %v1022, 0.0
        %v2209 = vmax.f32 %v1024, 0.0
        %v2210 = vmax.f32 %v1429, 0.0
        %v2211 = vmax.f32 %v1431, 0.0
        %v2212 = vmax.f32 %v1836, 0.0
        %v2213 = vmax.f32 %v1838, 0.0
        %v2214 = vmax.f32 %v621, 0.0
        %v2215 = vmax.f32 %v623, 0.0
        %v2216 = vmax.f32 %v1028, 0.0
        %v2217 = vmax.f32 %v1030, 0.0
        %v2218 = vmax.f32 %v1435, 0.0
        %v2219 = vmax.f32 %v1437, 0.0
        %v2220 = vmax.f32 %v1842, 0.0
        %v2221 = vmax.f32 %v1844, 0.0
        %v2222 = vmax.f32 %v627, 0.0
        %v2223 = vmax.f32 %v629, 0.0
        %v2224 = vmax.f32 %v1034, 0.0
        %v2225 = vmax.f32 %v1036, 0.0
        %v2226 = vmax.f32 %v1441, 0.0
        %v2227 = vmax.f32 %v1443, 0.0
        %v2228 = vmax.f32 %v1848, 0.0
        %v2229 = vmax.f32 %v1850, 0.0
        %v2230 = vmax.f32 %v633, 0.0
        %v2231 = vmax.f32 %v635, 0.0
        %v2232 = vmax.f32 %v1040, 0.0
        %v2233 = vmax.f32 %v1042, 0.0
        %v2234 = vmax.f32 %v1447, 0.0
        %v2235 = vmax.f32 %v1449, 0.0
        %v2236 = vmax.f32 %v1854, 0.0
        %v2237 = vmax.f32 %v1856, 0.0
        %v2238 = vmax.f32 %v639, 0.0
        %v2239 = vmax.f32 %v641, 0.0
        %v2240 = vmax.f32 %v1046, 0.0
        %v2241 = vmax.f32 %v1048, 0.0
        %v2242 = vmax.f32 %v1453, 0.0
        %v2243 = vmax.f32 %v1455, 0.0
        %v2244 = vmax.f32 %v1860, 0.0
        %v2245 = vmax.f32 %v1862, 0.0
        %v2246 = vmax.f32 %v645, 0.0
        %v2247 = vmax.f32 %v647, 0.0
        %v2248 = vmax.f32 %v1052, 0.0
        %v2249 = vmax.f32 %v1054, 0.0
        %v2250 = vmax.f32 %v1459, 0.0
        %v2251 = vmax.f32 %v1461, 0.0
        %v2252 = vmax.f32 %v1866, 0.0
        %v2253 = vmax.f32 %v1868, 0.0
        %v2254 = vmax.f32 %v651, 0.0
        %v2255 = vmax.f32 %v653, 0.0
        %v2256 = vmax.f32 %v1058, 0.0
        %v2257 = vmax.f32 %v1060, 0.0
        %v2258 = vmax.f32 %v1465, 0.0
        %v2259 = vmax.f32 %v1467, 0.0
        %v2260 = vmax.f32 %v1872, 0.0
        %v2261 = vmax.f32 %v1874, 0.0
        %v2262 = vmax.f32 %v657, 0.0
        %v2263 = vmax.f32 %v659, 0.0
        %v2264 = vmax.f32 %v1064, 0.0
        %v2265 = vmax.f32 %v1066, 0.0
        %v2266 = vmax.f32 %v1471, 0.0
        %v2267 = vmax.f32 %v1473, 0.0
        %v2268 = vmax.f32 %v1878, 0.0
        %v2269 = vmax.f32 %v1880, 0.0
        %v2270 = vmax.f32 %v663, 0.0
        %v2271 = vmax.f32 %v665, 0.0
        %v2272 = vmax.f32 %v1070, 0.0
        %v2273 = vmax.f32 %v1072, 0.0
        %v2274 = vmax.f32 %v1477, 0.0
        %v2275 = vmax.f32 %v1479, 0.0
        %v2276 = vmax.f32 %v1884, 0.0
        %v2277 = vmax.f32 %v1886, 0.0
        %v2278 = vmax.f32 %v669, 0.0
        %v2279 = vmax.f32 %v671, 0.0
        %v2280 = vmax.f32 %v1076, 0.0
        %v2281 = vmax.f32 %v1078, 0.0
        %v2282 = vmax.f32 %v1483, 0.0
        %v2283 = vmax.f32 %v1485, 0.0
        %v2284 = vmax.f32 %v1890, 0.0
        %v2285 = vmax.f32 %v1892, 0.0
        %v2286 = vmax.f32 %v675, 0.0
        %v2287 = vmax.f32 %v677, 0.0
        %v2288 = vmax.f32 %v1082, 0.0
        %v2289 = vmax.f32 %v1084, 0.0
        %v2290 = vmax.f32 %v1489, 0.0
        %v2291 = vmax.f32 %v1491, 0.0
        %v2292 = vmax.f32 %v1896, 0.0
        %v2293 = vmax.f32 %v1898, 0.0
        %v2294 = vmax.f32 %v681, 0.0
        %v2295 = vmax.f32 %v683, 0.0
        %v2296 = vmax.f32 %v1088, 0.0
        %v2297 = vmax.f32 %v1090, 0.0
        %v2298 = vmax.f32 %v1495, 0.0
        %v2299 = vmax.f32 %v1497, 0.0
        %v2300 = vmax.f32 %v1902, 0.0
        %v2301 = vmax.f32 %v1904, 0.0
        %v2302 = vmax.f32 %v687, 0.0
        %v2303 = vmax.f32 %v689, 0.0
        %v2304 = vmax.f32 %v1094, 0.0
        %v2305 = vmax.f32 %v1096, 0.0
        %v2306 = vmax.f32 %v1501, 0.0
        %v2307 = vmax.f32 %v1503, 0.0
        %v2308 = vmax.f32 %v1908, 0.0
        %v2309 = vmax.f32 %v1910, 0.0
        %v2310 = vmax.f32 %v693, 0.0
        %v2311 = vmax.f32 %v695, 0.0
        %v2312 = vmax.f32 %v1100, 0.0
        %v2313 = vmax.f32 %v1102, 0.0
        %v2314 = vmax.f32 %v1507, 0.0
        %v2315 = vmax.f32 %v1509, 0.0
        %v2316 = vmax.f32 %v1914, 0.0
        %v2317 = vmax.f32 %v1916, 0.0
        %v2318 = vmax.f32 %v699, 0.0
        %v2319 = vmax.f32 %v701, 0.0
        %v2320 = vmax.f32 %v1106, 0.0
        %v2321 = vmax.f32 %v1108, 0.0
        %v2322 = vmax.f32 %v1513, 0.0
        %v2323 = vmax.f32 %v1515, 0.0
        %v2324 = vmax.f32 %v1920, 0.0
        %v2325 = vmax.f32 %v1922, 0.0
        %v2326 = vmax.f32 %v705, 0.0
        %v2327 = vmax.f32 %v707, 0.0
        %v2328 = vmax.f32 %v1112, 0.0
        %v2329 = vmax.f32 %v1114, 0.0
        %v2330 = vmax.f32 %v1519, 0.0
        %v2331 = vmax.f32 %v1521, 0.0
        %v2332 = vmax.f32 %v1926, 0.0
        %v2333 = vmax.f32 %v1928, 0.0
        %v2334 = vmax.f32 %v711, 0.0
        %v2335 = vmax.f32 %v713, 0.0
        %v2336 = vmax.f32 %v1118, 0.0
        %v2337 = vmax.f32 %v1120, 0.0
        %v2338 = vmax.f32 %v1525, 0.0
        %v2339 = vmax.f32 %v1527, 0.0
        %v2340 = vmax.f32 %v1932, 0.0
        %v2341 = vmax.f32 %v1934, 0.0
        %v2342 = vmax.f32 %v717, 0.0
        %v2343 = vmax.f32 %v719, 0.0
        %v2344 = vmax.f32 %v1124, 0.0
        %v2345 = vmax.f32 %v1126, 0.0
        %v2346 = vmax.f32 %v1531, 0.0
        %v2347 = vmax.f32 %v1533, 0.0
        %v2348 = vmax.f32 %v1938, 0.0
        %v2349 = vmax.f32 %v1940, 0.0
        %v2350 = vmax.f32 %v723, 0.0
        %v2351 = vmax.f32 %v725, 0.0
        %v2352 = vmax.f32 %v1130, 0.0
        %v2353 = vmax.f32 %v1132, 0.0
        %v2354 = vmax.f32 %v1537, 0.0
        %v2355 = vmax.f32 %v1539, 0.0
        %v2356 = vmax.f32 %v1944, 0.0
        %v2357 = vmax.f32 %v1946, 0.0
        %v2358 = vmax.f32 %v729, 0.0
        %v2359 = vmax.f32 %v731, 0.0
        %v2360 = vmax.f32 %v1136, 0.0
        %v2361 = vmax.f32 %v1138, 0.0
        %v2362 = vmax.f32 %v1543, 0.0
        %v2363 = vmax.f32 %v1545, 0.0
        %v2364 = vmax.f32 %v1950, 0.0
        %v2365 = vmax.f32 %v1952, 0.0
        %v2366 = vmax.f32 %v735, 0.0
        %v2367 = vmax.f32 %v737, 0.0
        %v2368 = vmax.f32 %v1142, 0.0
        %v2369 = vmax.f32 %v1144, 0.0
        %v2370 = vmax.f32 %v1549, 0.0
        %v2371 = vmax.f32 %v1551, 0.0
        %v2372 = vmax.f32 %v1956, 0.0
        %v2373 = vmax.f32 %v1958, 0.0
        %v2374 = vmax.f32 %v741, 0.0
        %v2375 = vmax.f32 %v743, 0.0
        %v2376 = vmax.f32 %v1148, 0.0
        %v2377 = vmax.f32 %v1150, 0.0
        %v2378 = vmax.f32 %v1555, 0.0
        %v2379 = vmax.f32 %v1557, 0.0
        %v2380 = vmax.f32 %v1962, 0.0
        %v2381 = vmax.f32 %v1964, 0.0
        %v2382 = vmax.f32 %v747, 0.0
        %v2383 = vmax.f32 %v749, 0.0
        %v2384 = vmax.f32 %v1154, 0.0
        %v2385 = vmax.f32 %v1156, 0.0
        %v2386 = vmax.f32 %v1561, 0.0
        %v2387 = vmax.f32 %v1563, 0.0
        %v2388 = vmax.f32 %v1968, 0.0
        %v2389 = vmax.f32 %v1970, 0.0
        %v2390 = vmax.f32 %v753, 0.0
        %v2391 = vmax.f32 %v755, 0.0
        %v2392 = vmax.f32 %v1160, 0.0
        %v2393 = vmax.f32 %v1162, 0.0
        %v2394 = vmax.f32 %v1567, 0.0
        %v2395 = vmax.f32 %v1569, 0.0
        %v2396 = vmax.f32 %v1974, 0.0
        %v2397 = vmax.f32 %v1976, 0.0
        %v2398 = vmax.f32 %v759, 0.0
        %v2399 = vmax.f32 %v761, 0.0
        %v2400 = vmax.f32 %v1166, 0.0
        %v2401 = vmax.f32 %v1168, 0.0
        %v2402 = vmax.f32 %v1573, 0.0
        %v2403 = vmax.f32 %v1575, 0.0
        %v2404 = vmax.f32 %v1980, 0.0
        %v2405 = vmax.f32 %v1982, 0.0
        %v2406 = vmax.f32 %v765, 0.0
        %v2407 = vmax.f32 %v767, 0.0
        %v2408 = vmax.f32 %v1172, 0.0
        %v2409 = vmax.f32 %v1174, 0.0
        %v2410 = vmax.f32 %v1579, 0.0
        %v2411 = vmax.f32 %v1581, 0.0
        %v2412 = vmax.f32 %v1986, 0.0
        %v2413 = vmax.f32 %v1988, 0.0
        %v2414 = vmax.f32 %v771, 0.0
        %v2415 = vmax.f32 %v773, 0.0
        %v2416 = vmax.f32 %v1178, 0.0
        %v2417 = vmax.f32 %v1180, 0.0
        %v2418 = vmax.f32 %v1585, 0.0
        %v2419 = vmax.f32 %v1587, 0.0
        %v2420 = vmax.f32 %v1992, 0.0
        %v2421 = vmax.f32 %v1994, 0.0
        %v2422 = vmax.f32 %v777, 0.0
        %v2423 = vmax.f32 %v779, 0.0
        %v2424 = vmax.f32 %v1184, 0.0
        %v2425 = vmax.f32 %v1186, 0.0
        %v2426 = vmax.f32 %v1591, 0.0
        %v2427 = vmax.f32 %v1593, 0.0
        %v2428 = vmax.f32 %v1998, 0.0
        %v2429 = vmax.f32 %v2000, 0.0
        %v2430 = vmax.f32 %v783, 0.0
        %v2431 = vmax.f32 %v785, 0.0
        %v2432 = vmax.f32 %v1190, 0.0
        %v2433 = vmax.f32 %v1192, 0.0
        %v2434 = vmax.f32 %v1597, 0.0
        %v2435 = vmax.f32 %v1599, 0.0
        %v2436 = vmax.f32 %v2004, 0.0
        %v2437 = vmax.f32 %v2006, 0.0
        %v2438 = vmax.f32 %v789, 0.0
        %v2439 = vmax.f32 %v791, 0.0
        %v2440 = vmax.f32 %v1196, 0.0
        %v2441 = vmax.f32 %v1198, 0.0
        %v2442 = vmax.f32 %v1603, 0.0
        %v2443 = vmax.f32 %v1605, 0.0
        %v2444 = vmax.f32 %v2010, 0.0
        %v2445 = vmax.f32 %v2012, 0.0
        %v2446 = vmax.f32 %v795, 0.0
        %v2447 = vmax.f32 %v797, 0.0
        %v2448 = vmax.f32 %v1202, 0.0
        %v2449 = vmax.f32 %v1204, 0.0
        %v2450 = vmax.f32 %v1609, 0.0
        %v2451 = vmax.f32 %v1611, 0.0
        %v2452 = vmax.f32 %v2016, 0.0
        %v2453 = vmax.f32 %v2018, 0.0
        %v2454 = vmax.f32 %v801, 0.0
        %v2455 = vmax.f32 %v803, 0.0
        %v2456 = vmax.f32 %v1208, 0.0
        %v2457 = vmax.f32 %v1210, 0.0
        %v2458 = vmax.f32 %v1615, 0.0
        %v2459 = vmax.f32 %v1617, 0.0
        %v2460 = vmax.f32 %v2022, 0.0
        %v2461 = vmax.f32 %v2024, 0.0
        %v2462 = vmax.f32 %v807, 0.0
        %v2463 = vmax.f32 %v809, 0.0
        %v2464 = vmax.f32 %v1214, 0.0
        %v2465 = vmax.f32 %v1216, 0.0
        %v2466 = vmax.f32 %v1621, 0.0
        %v2467 = vmax.f32 %v1623, 0.0
        %v2468 = vmax.f32 %v2028, 0.0
        %v2469 = vmax.f32 %v2030, 0.0
        %v2470 = vmax.f32 %v813, 0.0
        %v2471 = vmax.f32 %v815, 0.0
        %v2472 = vmax.f32 %v1220, 0.0
        %v2473 = vmax.f32 %v1222, 0.0
        %v2474 = vmax.f32 %v1627, 0.0
        %v2475 = vmax.f32 %v1629, 0.0
        %v2476 = vmax.f32 %v2034, 0.0
        %v2477 = vmax.f32 %v2036, 0.0
        %v2478 = vmax.f32 %v819, 0.0
        %v2479 = vmax.f32 %v821, 0.0
        %v2480 = vmax.f32 %v1226, 0.0
        %v2481 = vmax.f32 %v1228, 0.0
        %v2482 = vmax.f32 %v1633, 0.0
        %v2483 = vmax.f32 %v1635, 0.0
        %v2484 = vmax.f32 %v2040, 0.0
        %v2485 = vmax.f32 %v2042, 0.0
        %v2486 = vmax.f32 %v825, 0.0
        %v2487 = vmax.f32 %v827, 0.0
        %v2488 = vmax.f32 %v1232, 0.0
        %v2489 = vmax.f32 %v1234, 0.0
        %v2490 = vmax.f32 %v1639, 0.0
        %v2491 = vmax.f32 %v1641, 0.0
        %v2492 = vmax.f32 %v2046, 0.0
        %v2493 = vmax.f32 %v2048, 0.0
        %v2494 = vmax.f32 %v831, 0.0
        %v2495 = vmax.f32 %v833, 0.0
        %v2496 = vmax.f32 %v1238, 0.0
        %v2497 = vmax.f32 %v1240, 0.0
        %v2498 = vmax.f32 %v1645, 0.0
        %v2499 = vmax.f32 %v1647, 0.0
        %v2500 = vmax.f32 %v2052, 0.0
        %v2501 = vmax.f32 %v2054, 0.0
        %v2502 = vmax.f32 %v837, 0.0
        %v2503 = vmax.f32 %v839, 0.0
        %v2504 = vmax.f32 %v1244, 0.0
        %v2505 = vmax.f32 %v1246, 0.0
        %v2506 = vmax.f32 %v1651, 0.0
        %v2507 = vmax.f32 %v1653, 0.0
        %v2508 = vmax.f32 %v2058, 0.0
        %v2509 = vmax.f32 %v2060, 0.0
        %v2510 = vmax.f32 %v843, 0.0
        %v2511 = vmax.f32 %v845, 0.0
        %v2512 = vmax.f32 %v1250, 0.0
        %v2513 = vmax.f32 %v1252, 0.0
        %v2514 = vmax.f32 %v1657, 0.0
        %v2515 = vmax.f32 %v1659, 0.0
        %v2516 = vmax.f32 %v2064, 0.0
        %v2517 = vmax.f32 %v2066, 0.0
        %v2518 = vmax.f32 %v849, 0.0
        %v2519 = vmax.f32 %v851, 0.0
        %v2520 = vmax.f32 %v1256, 0.0
        %v2521 = vmax.f32 %v1258, 0.0
        %v2522 = vmax.f32 %v1663, 0.0
        %v2523 = vmax.f32 %v1665, 0.0
        %v2524 = vmax.f32 %v2070, 0.0
        %v2525 = vmax.f32 %v2072, 0.0
        %v2526 = vmax.f32 %v855, 0.0
        %v2527 = vmax.f32 %v857, 0.0
        %v2528 = vmax.f32 %v1262, 0.0
        %v2529 = vmax.f32 %v1264, 0.0
        %v2530 = vmax.f32 %v1669, 0.0
        %v2531 = vmax.f32 %v1671, 0.0
        %v2532 = vmax.f32 %v2076, 0.0
        %v2533 = vmax.f32 %v2078, 0.0
        %v2534 = vpack.c.bf16 %v2094, %v2086
        %v2535 = vpack.c.bf16 %v2095, %v2087
        %v2536 = vpack.c.bf16 %v2096, %v2088
        %v2537 = vpack.c.bf16 %v2097, %v2089
        %v2538 = vpack.c.bf16 %v2098, %v2090
        %v2539 = vpack.c.bf16 %v2099, %v2091
        %v2540 = vpack.c.bf16 %v2100, %v2092
        %v2541 = vpack.c.bf16 %v2101, %v2093
        %v2542 = vpack.c.bf16 %v2110, %v2102
        %v2543 = vpack.c.bf16 %v2111, %v2103
        %v2544 = vpack.c.bf16 %v2112, %v2104
        %v2545 = vpack.c.bf16 %v2113, %v2105
        %v2546 = vpack.c.bf16 %v2114, %v2106
        %v2547 = vpack.c.bf16 %v2115, %v2107
        %v2548 = vpack.c.bf16 %v2116, %v2108
        %v2549 = vpack.c.bf16 %v2117, %v2109
        %v2550 = vpack.c.bf16 %v2126, %v2118
        %v2551 = vpack.c.bf16 %v2127, %v2119
        %v2552 = vpack.c.bf16 %v2128, %v2120
        %v2553 = vpack.c.bf16 %v2129, %v2121
        %v2554 = vpack.c.bf16 %v2130, %v2122
        %v2555 = vpack.c.bf16 %v2131, %v2123
        %v2556 = vpack.c.bf16 %v2132, %v2124
        %v2557 = vpack.c.bf16 %v2133, %v2125
        %v2558 = vpack.c.bf16 %v2142, %v2134
        %v2559 = vpack.c.bf16 %v2143, %v2135
        %v2560 = vpack.c.bf16 %v2144, %v2136
        %v2561 = vpack.c.bf16 %v2145, %v2137
        %v2562 = vpack.c.bf16 %v2146, %v2138
        %v2563 = vpack.c.bf16 %v2147, %v2139
        %v2564 = vpack.c.bf16 %v2148, %v2140
        %v2565 = vpack.c.bf16 %v2149, %v2141
        %v2566 = vpack.c.bf16 %v2158, %v2150
        %v2567 = vpack.c.bf16 %v2159, %v2151
        %v2568 = vpack.c.bf16 %v2160, %v2152
        %v2569 = vpack.c.bf16 %v2161, %v2153
        %v2570 = vpack.c.bf16 %v2162, %v2154
        %v2571 = vpack.c.bf16 %v2163, %v2155
        %v2572 = vpack.c.bf16 %v2164, %v2156
        %v2573 = vpack.c.bf16 %v2165, %v2157
        %v2574 = vpack.c.bf16 %v2174, %v2166
        %v2575 = vpack.c.bf16 %v2175, %v2167
        %v2576 = vpack.c.bf16 %v2176, %v2168
        %v2577 = vpack.c.bf16 %v2177, %v2169
        %v2578 = vpack.c.bf16 %v2178, %v2170
        %v2579 = vpack.c.bf16 %v2179, %v2171
        %v2580 = vpack.c.bf16 %v2180, %v2172
        %v2581 = vpack.c.bf16 %v2181, %v2173
        %v2582 = vpack.c.bf16 %v2190, %v2182
        %v2583 = vpack.c.bf16 %v2191, %v2183
        %v2584 = vpack.c.bf16 %v2192, %v2184
        %v2585 = vpack.c.bf16 %v2193, %v2185
        %v2586 = vpack.c.bf16 %v2194, %v2186
        %v2587 = vpack.c.bf16 %v2195, %v2187
        %v2588 = vpack.c.bf16 %v2196, %v2188
        %v2589 = vpack.c.bf16 %v2197, %v2189
        %v2590 = vpack.c.bf16 %v2206, %v2198
        %v2591 = vpack.c.bf16 %v2207, %v2199
        %v2592 = vpack.c.bf16 %v2208, %v2200
        %v2593 = vpack.c.bf16 %v2209, %v2201
        %v2594 = vpack.c.bf16 %v2210, %v2202
        %v2595 = vpack.c.bf16 %v2211, %v2203
        %v2596 = vpack.c.bf16 %v2212, %v2204
        %v2597 = vpack.c.bf16 %v2213, %v2205
        %v2598 = vpack.c.bf16 %v2222, %v2214
        %v2599 = vpack.c.bf16 %v2223, %v2215
        %v2600 = vpack.c.bf16 %v2224, %v2216
        %v2601 = vpack.c.bf16 %v2225, %v2217
        %v2602 = vpack.c.bf16 %v2226, %v2218
        %v2603 = vpack.c.bf16 %v2227, %v2219
        %v2604 = vpack.c.bf16 %v2228, %v2220
        %v2605 = vpack.c.bf16 %v2229, %v2221
        %v2606 = vpack.c.bf16 %v2238, %v2230
        %v2607 = vpack.c.bf16 %v2239, %v2231
        %v2608 = vpack.c.bf16 %v2240, %v2232
        %v2609 = vpack.c.bf16 %v2241, %v2233
        %v2610 = vpack.c.bf16 %v2242, %v2234
        %v2611 = vpack.c.bf16 %v2243, %v2235
        %v2612 = vpack.c.bf16 %v2244, %v2236
        %v2613 = vpack.c.bf16 %v2245, %v2237
        %v2614 = vpack.c.bf16 %v2254, %v2246
        %v2615 = vpack.c.bf16 %v2255, %v2247
        %v2616 = vpack.c.bf16 %v2256, %v2248
        %v2617 = vpack.c.bf16 %v2257, %v2249
        %v2618 = vpack.c.bf16 %v2258, %v2250
        %v2619 = vpack.c.bf16 %v2259, %v2251
        %v2620 = vpack.c.bf16 %v2260, %v2252
        %v2621 = vpack.c.bf16 %v2261, %v2253
        %v2622 = vpack.c.bf16 %v2270, %v2262
        %v2623 = vpack.c.bf16 %v2271, %v2263
        %v2624 = vpack.c.bf16 %v2272, %v2264
        %v2625 = vpack.c.bf16 %v2273, %v2265
        %v2626 = vpack.c.bf16 %v2274, %v2266
        %v2627 = vpack.c.bf16 %v2275, %v2267
        %v2628 = vpack.c.bf16 %v2276, %v2268
        %v2629 = vpack.c.bf16 %v2277, %v2269
        %v2630 = vpack.c.bf16 %v2286, %v2278
        %v2631 = vpack.c.bf16 %v2287, %v2279
        %v2632 = vpack.c.bf16 %v2288, %v2280
        %v2633 = vpack.c.bf16 %v2289, %v2281
        %v2634 = vpack.c.bf16 %v2290, %v2282
        %v2635 = vpack.c.bf16 %v2291, %v2283
        %v2636 = vpack.c.bf16 %v2292, %v2284
        %v2637 = vpack.c.bf16 %v2293, %v2285
        %v2638 = vpack.c.bf16 %v2302, %v2294
        %v2639 = vpack.c.bf16 %v2303, %v2295
        %v2640 = vpack.c.bf16 %v2304, %v2296
        %v2641 = vpack.c.bf16 %v2305, %v2297
        %v2642 = vpack.c.bf16 %v2306, %v2298
        %v2643 = vpack.c.bf16 %v2307, %v2299
        %v2644 = vpack.c.bf16 %v2308, %v2300
        %v2645 = vpack.c.bf16 %v2309, %v2301
        %v2646 = vpack.c.bf16 %v2318, %v2310
        %v2647 = vpack.c.bf16 %v2319, %v2311
        %v2648 = vpack.c.bf16 %v2320, %v2312
        %v2649 = vpack.c.bf16 %v2321, %v2313
        %v2650 = vpack.c.bf16 %v2322, %v2314
        %v2651 = vpack.c.bf16 %v2323, %v2315
        %v2652 = vpack.c.bf16 %v2324, %v2316
        %v2653 = vpack.c.bf16 %v2325, %v2317
        %v2654 = vpack.c.bf16 %v2334, %v2326
        %v2655 = vpack.c.bf16 %v2335, %v2327
        %v2656 = vpack.c.bf16 %v2336, %v2328
        %v2657 = vpack.c.bf16 %v2337, %v2329
        %v2658 = vpack.c.bf16 %v2338, %v2330
        %v2659 = vpack.c.bf16 %v2339, %v2331
        %v2660 = vpack.c.bf16 %v2340, %v2332
        %v2661 = vpack.c.bf16 %v2341, %v2333
        %v2662 = vpack.c.bf16 %v2350, %v2342
        %v2663 = vpack.c.bf16 %v2351, %v2343
        %v2664 = vpack.c.bf16 %v2352, %v2344
        %v2665 = vpack.c.bf16 %v2353, %v2345
        %v2666 = vpack.c.bf16 %v2354, %v2346
        %v2667 = vpack.c.bf16 %v2355, %v2347
        %v2668 = vpack.c.bf16 %v2356, %v2348
        %v2669 = vpack.c.bf16 %v2357, %v2349
        %v2670 = vpack.c.bf16 %v2366, %v2358
        %v2671 = vpack.c.bf16 %v2367, %v2359
        %v2672 = vpack.c.bf16 %v2368, %v2360
        %v2673 = vpack.c.bf16 %v2369, %v2361
        %v2674 = vpack.c.bf16 %v2370, %v2362
        %v2675 = vpack.c.bf16 %v2371, %v2363
        %v2676 = vpack.c.bf16 %v2372, %v2364
        %v2677 = vpack.c.bf16 %v2373, %v2365
        %v2678 = vpack.c.bf16 %v2382, %v2374
        %v2679 = vpack.c.bf16 %v2383, %v2375
        %v2680 = vpack.c.bf16 %v2384, %v2376
        %v2681 = vpack.c.bf16 %v2385, %v2377
        %v2682 = vpack.c.bf16 %v2386, %v2378
        %v2683 = vpack.c.bf16 %v2387, %v2379
        %v2684 = vpack.c.bf16 %v2388, %v2380
        %v2685 = vpack.c.bf16 %v2389, %v2381
        %v2686 = vpack.c.bf16 %v2398, %v2390
        %v2687 = vpack.c.bf16 %v2399, %v2391
        %v2688 = vpack.c.bf16 %v2400, %v2392
        %v2689 = vpack.c.bf16 %v2401, %v2393
        %v2690 = vpack.c.bf16 %v2402, %v2394
        %v2691 = vpack.c.bf16 %v2403, %v2395
        %v2692 = vpack.c.bf16 %v2404, %v2396
        %v2693 = vpack.c.bf16 %v2405, %v2397
        %v2694 = vpack.c.bf16 %v2414, %v2406
        %v2695 = vpack.c.bf16 %v2415, %v2407
        %v2696 = vpack.c.bf16 %v2416, %v2408
        %v2697 = vpack.c.bf16 %v2417, %v2409
        %v2698 = vpack.c.bf16 %v2418, %v2410
        %v2699 = vpack.c.bf16 %v2419, %v2411
        %v2700 = vpack.c.bf16 %v2420, %v2412
        %v2701 = vpack.c.bf16 %v2421, %v2413
        %v2702 = vpack.c.bf16 %v2430, %v2422
        %v2703 = vpack.c.bf16 %v2431, %v2423
        %v2704 = vpack.c.bf16 %v2432, %v2424
        %v2705 = vpack.c.bf16 %v2433, %v2425
        %v2706 = vpack.c.bf16 %v2434, %v2426
        %v2707 = vpack.c.bf16 %v2435, %v2427
        %v2708 = vpack.c.bf16 %v2436, %v2428
        %v2709 = vpack.c.bf16 %v2437, %v2429
        %v2710 = vpack.c.bf16 %v2446, %v2438
        %v2711 = vpack.c.bf16 %v2447, %v2439
        %v2712 = vpack.c.bf16 %v2448, %v2440
        %v2713 = vpack.c.bf16 %v2449, %v2441
        %v2714 = vpack.c.bf16 %v2450, %v2442
        %v2715 = vpack.c.bf16 %v2451, %v2443
        %v2716 = vpack.c.bf16 %v2452, %v2444
        %v2717 = vpack.c.bf16 %v2453, %v2445
        %v2718 = vpack.c.bf16 %v2462, %v2454
        %v2719 = vpack.c.bf16 %v2463, %v2455
        %v2720 = vpack.c.bf16 %v2464, %v2456
        %v2721 = vpack.c.bf16 %v2465, %v2457
        %v2722 = vpack.c.bf16 %v2466, %v2458
        %v2723 = vpack.c.bf16 %v2467, %v2459
        %v2724 = vpack.c.bf16 %v2468, %v2460
        %v2725 = vpack.c.bf16 %v2469, %v2461
        %v2726 = vpack.c.bf16 %v2478, %v2470
        %v2727 = vpack.c.bf16 %v2479, %v2471
        %v2728 = vpack.c.bf16 %v2480, %v2472
        %v2729 = vpack.c.bf16 %v2481, %v2473
        %v2730 = vpack.c.bf16 %v2482, %v2474
        %v2731 = vpack.c.bf16 %v2483, %v2475
        %v2732 = vpack.c.bf16 %v2484, %v2476
        %v2733 = vpack.c.bf16 %v2485, %v2477
        %v2734 = vpack.c.bf16 %v2494, %v2486
        %v2735 = vpack.c.bf16 %v2495, %v2487
        %v2736 = vpack.c.bf16 %v2496, %v2488
        %v2737 = vpack.c.bf16 %v2497, %v2489
        %v2738 = vpack.c.bf16 %v2498, %v2490
        %v2739 = vpack.c.bf16 %v2499, %v2491
        %v2740 = vpack.c.bf16 %v2500, %v2492
        %v2741 = vpack.c.bf16 %v2501, %v2493
        %v2742 = vpack.c.bf16 %v2510, %v2502
        %v2743 = vpack.c.bf16 %v2511, %v2503
        %v2744 = vpack.c.bf16 %v2512, %v2504
        %v2745 = vpack.c.bf16 %v2513, %v2505
        %v2746 = vpack.c.bf16 %v2514, %v2506
        %v2747 = vpack.c.bf16 %v2515, %v2507
        %v2748 = vpack.c.bf16 %v2516, %v2508
        %v2749 = vpack.c.bf16 %v2517, %v2509
        %v2750 = vpack.c.bf16 %v2526, %v2518
        %v2751 = vpack.c.bf16 %v2527, %v2519
        %v2752 = vpack.c.bf16 %v2528, %v2520
        %v2753 = vpack.c.bf16 %v2529, %v2521
        %v2754 = vpack.c.bf16 %v2530, %v2522
        %v2755 = vpack.c.bf16 %v2531, %v2523
        %v2756 = vpack.c.bf16 %v2532, %v2524
        %v2757 = vpack.c.bf16 %v2533, %v2525
        %v2758 = vld [vmem:[%s2] sm:$0xff]
        %v2759 = vld [vmem:[%s2 + $0x8] sm:$0xff]
        %v2760 = vld [vmem:[%s3] sm:$0x7f]
        %2762 = vset.pattern.permute.xlu0 0
        %2763 = vperm.xlu0 %2762, %v2760
        %v2764 = vpop.permute.xlu0 %2763
        %v2768 = vunpack.c.l.b16 %v2758
        %v2769 = vunpack.c.h.b16 %v2758
        %v2770 = vunpack.c.l.b16 %v2759
        %v2771 = vunpack.c.h.b16 %v2759
        %v2772 = vpack.c.b16 %v2768, %v2768
        %v2773 = vpack.c.b16 %v2769, %v2769
        %v2774 = vpack.c.b16 %v2770, %v2770
        %v2775 = vpack.c.b16 %v2771, %v2771
        %vm2779 = vcmask 523264
        %v2781 = vsel %vm2779, %v2775, 0
        %2783 = vmatprep.subr.bf16.mxu0 %v2535
        %2784 = vmatpush1.bf16.msra.mxu0 %v2534
        %2785 = vmatprep.subr.bf16.mxu0 %v2543
        %2786 = vmatpush1.bf16.msra.mxu0 %v2542
        %2787 = vmatprep.subr.bf16.mxu0 %v2551
        %2788 = vmatpush1.bf16.msra.mxu0 %v2550
        %2789 = vmatprep.subr.bf16.mxu0 %v2559
        %2790 = vmatpush1.bf16.msra.mxu0 %v2558
        %2791 = vmatprep.subr.bf16.mxu0 %v2567
        %2792 = vmatpush1.bf16.msra.mxu0 %v2566
        %2793 = vmatprep.subr.bf16.mxu0 %v2575
        %2794 = vmatpush1.bf16.msra.mxu0 %v2574
        %2795 = vmatprep.subr.bf16.mxu0 %v2583
        %2796 = vmatpush1.bf16.msra.mxu0 %v2582
        %2797 = vmatprep.subr.bf16.mxu0 %v2591
        %2798 = vmatpush1.bf16.msra.mxu0 %v2590
        %2799 = vmatprep.subr.bf16.mxu0 %v2599
        %2800 = vmatpush1.bf16.msra.mxu0 %v2598
        %2801 = vmatprep.subr.bf16.mxu0 %v2607
        %2802 = vmatpush1.bf16.msra.mxu0 %v2606
        %2803 = vmatprep.subr.bf16.mxu0 %v2615
        %2804 = vmatpush1.bf16.msra.mxu0 %v2614
        %2805 = vmatprep.subr.bf16.mxu0 %v2623
        %2806 = vmatpush1.bf16.msra.mxu0 %v2622
        %2807 = vmatprep.subr.bf16.mxu0 %v2631
        %2808 = vmatpush1.bf16.msra.mxu0 %v2630
        %2809 = vmatprep.subr.bf16.mxu0 %v2639
        %2810 = vmatpush1.bf16.msra.mxu0 %v2638
        %2811 = vmatprep.subr.bf16.mxu0 %v2647
        %2812 = vmatpush1.bf16.msra.mxu0 %v2646
        %2813 = vmatprep.subr.bf16.mxu0 %v2655
        %2814 = vmatpush1.bf16.msra.mxu0 %v2654
        %2815 = vmatprep.mubr.bf16.mxu0 %v2773
        %2816 = vmatmul.mubr.bf16.gmra.mrb[0].mxu0 %v2772
        %v2817 = vpop.f32.mrb[0].mxu0
        %v2818 = vadd.f32 %v2764, %v2817
        %v2819 = vpop.f32.mrb[0].mxu0
        %v2820 = vadd.f32 %v2764, %v2819
        %v2821 = vpop.f32.mrb[0].mxu0
        %v2822 = vpop.f32.mrb[0].mxu0
        %2823 = vdwg.mxu0
        %2824 = vmatprep.subr.bf16.mxu0 %v2663
        %2825 = vmatpush1.bf16.msra.mxu0 %v2662
        %2826 = vmatprep.subr.bf16.mxu0 %v2671
        %2827 = vmatpush1.bf16.msra.mxu0 %v2670
        %2828 = vmatprep.subr.bf16.mxu0 %v2679
        %2829 = vmatpush1.bf16.msra.mxu0 %v2678
        %2830 = vmatprep.subr.bf16.mxu0 %v2687
        %2831 = vmatpush1.bf16.msra.mxu0 %v2686
        %2832 = vmatprep.subr.bf16.mxu0 %v2695
        %2833 = vmatpush1.bf16.msra.mxu0 %v2694
        %2834 = vmatprep.subr.bf16.mxu0 %v2703
        %2835 = vmatpush1.bf16.msra.mxu0 %v2702
        %2836 = vmatprep.subr.bf16.mxu0 %v2711
        %2837 = vmatpush1.bf16.msra.mxu0 %v2710
        %2838 = vmatprep.subr.bf16.mxu0 %v2719
        %2839 = vmatpush1.bf16.msra.mxu0 %v2718
        %2840 = vmatprep.subr.bf16.mxu0 %v2727
        %2841 = vmatpush1.bf16.msra.mxu0 %v2726
        %2842 = vmatprep.subr.bf16.mxu0 %v2735
        %2843 = vmatpush1.bf16.msra.mxu0 %v2734
        %2844 = vmatprep.subr.bf16.mxu0 %v2743
        %2845 = vmatpush1.bf16.msra.mxu0 %v2742
        %2846 = vmatprep.subr.bf16.mxu0 %v2751
        %2847 = vmatpush1.bf16.msra.mxu0 %v2750
        %2848 = vmatprep.subr.bf16.mxu0 0
        %2849 = vmatpush1.bf16.msra.mxu0 0
        %2850 = vmatprep.subr.bf16.mxu0 0
        %2851 = vmatpush1.bf16.msra.mxu0 0
        %2852 = vmatprep.subr.bf16.mxu0 0
        %2853 = vmatpush1.bf16.msra.mxu0 0
        %2854 = vmatprep.subr.bf16.mxu0 0
        %2855 = vmatpush1.bf16.msra.mxu0 0
        %2856 = vmatprep.mubr.bf16.mxu0 %v2781
        %2857 = vmatmul.mubr.bf16.gmra.mrb[0].mxu0 %v2774
        %v2858 = vpop.f32.mrb[0].mxu0
        %v2859 = vadd.f32 %v2818, %v2858
        %v2860 = vpop.f32.mrb[0].mxu0
        %v2861 = vadd.f32 %v2820, %v2860
        %v2862 = vpop.f32.mrb[0].mxu0
        %v2863 = vpop.f32.mrb[0].mxu0
        %2864 = vdwg.mxu0
        %2865 = vmatprep.subr.bf16.mxu0 %v2537
        %2866 = vmatpush1.bf16.msra.mxu0 %v2536
        %2867 = vmatprep.subr.bf16.mxu0 %v2545
        %2868 = vmatpush1.bf16.msra.mxu0 %v2544
        %2869 = vmatprep.subr.bf16.mxu0 %v2553
        %2870 = vmatpush1.bf16.msra.mxu0 %v2552
        %2871 = vmatprep.subr.bf16.mxu0 %v2561
        %2872 = vmatpush1.bf16.msra.mxu0 %v2560
        %2873 = vmatprep.subr.bf16.mxu0 %v2569
        %2874 = vmatpush1.bf16.msra.mxu0 %v2568
        %2875 = vmatprep.subr.bf16.mxu0 %v2577
        %2876 = vmatpush1.bf16.msra.mxu0 %v2576
        %2877 = vmatprep.subr.bf16.mxu0 %v2585
        %2878 = vmatpush1.bf16.msra.mxu0 %v2584
        %2879 = vmatprep.subr.bf16.mxu0 %v2593
        %2880 = vmatpush1.bf16.msra.mxu0 %v2592
        %2881 = vmatprep.subr.bf16.mxu0 %v2601
        %2882 = vmatpush1.bf16.msra.mxu0 %v2600
        %2883 = vmatprep.subr.bf16.mxu0 %v2609
        %2884 = vmatpush1.bf16.msra.mxu0 %v2608
        %2885 = vmatprep.subr.bf16.mxu0 %v2617
        %2886 = vmatpush1.bf16.msra.mxu0 %v2616
        %2887 = vmatprep.subr.bf16.mxu0 %v2625
        %2888 = vmatpush1.bf16.msra.mxu0 %v2624
        %2889 = vmatprep.subr.bf16.mxu0 %v2633
        %2890 = vmatpush1.bf16.msra.mxu0 %v2632
        %2891 = vmatprep.subr.bf16.mxu0 %v2641
        %2892 = vmatpush1.bf16.msra.mxu0 %v2640
        %2893 = vmatprep.subr.bf16.mxu0 %v2649
        %2894 = vmatpush1.bf16.msra.mxu0 %v2648
        %2895 = vmatprep.subr.bf16.mxu0 %v2657
        %2896 = vmatpush1.bf16.msra.mxu0 %v2656
        %2897 = vmatprep.mubr.bf16.mxu0 %v2773
        %2898 = vmatmul.mubr.bf16.gmra.mrb[0].mxu0 %v2772
        %v2899 = vpop.f32.mrb[0].mxu0
        %v2900 = vadd.f32 %v2764, %v2899
        %v2901 = vpop.f32.mrb[0].mxu0
        %v2902 = vadd.f32 %v2764, %v2901
        %v2903 = vpop.f32.mrb[0].mxu0
        %v2904 = vpop.f32.mrb[0].mxu0
        %2905 = vdwg.mxu0
        %2906 = vmatprep.subr.bf16.mxu0 %v2665
        %2907 = vmatpush1.bf16.msra.mxu0 %v2664
        %2908 = vmatprep.subr.bf16.mxu0 %v2673
        %2909 = vmatpush1.bf16.msra.mxu0 %v2672
        %2910 = vmatprep.subr.bf16.mxu0 %v2681
        %2911 = vmatpush1.bf16.msra.mxu0 %v2680
        %2912 = vmatprep.subr.bf16.mxu0 %v2689
        %2913 = vmatpush1.bf16.msra.mxu0 %v2688
        %2914 = vmatprep.subr.bf16.mxu0 %v2697
        %2915 = vmatpush1.bf16.msra.mxu0 %v2696
        %2916 = vmatprep.subr.bf16.mxu0 %v2705
        %2917 = vmatpush1.bf16.msra.mxu0 %v2704
        %2918 = vmatprep.subr.bf16.mxu0 %v2713
        %2919 = vmatpush1.bf16.msra.mxu0 %v2712
        %2920 = vmatprep.subr.bf16.mxu0 %v2721
        %2921 = vmatpush1.bf16.msra.mxu0 %v2720
        %2922 = vmatprep.subr.bf16.mxu0 %v2729
        %2923 = vmatpush1.bf16.msra.mxu0 %v2728
        %2924 = vmatprep.subr.bf16.mxu0 %v2737
        %2925 = vmatpush1.bf16.msra.mxu0 %v2736
        %2926 = vmatprep.subr.bf16.mxu0 %v2745
        %2927 = vmatpush1.bf16.msra.mxu0 %v2744
        %2928 = vmatprep.subr.bf16.mxu0 %v2753
        %2929 = vmatpush1.bf16.msra.mxu0 %v2752
        %2930 = vmatprep.subr.bf16.mxu0 0
        %2931 = vmatpush1.bf16.msra.mxu0 0
        %2932 = vmatprep.subr.bf16.mxu0 0
        %2933 = vmatpush1.bf16.msra.mxu0 0
        %2934 = vmatprep.subr.bf16.mxu0 0
        %2935 = vmatpush1.bf16.msra.mxu0 0
        %2936 = vmatprep.subr.bf16.mxu0 0
        %2937 = vmatpush1.bf16.msra.mxu0 0
        %2938 = vmatprep.mubr.bf16.mxu0 %v2781
        %2939 = vmatmul.mubr.bf16.gmra.mrb[0].mxu0 %v2774
        %v2940 = vpop.f32.mrb[0].mxu0
        %v2941 = vadd.f32 %v2900, %v2940
        %v2942 = vpop.f32.mrb[0].mxu0
        %v2943 = vadd.f32 %v2902, %v2942
        %v2944 = vpop.f32.mrb[0].mxu0
        %v2945 = vpop.f32.mrb[0].mxu0
        %2946 = vdwg.mxu0
        %2947 = vmatprep.subr.bf16.mxu0 %v2539
        %2948 = vmatpush1.bf16.msra.mxu0 %v2538
        %2949 = vmatprep.subr.bf16.mxu0 %v2547
        %2950 = vmatpush1.bf16.msra.mxu0 %v2546
        %2951 = vmatprep.subr.bf16.mxu0 %v2555
        %2952 = vmatpush1.bf16.msra.mxu0 %v2554
        %2953 = vmatprep.subr.bf16.mxu0 %v2563
        %2954 = vmatpush1.bf16.msra.mxu0 %v2562
        %2955 = vmatprep.subr.bf16.mxu0 %v2571
        %2956 = vmatpush1.bf16.msra.mxu0 %v2570
        %2957 = vmatprep.subr.bf16.mxu0 %v2579
        %2958 = vmatpush1.bf16.msra.mxu0 %v2578
        %2959 = vmatprep.subr.bf16.mxu0 %v2587
        %2960 = vmatpush1.bf16.msra.mxu0 %v2586
        %2961 = vmatprep.subr.bf16.mxu0 %v2595
        %2962 = vmatpush1.bf16.msra.mxu0 %v2594
        %2963 = vmatprep.subr.bf16.mxu0 %v2603
        %2964 = vmatpush1.bf16.msra.mxu0 %v2602
        %2965 = vmatprep.subr.bf16.mxu0 %v2611
        %2966 = vmatpush1.bf16.msra.mxu0 %v2610
        %2967 = vmatprep.subr.bf16.mxu0 %v2619
        %2968 = vmatpush1.bf16.msra.mxu0 %v2618
        %2969 = vmatprep.subr.bf16.mxu0 %v2627
        %2970 = vmatpush1.bf16.msra.mxu0 %v2626
        %2971 = vmatprep.subr.bf16.mxu0 %v2635
        %2972 = vmatpush1.bf16.msra.mxu0 %v2634
        %2973 = vmatprep.subr.bf16.mxu0 %v2643
        %2974 = vmatpush1.bf16.msra.mxu0 %v2642
        %2975 = vmatprep.subr.bf16.mxu0 %v2651
        %2976 = vmatpush1.bf16.msra.mxu0 %v2650
        %2977 = vmatprep.subr.bf16.mxu0 %v2659
        %2978 = vmatpush1.bf16.msra.mxu0 %v2658
        %2979 = vmatprep.mubr.bf16.mxu0 %v2773
        %2980 = vmatmul.mubr.bf16.gmra.mrb[0].mxu0 %v2772
        %v2981 = vpop.f32.mrb[0].mxu0
        %v2982 = vadd.f32 %v2764, %v2981
        %v2983 = vpop.f32.mrb[0].mxu0
        %v2984 = vadd.f32 %v2764, %v2983
        %v2985 = vpop.f32.mrb[0].mxu0
        %v2986 = vpop.f32.mrb[0].mxu0
        %2987 = vdwg.mxu0
        %2988 = vmatprep.subr.bf16.mxu0 %v2667
        %2989 = vmatpush1.bf16.msra.mxu0 %v2666
        %2990 = vmatprep.subr.bf16.mxu0 %v2675
        %2991 = vmatpush1.bf16.msra.mxu0 %v2674
        %2992 = vmatprep.subr.bf16.mxu0 %v2683
        %2993 = vmatpush1.bf16.msra.mxu0 %v2682
        %2994 = vmatprep.subr.bf16.mxu0 %v2691
        %2995 = vmatpush1.bf16.msra.mxu0 %v2690
        %2996 = vmatprep.subr.bf16.mxu0 %v2699
        %2997 = vmatpush1.bf16.msra.mxu0 %v2698
        %2998 = vmatprep.subr.bf16.mxu0 %v2707
        %2999 = vmatpush1.bf16.msra.mxu0 %v2706
        %3000 = vmatprep.subr.bf16.mxu0 %v2715
        %3001 = vmatpush1.bf16.msra.mxu0 %v2714
        %3002 = vmatprep.subr.bf16.mxu0 %v2723
        %3003 = vmatpush1.bf16.msra.mxu0 %v2722
        %3004 = vmatprep.subr.bf16.mxu0 %v2731
        %3005 = vmatpush1.bf16.msra.mxu0 %v2730
        %3006 = vmatprep.subr.bf16.mxu0 %v2739
        %3007 = vmatpush1.bf16.msra.mxu0 %v2738
        %3008 = vmatprep.subr.bf16.mxu0 %v2747
        %3009 = vmatpush1.bf16.msra.mxu0 %v2746
        %3010 = vmatprep.subr.bf16.mxu0 %v2755
        %3011 = vmatpush1.bf16.msra.mxu0 %v2754
        %3012 = vmatprep.subr.bf16.mxu0 0
        %3013 = vmatpush1.bf16.msra.mxu0 0
        %3014 = vmatprep.subr.bf16.mxu0 0
        %3015 = vmatpush1.bf16.msra.mxu0 0
        %3016 = vmatprep.subr.bf16.mxu0 0
        %3017 = vmatpush1.bf16.msra.mxu0 0
        %3018 = vmatprep.subr.bf16.mxu0 0
        %3019 = vmatpush1.bf16.msra.mxu0 0
        %3020 = vmatprep.mubr.bf16.mxu0 %v2781
        %3021 = vmatmul.mubr.bf16.gmra.mrb[0].mxu0 %v2774
        %v3022 = vpop.f32.mrb[0].mxu0
        %v3023 = vadd.f32 %v2982, %v3022
        %v3024 = vpop.f32.mrb[0].mxu0
        %v3025 = vadd.f32 %v2984, %v3024
        %v3026 = vpop.f32.mrb[0].mxu0
        %v3027 = vpop.f32.mrb[0].mxu0
        %3028 = vdwg.mxu0
        %3029 = vmatprep.subr.bf16.mxu0 %v2541
        %3030 = vmatpush1.bf16.msra.mxu0 %v2540
        %3031 = vmatprep.subr.bf16.mxu0 %v2549
        %3032 = vmatpush1.bf16.msra.mxu0 %v2548
        %3033 = vmatprep.subr.bf16.mxu0 %v2557
        %3034 = vmatpush1.bf16.msra.mxu0 %v2556
        %3035 = vmatprep.subr.bf16.mxu0 %v2565
        %3036 = vmatpush1.bf16.msra.mxu0 %v2564
        %3037 = vmatprep.subr.bf16.mxu0 %v2573
        %3038 = vmatpush1.bf16.msra.mxu0 %v2572
        %3039 = vmatprep.subr.bf16.mxu0 %v2581
        %3040 = vmatpush1.bf16.msra.mxu0 %v2580
        %3041 = vmatprep.subr.bf16.mxu0 %v2589
        %3042 = vmatpush1.bf16.msra.mxu0 %v2588
        %3043 = vmatprep.subr.bf16.mxu0 %v2597
        %3044 = vmatpush1.bf16.msra.mxu0 %v2596
        %3045 = vmatprep.subr.bf16.mxu0 %v2605
        %3046 = vmatpush1.bf16.msra.mxu0 %v2604
        %3047 = vmatprep.subr.bf16.mxu0 %v2613
        %3048 = vmatpush1.bf16.msra.mxu0 %v2612
        %3049 = vmatprep.subr.bf16.mxu0 %v2621
        %3050 = vmatpush1.bf16.msra.mxu0 %v2620
        %3051 = vmatprep.subr.bf16.mxu0 %v2629
        %3052 = vmatpush1.bf16.msra.mxu0 %v2628
        %3053 = vmatprep.subr.bf16.mxu0 %v2637
        %3054 = vmatpush1.bf16.msra.mxu0 %v2636
        %3055 = vmatprep.subr.bf16.mxu0 %v2645
        %3056 = vmatpush1.bf16.msra.mxu0 %v2644
        %3057 = vmatprep.subr.bf16.mxu0 %v2653
        %3058 = vmatpush1.bf16.msra.mxu0 %v2652
        %3059 = vmatprep.subr.bf16.mxu0 %v2661
        %3060 = vmatpush1.bf16.msra.mxu0 %v2660
        %3061 = vmatprep.mubr.bf16.mxu0 %v2773
        %3062 = vmatmul.mubr.bf16.gmra.mrb[0].mxu0 %v2772
        %v3063 = vpop.f32.mrb[0].mxu0
        %v3064 = vadd.f32 %v2764, %v3063
        %v3065 = vpop.f32.mrb[0].mxu0
        %v3066 = vadd.f32 %v2764, %v3065
        %v3067 = vpop.f32.mrb[0].mxu0
        %v3068 = vpop.f32.mrb[0].mxu0
        %3069 = vdwg.mxu0
        %3070 = vmatprep.subr.bf16.mxu0 %v2669
        %3071 = vmatpush1.bf16.msra.mxu0 %v2668
        %3072 = vmatprep.subr.bf16.mxu0 %v2677
        %3073 = vmatpush1.bf16.msra.mxu0 %v2676
        %3074 = vmatprep.subr.bf16.mxu0 %v2685
        %3075 = vmatpush1.bf16.msra.mxu0 %v2684
        %3076 = vmatprep.subr.bf16.mxu0 %v2693
        %3077 = vmatpush1.bf16.msra.mxu0 %v2692
        %3078 = vmatprep.subr.bf16.mxu0 %v2701
        %3079 = vmatpush1.bf16.msra.mxu0 %v2700
        %3080 = vmatprep.subr.bf16.mxu0 %v2709
        %3081 = vmatpush1.bf16.msra.mxu0 %v2708
        %3082 = vmatprep.subr.bf16.mxu0 %v2717
        %3083 = vmatpush1.bf16.msra.mxu0 %v2716
        %3084 = vmatprep.subr.bf16.mxu0 %v2725
        %3085 = vmatpush1.bf16.msra.mxu0 %v2724
        %3086 = vmatprep.subr.bf16.mxu0 %v2733
        %3087 = vmatpush1.bf16.msra.mxu0 %v2732
        %3088 = vmatprep.subr.bf16.mxu0 %v2741
        %3089 = vmatpush1.bf16.msra.mxu0 %v2740
        %3090 = vmatprep.subr.bf16.mxu0 %v2749
        %3091 = vmatpush1.bf16.msra.mxu0 %v2748
        %3092 = vmatprep.subr.bf16.mxu0 %v2757
        %3093 = vmatpush1.bf16.msra.mxu0 %v2756
        %3094 = vmatprep.subr.bf16.mxu0 0
        %3095 = vmatpush1.bf16.msra.mxu0 0
        %3096 = vmatprep.subr.bf16.mxu0 0
        %3097 = vmatpush1.bf16.msra.mxu0 0
        %3098 = vmatprep.subr.bf16.mxu0 0
        %3099 = vmatpush1.bf16.msra.mxu0 0
        %3100 = vmatprep.subr.bf16.mxu0 0
        %3101 = vmatpush1.bf16.msra.mxu0 0
        %3102 = vmatprep.mubr.bf16.mxu0 %v2781
        %3103 = vmatmul.mubr.bf16.gmra.mrb[0].mxu0 %v2774
        %v3104 = vpop.f32.mrb[0].mxu0
        %v3105 = vadd.f32 %v3064, %v3104
        %v3106 = vpop.f32.mrb[0].mxu0
        %v3107 = vadd.f32 %v3066, %v3106
        %v3108 = vpop.f32.mrb[0].mxu0
        %v3109 = vpop.f32.mrb[0].mxu0
        %3110 = vdwg.mxu0
        %v3111 = vmax.f32 %v2859, 0.0
        %v3112 = vmax.f32 %v2861, 0.0
        %v3113 = vmax.f32 %v2941, 0.0
        %v3114 = vmax.f32 %v2943, 0.0
        %v3115 = vmax.f32 %v3023, 0.0
        %v3116 = vmax.f32 %v3025, 0.0
        %v3117 = vmax.f32 %v3105, 0.0
        %v3118 = vmax.f32 %v3107, 0.0
        %v3119 = vmul.f32 %v861, %v861
        %v3120 = vmul.f32 %v863, %v863
        %v3121 = vmul.f32 %v1268, %v1268
        %v3122 = vmul.f32 %v1270, %v1270
        %v3123 = vmul.f32 %v1675, %v1675
        %v3124 = vmul.f32 %v1677, %v1677
        %v3125 = vmul.f32 %v2082, %v2082
        %v3126 = vmul.f32 %v2084, %v2084
        %v3127 = vmul.f32 %v3111, %v3111
        %v3128 = vmul.f32 %v3112, %v3112
        %v3129 = vmul.f32 %v3113, %v3113
        %v3130 = vmul.f32 %v3114, %v3114
        %v3131 = vmul.f32 %v3115, %v3115
        %v3132 = vmul.f32 %v3116, %v3116
        %v3133 = vmul.f32 %v3117, %v3117
        %v3134 = vmul.f32 %v3118, %v3118
        %v3135 = vadd.f32 %v3119, %v3127
        %v3136 = vadd.f32 %v3120, %v3128
        %v3137 = vadd.f32 %v3121, %v3129
        %v3138 = vadd.f32 %v3122, %v3130
        %v3139 = vadd.f32 %v3123, %v3131
        %v3140 = vadd.f32 %v3124, %v3132
        %v3141 = vadd.f32 %v3125, %v3133
        %v3142 = vadd.f32 %v3126, %v3134
        %v3143 = vadd.f32 %v3135, 1e-16
        %v3144 = vadd.f32 %v3136, 1e-16
        %v3145 = vadd.f32 %v3137, 1e-16
        %v3146 = vadd.f32 %v3138, 1e-16
        %v3147 = vadd.f32 %v3139, 1e-16
        %v3148 = vadd.f32 %v3140, 1e-16
        %v3149 = vadd.f32 %v3141, 1e-16
        %v3150 = vadd.f32 %v3142, 1e-16
        %vm3151 = vcmask 1046528
        %v3152 = vsel %vm3151, %v3143, inf
        %v3153 = vrot.slane %v3152, 4
        %v3154 = vmin.f32 %v3152, %v3153
        %v3155 = vrot.slane %v3154, 2
        %v3156 = vmin.f32 %v3154, %v3155
        %v3157 = vrot.slane %v3156, 1
        %v3158 = vmin.f32 %v3156, %v3157
        %v3159 = vsel %vm3151, %v3144, inf
        %v3160 = vrot.slane %v3159, 4
        %v3161 = vmin.f32 %v3159, %v3160
        %v3162 = vrot.slane %v3161, 2
        %v3163 = vmin.f32 %v3161, %v3162
        %v3164 = vrot.slane %v3163, 1
        %v3165 = vmin.f32 %v3163, %v3164
        %v3166 = vsel %vm3151, %v3145, inf
        %v3167 = vrot.slane %v3166, 4
        %v3168 = vmin.f32 %v3166, %v3167
        %v3169 = vrot.slane %v3168, 2
        %v3170 = vmin.f32 %v3168, %v3169
        %v3171 = vrot.slane %v3170, 1
        %v3172 = vmin.f32 %v3170, %v3171
        %v3173 = vsel %vm3151, %v3146, inf
        %v3174 = vrot.slane %v3173, 4
        %v3175 = vmin.f32 %v3173, %v3174
        %v3176 = vrot.slane %v3175, 2
        %v3177 = vmin.f32 %v3175, %v3176
        %v3178 = vrot.slane %v3177, 1
        %v3179 = vmin.f32 %v3177, %v3178
        %v3180 = vsel %vm3151, %v3147, inf
        %v3181 = vrot.slane %v3180, 4
        %v3182 = vmin.f32 %v3180, %v3181
        %v3183 = vrot.slane %v3182, 2
        %v3184 = vmin.f32 %v3182, %v3183
        %v3185 = vrot.slane %v3184, 1
        %v3186 = vmin.f32 %v3184, %v3185
        %v3187 = vsel %vm3151, %v3148, inf
        %v3188 = vrot.slane %v3187, 4
        %v3189 = vmin.f32 %v3187, %v3188
        %v3190 = vrot.slane %v3189, 2
        %v3191 = vmin.f32 %v3189, %v3190
        %v3192 = vrot.slane %v3191, 1
        %v3193 = vmin.f32 %v3191, %v3192
        %v3194 = vsel %vm3151, %v3149, inf
        %v3195 = vrot.slane %v3194, 4
        %v3196 = vmin.f32 %v3194, %v3195
        %v3197 = vrot.slane %v3196, 2
        %v3198 = vmin.f32 %v3196, %v3197
        %v3199 = vrot.slane %v3198, 1
        %v3200 = vmin.f32 %v3198, %v3199
        %v3201 = vsel %vm3151, %v3150, inf
        %v3202 = vrot.slane %v3201, 4
        %v3203 = vmin.f32 %v3201, %v3202
        %v3204 = vrot.slane %v3203, 2
        %v3205 = vmin.f32 %v3203, %v3204
        %v3206 = vrot.slane %v3205, 1
        %v3207 = vmin.f32 %v3205, %v3206
        %v3208 = vrsqrt.pop %v3158
        %v3209 = vmul.f32 %v3158, %v3208
        %vm3210 = vcmp.eq.f32.partialorder %v3158, inf
        %v3211 = vsel %vm3210, %v3158, %v3209
        %vm3212 = vcmp.eq.f32.partialorder %v3158, 0.0
        %v3213 = vand.u32 %v3158, 2147483648
        %v3214 = vsel %vm3212, %v3213, %v3211
        %v3215 = vrsqrt.pop %v3165
        %v3216 = vmul.f32 %v3165, %v3215
        %vm3217 = vcmp.eq.f32.partialorder %v3165, inf
        %v3218 = vsel %vm3217, %v3165, %v3216
        %vm3219 = vcmp.eq.f32.partialorder %v3165, 0.0
        %v3220 = vand.u32 %v3165, 2147483648
        %v3221 = vsel %vm3219, %v3220, %v3218
        %v3222 = vrsqrt.pop %v3172
        %v3223 = vmul.f32 %v3172, %v3222
        %vm3224 = vcmp.eq.f32.partialorder %v3172, inf
        %v3225 = vsel %vm3224, %v3172, %v3223
        %vm3226 = vcmp.eq.f32.partialorder %v3172, 0.0
        %v3227 = vand.u32 %v3172, 2147483648
        %v3228 = vsel %vm3226, %v3227, %v3225
        %v3229 = vrsqrt.pop %v3179
        %v3230 = vmul.f32 %v3179, %v3229
        %vm3231 = vcmp.eq.f32.partialorder %v3179, inf
        %v3232 = vsel %vm3231, %v3179, %v3230
        %vm3233 = vcmp.eq.f32.partialorder %v3179, 0.0
        %v3234 = vand.u32 %v3179, 2147483648
        %v3235 = vsel %vm3233, %v3234, %v3232
        %v3236 = vrsqrt.pop %v3186
        %v3237 = vmul.f32 %v3186, %v3236
        %vm3238 = vcmp.eq.f32.partialorder %v3186, inf
        %v3239 = vsel %vm3238, %v3186, %v3237
        %vm3240 = vcmp.eq.f32.partialorder %v3186, 0.0
        %v3241 = vand.u32 %v3186, 2147483648
        %v3242 = vsel %vm3240, %v3241, %v3239
        %v3243 = vrsqrt.pop %v3193
        %v3244 = vmul.f32 %v3193, %v3243
        %vm3245 = vcmp.eq.f32.partialorder %v3193, inf
        %v3246 = vsel %vm3245, %v3193, %v3244
        %vm3247 = vcmp.eq.f32.partialorder %v3193, 0.0
        %v3248 = vand.u32 %v3193, 2147483648
        %v3249 = vsel %vm3247, %v3248, %v3246
        %v3250 = vrsqrt.pop %v3200
        %v3251 = vmul.f32 %v3200, %v3250
        %vm3252 = vcmp.eq.f32.partialorder %v3200, inf
        %v3253 = vsel %vm3252, %v3200, %v3251
        %vm3254 = vcmp.eq.f32.partialorder %v3200, 0.0
        %v3255 = vand.u32 %v3200, 2147483648
        %v3256 = vsel %vm3254, %v3255, %v3253
        %v3257 = vrsqrt.pop %v3207
        %v3258 = vmul.f32 %v3207, %v3257
        %vm3259 = vcmp.eq.f32.partialorder %v3207, inf
        %v3260 = vsel %vm3259, %v3207, %v3258
        %vm3261 = vcmp.eq.f32.partialorder %v3207, 0.0
        %v3262 = vand.u32 %v3207, 2147483648
        %v3263 = vsel %vm3261, %v3262, %v3260
        %v3272 = vcombine.low %v3214, %v3221
        %v3273 = vcombine.low %v3228, %v3235
        %v3274 = vcombine.low %v3242, %v3249
        %v3275 = vcombine.low %v3256, %v3263
        %v3277 = vunpack.c.l.s4 1966171168
        %v3278 = vunpack.c.0.s8 %v3277
        %v3279 = vlaneseq
        %v3280 = vshrl.u32 %v3279, 7
        %v3281 = vsub.s32 %v3278, %v3280
        %v3282 = vrot.slane %v3272, %v3281
        %v3284 = vunpack.c.l.s4 1966171168
        %v3285 = vunpack.c.0.s8 %v3284
        %v3286 = vlaneseq
        %v3287 = vshrl.u32 %v3286, 7
        %v3288 = vsub.s32 %v3285, %v3287
        %v3289 = vrot.slane %v3273, %v3288
        %v3291 = vunpack.c.l.s4 1966171168
        %v3292 = vunpack.c.0.s8 %v3291
        %v3293 = vlaneseq
        %v3294 = vshrl.u32 %v3293, 7
        %v3295 = vsub.s32 %v3292, %v3294
        %v3296 = vrot.slane %v3274, %v3295
        %v3298 = vunpack.c.l.s4 1966171168
        %v3299 = vunpack.c.0.s8 %v3298
        %v3300 = vlaneseq
        %v3301 = vshrl.u32 %v3300, 7
        %v3302 = vsub.s32 %v3299, %v3301
        %v3303 = vrot.slane %v3275, %v3302
        %v3304 = vcombine.low %v3282, %v3289
        %v3305 = vcombine.low %v3296, %v3303
        %v3307 = vunpack.c.l.s4 1966171168
        %v3308 = vunpack.c.0.s8 %v3307
        %v3309 = vlaneseq
        %v3310 = vshrl.u32 %v3309, 7
        %v3311 = vsub.s32 %v3308, %v3310
        %v3312 = vrot.slane %v3304, %v3311
        %v3314 = vunpack.c.l.s4 1966171168
        %v3315 = vunpack.c.0.s8 %v3314
        %v3316 = vlaneseq
        %v3317 = vshrl.u32 %v3316, 7
        %v3318 = vsub.s32 %v3315, %v3317
        %v3319 = vrot.slane %v3305, %v3318
        %v3320 = vcombine.low %v3312, %v3319
        %3322 = vst [vmem:[%s191] sm:$0xff] %v3320
        %s3323 = sand.u32 %s115, 1
        %s3324 = scalar_lea.sflag [#allocation3], %s3323
        %s3325 = sand.u32 %s115, 1
        %s3326 = smul.addr %s3325, 8
        %s3327 = scalar_lea.vmem [#allocation2], %s3326
        // Predicated region
        $region37: #{tpu_custom_call.1} parent=35 // pred_check
          %p3328 = pneg %p125
        $region38: #{tpu_custom_call.1} parent=35 // pred_check_branch
          %3330 = sbr.rel (%p3328) target = $region40
        $region39: #{tpu_custom_call.1} parent=35 // pred_region
          %s3331 = smul.u32 8, %s18
          %s3333 = ssub.s32 128, 128
          %3334 = vsyncadd %s3324, %s3333
          %s3335 = smul.addr %s3331, 16
          %s3336 = scalar_lea.hbm %s4, %s3335
          %s3338 = sshll.u32 %s3327, 4
          %s3339 = int_to_ptr.vmem [resolvable:$true] %s3338
          %3341 = dma.vmem_to_hbm [thread:$0]  %s3339, 128, %s3336, %s3324
        $region40: #{tpu_custom_call.1} parent=35 // pred_fallthru
          _
      $region36: #{tpu_custom_call.1} parent=5 // pred_fallthru
        _
      %p3342 = scmp.le.s32.totalorder 2, %s13
      // Predicated region
      $region41: #{tpu_custom_call.1} parent=5 // pred_check
        %p3343 = pneg %p3342
      $region42: #{tpu_custom_call.1} parent=5 // pred_check_branch
        %3345 = sbr.rel (%p3343) target = $region44
      $region43: #{tpu_custom_call.1} parent=5 // pred_region
        %s3346 = ssub.s32 %s13, 2
        // Predicated region
        $region45: #{tpu_custom_call.1} parent=43 // pred_check
          %p3347 = pneg %p131
        $region46: #{tpu_custom_call.1} parent=43 // pred_check_branch
          %3349 = sbr.rel (%p3347) target = $region48
        $region47: #{tpu_custom_call.1} parent=43 // pred_region
          %s3350 = sand.u32 %s116, 1
          %s3351 = scalar_lea.sflag [#allocation3], %s3350
          %s3352 = sand.u32 %s116, 1
          %s3353 = smul.addr %s3352, 8
          %s3354 = scalar_lea.vmem [#allocation2], %s3353
          %3355 = dma.done %s3351, 128
        $region48: #{tpu_custom_call.1} parent=43 // pred_fallthru
          _
      $region44: #{tpu_custom_call.1} parent=5 // pred_fallthru
        _
    $region6: #{tpu_custom_call.1} parent=1 // loop_footer
      %s17 = sadd.s32 1, %s13
    $region7: #{tpu_custom_call.1} parent=1 // loop_footer_branch
      %12 = sbr.rel target = $region3
    $region8: #{tpu_custom_call.1} parent=1 // loop_exit
      _
    %3356 = vsyncpa [#allocation3], 1
    %s3357 = scalar_lea.sflag [#allocation3], 1
    %3358 = vsyncpa %s3357, 1

</llo_original>
